<compile_context>
chip_gen: v6e
topology: v6e:2x2x1
jax: 0.10.0
libtpu: 0.0.40
codegen_flags: <defaults>
</compile_context>

<pallas_src>
import jax
import jax.numpy as jnp
from jax.experimental import pallas as pl
from jax.experimental.pallas import tpu as pltpu


def _round_up(n, m):
    return ((n + m - 1) // m) * m


# ----------------------------------------------------------------------------
# Kernel
# ----------------------------------------------------------------------------
def ae_kernel(x_ref, w1_ref, b1_ref, w2_ref, b2_ref, o_ref):
    # encoder: h = relu(x @ W1^T + b1)   (bf16 MXU inputs, f32 accumulate)
    h = jnp.dot(x_ref[...], w1_ref[...], preferred_element_type=jnp.float32)
    h = jnp.maximum(h + b1_ref[...], 0.0)            # (1, h_p) bias broadcasts
    # decoder: y = sigmoid(h @ W2^T + b2)
    y = jnp.dot(h.astype(jnp.bfloat16), w2_ref[...],
                preferred_element_type=jnp.float32)
    y = y + b2_ref[...]
    o_ref[...] = jax.nn.sigmoid(y).astype(o_ref.dtype)   # sigmoid -> EUP slot


# ----------------------------------------------------------------------------
# One-time parameter preparation (hoisted out of the per-call forward)
# ----------------------------------------------------------------------------
def prepare_params(w1_t, b1, w2_t, b2):
    """Pad feature dims to multiples of 128 and cast weights to bf16, ONCE.

    w1_t: (in_dim, h_dim)  -- PyTorch encoder weight already transposed
    w2_t: (h_dim, in_dim)  -- PyTorch decoder weight already transposed
    Zero padding is exact through both matmuls (zero rows/cols are no-ops).
    """
    in_dim, h_dim = w1_t.shape
    in_p = _round_up(in_dim, 128)
    h_p = _round_up(h_dim, 128)

    w1_p = jnp.zeros((in_p, h_p), jnp.bfloat16).at[:in_dim, :h_dim].set(
        w1_t.astype(jnp.bfloat16))
    w2_p = jnp.zeros((h_p, in_p), jnp.bfloat16).at[:h_dim, :in_dim].set(
        w2_t.astype(jnp.bfloat16))
    b1_p = jnp.zeros((1, h_p), jnp.float32).at[0, :h_dim].set(
        b1.astype(jnp.float32))
    b2_p = jnp.zeros((1, in_p), jnp.float32).at[0, :in_dim].set(
        b2.astype(jnp.float32))

    return {
        "w1_p": w1_p, "b1_p": b1_p, "w2_p": w2_p, "b2_p": b2_p,
        "in_dim": in_dim, "h_dim": h_dim, "in_p": in_p, "h_p": h_p,
    }


def _choose_tile(B, tm_max=512):
    """Batch tile: single grid step for small B (keeps resident weights in one
    core's VMEM); tm_max-row tiles (>=2 'parallel' steps) for large B so
    megacore can shard the batch."""
    B8 = _round_up(B, 8)
    if B8 <= tm_max:
        return B8, B8          # tm, padded batch (grid = 1)
    tm = tm_max
    return tm, _round_up(B8, tm)


# ----------------------------------------------------------------------------
# Forward
# ----------------------------------------------------------------------------
def autoencoder_forward(x, params, *, tm_max=512, out_dtype=jnp.float32):
    """x: (B, in_dim) float; params: dict from prepare_params()."""
    B, in_dim = x.shape
    assert in_dim == params["in_dim"]
    in_p, h_p = params["in_p"], params["h_p"]

    tm, B_p = _choose_tile(B, tm_max)
    grid = (B_p // tm,)

    # Pad + cast x to bf16 in one op (the pad already touches x, the cast is
    # free here and halves the streamed input bytes).
    x_p = jnp.zeros((B_p, in_p), jnp.bfloat16).at[:B, :in_dim].set(
        x.astype(jnp.bfloat16))

    w1_p, b1_p = params["w1_p"], params["b1_p"]
    w2_p, b2_p = params["w2_p"], params["b2_p"]

    out_bytes = jnp.dtype(out_dtype).itemsize
    cost = pl.CostEstimate(
        flops=2 * B_p * (in_p * h_p + h_p * in_p),
        transcendentals=B_p * (h_p + in_p),           # exp in ReLU-free sigmoid + decoder
        bytes_accessed=(B_p * in_p * 2                # x (bf16)
                        + B_p * in_p * out_bytes      # out
                        + (in_p * h_p + h_p * in_p) * 2   # weights (bf16)
                        + (h_p + in_p) * 4),          # biases (f32)
    )

    out_p = pl.pallas_call(
        ae_kernel,
        out_shape=jax.ShapeDtypeStruct((B_p, in_p), out_dtype),
        grid_spec=pltpu.PrefetchScalarGridSpec(
            num_scalar_prefetch=0,
            grid=grid,
            in_specs=[
                pl.BlockSpec((tm, in_p), lambda i: (i, 0)),    # x tile (streamed, bf16)
                pl.BlockSpec((in_p, h_p), lambda i: (0, 0)),   # W1^T (resident)
                pl.BlockSpec((1, h_p), lambda i: (0, 0)),      # b1
                pl.BlockSpec((h_p, in_p), lambda i: (0, 0)),   # W2^T (resident)
                pl.BlockSpec((1, in_p), lambda i: (0, 0)),     # b2
            ],
            out_specs=pl.BlockSpec((tm, in_p), lambda i: (i, 0)),
        ),
        compiler_params=pltpu.CompilerParams(
            dimension_semantics=("parallel",),   # batch tiles shard across v7x TCs
            vmem_limit_bytes=32 * 1024 * 1024,   # real working set ~10 MiB at tm=512
        ),
        cost_estimate=cost,
    )(x_p, w1_p, b1_p, w2_p, b2_p)

    return out_p[:B, :in_dim]


def reference_forward(x, w1_t, b1, w2_t, b2):
    h = jnp.maximum(x @ w1_t + b1, 0.0)
    return jax.nn.sigmoid(h @ w2_t + b2)


if __name__ == "__main__":
    # Module-default feature dims (784 -> 400 -> 784) with a small batch.
    # 784/400 are NOT multiples of 128; prepare_params pads 784->896, 400->512.
    B, IN_DIM, H_DIM = 64, 784, 400

    key = jax.random.PRNGKey(0)
    kx, kw1, kb1, kw2, kb2 = jax.random.split(key, 5)

    # PyTorch-Linear-style init: U(-1/sqrt(fan_in), 1/sqrt(fan_in)).
    s1 = 1.0 / (IN_DIM ** 0.5)
    s2 = 1.0 / (H_DIM ** 0.5)
    # PyTorch stores W as (out, in); keep the transposed (in, out) layout here.
    w1_t = jax.random.uniform(kw1, (IN_DIM, H_DIM), jnp.float32, -s1, s1)
    b1 = jax.random.uniform(kb1, (H_DIM,), jnp.float32, -s1, s1)
    w2_t = jax.random.uniform(kw2, (H_DIM, IN_DIM), jnp.float32, -s2, s2)
    b2 = jax.random.uniform(kb2, (IN_DIM,), jnp.float32, -s2, s2)

    x = jax.random.uniform(kx, (B, IN_DIM), jnp.float32)   # MNIST-like pixels

    # One-time param prep (padding + bf16 cast hoisted out of the forward).
    params = prepare_params(w1_t, b1, w2_t, b2)

    out = autoencoder_forward(x, params)          # f32 output path (default)
    out = jax.block_until_ready(out)

    ref = reference_forward(x, w1_t, b1, w2_t, b2)
    assert out.shape == (B, IN_DIM)
    # bf16 MXU inputs + f32 accumulation: loosen tolerance vs the pure-f32 ref.
    max_err = float(jnp.max(jnp.abs(out - ref)))
    assert max_err < 2e-2, f"max abs error {max_err}"

    print("KERNEL_OK")
</pallas_src>

<mosaic_0001>
module attributes {stable_mosaic.version = 11 : i64} {
  func.func @ae_kernel(%arg0: i32, %arg1: memref<64x896xbf16, #tpu.memory_space<vmem>>, %arg2: memref<896x512xbf16, #tpu.memory_space<vmem>>, %arg3: memref<1x512xf32, #tpu.memory_space<vmem>>, %arg4: memref<512x896xbf16, #tpu.memory_space<vmem>>, %arg5: memref<1x896xf32, #tpu.memory_space<vmem>>, %arg6: memref<64x896xf32, #tpu.memory_space<vmem>>) attributes {dimension_semantics = [#tpu.dimension_semantics<parallel>], iteration_bounds = array<i64: 1>, scalar_prefetch = 0 : i64, scratch_operands = 0 : i64, tpu.core_type = #tpu.core_type<tc>, window_params = [{transform_indices = @transform_0, window_bounds = array<i64: 64, 896>}, {pipeline_mode = #tpu.pipeline_mode<synchronous>, transform_indices = @transform_1, window_bounds = array<i64: 896, 512>}, {pipeline_mode = #tpu.pipeline_mode<synchronous>, transform_indices = @transform_2, window_bounds = array<i64: 1, 512>}, {pipeline_mode = #tpu.pipeline_mode<synchronous>, transform_indices = @transform_3, window_bounds = array<i64: 512, 896>}, {pipeline_mode = #tpu.pipeline_mode<synchronous>, transform_indices = @transform_4, window_bounds = array<i64: 1, 896>}, {transform_indices = @transform_5, window_bounds = array<i64: 64, 896>}]} {
    %c0 = arith.constant 0 : index
    %c0_0 = arith.constant 0 : index
    %0 = vector.load %arg1[%c0, %c0_0] : memref<64x896xbf16, #tpu.memory_space<vmem>>, vector<64x896xbf16>
    %c0_1 = arith.constant 0 : index
    %c0_2 = arith.constant 0 : index
    %1 = vector.load %arg2[%c0_1, %c0_2] : memref<896x512xbf16, #tpu.memory_space<vmem>>, vector<896x512xbf16>
    %cst = arith.constant dense<0.000000e+00> : vector<64x512xf32>
    %2 = tpu.matmul %0, %1, %cst {dimension_numbers = #tpu.dot_dimension_numbers<[1], [0], [0], [1], [0, 0, 1, 1], [], []>} : vector<64x896xbf16>, vector<896x512xbf16>, vector<64x512xf32> -> vector<64x512xf32>
    %c0_3 = arith.constant 0 : index
    %c0_4 = arith.constant 0 : index
    %3 = vector.load %arg3[%c0_3, %c0_4] : memref<1x512xf32, #tpu.memory_space<vmem>>, vector<1x512xf32>
    %4 = vector.broadcast %3 : vector<1x512xf32> to vector<64x512xf32>
    %5 = arith.addf %2, %4 : vector<64x512xf32>
    %cst_5 = arith.constant 0.000000e+00 : f32
    %6 = vector.broadcast %cst_5 : f32 to vector<64x512xf32>
    %7 = arith.maximumf %5, %6 : vector<64x512xf32>
    %8 = arith.truncf %7 : vector<64x512xf32> to vector<64x512xbf16>
    %c0_6 = arith.constant 0 : index
    %c0_7 = arith.constant 0 : index
    %9 = vector.load %arg4[%c0_6, %c0_7] : memref<512x896xbf16, #tpu.memory_space<vmem>>, vector<512x896xbf16>
    %cst_8 = arith.constant dense<0.000000e+00> : vector<64x896xf32>
    %10 = tpu.matmul %8, %9, %cst_8 {dimension_numbers = #tpu.dot_dimension_numbers<[1], [0], [0], [1], [0, 0, 1, 1], [], []>} : vector<64x512xbf16>, vector<512x896xbf16>, vector<64x896xf32> -> vector<64x896xf32>
    %c0_9 = arith.constant 0 : index
    %c0_10 = arith.constant 0 : index
    %11 = vector.load %arg5[%c0_9, %c0_10] : memref<1x896xf32, #tpu.memory_space<vmem>>, vector<1x896xf32>
    %12 = vector.broadcast %11 : vector<1x896xf32> to vector<64x896xf32>
    %13 = arith.addf %10, %12 : vector<64x896xf32>
    %14 = arith.negf %13 : vector<64x896xf32>
    %15 = math.exp %14 : vector<64x896xf32>
    %cst_11 = arith.constant 1.000000e+00 : f32
    %16 = vector.broadcast %cst_11 : f32 to vector<64x896xf32>
    %17 = arith.addf %16, %15 : vector<64x896xf32>
    %18 = arith.divf %16, %17 : vector<64x896xf32>
    %c0_12 = arith.constant 0 : index
    %c0_13 = arith.constant 0 : index
    %19 = vector.load %arg6[%c0_12, %c0_13] : memref<64x896xf32, #tpu.memory_space<vmem>>, vector<64x896xf32>
    tpu.vector_store %arg6[%c0_12, %c0_13], %18 {strides = array<i32>} : memref<64x896xf32, #tpu.memory_space<vmem>>, vector<64x896xf32>,
    return
  }
  func.func @transform_0(%arg0: i32) -> (i32, i32) {
    %c0_i32 = arith.constant 0 : i32
    %c0_i32_0 = arith.constant 0 : i32
    return %arg0, %c0_i32 : i32, i32
  }
  func.func @transform_1(%arg0: i32) -> (i32, i32) {
    %c0_i32 = arith.constant 0 : i32
    %c0_i32_0 = arith.constant 0 : i32
    %c0_i32_1 = arith.constant 0 : i32
    return %c0_i32, %c0_i32_0 : i32, i32
  }
  func.func @transform_2(%arg0: i32) -> (i32, i32) {
    %c0_i32 = arith.constant 0 : i32
    %c0_i32_0 = arith.constant 0 : i32
    %c0_i32_1 = arith.constant 0 : i32
    return %c0_i32, %c0_i32_0 : i32, i32
  }
  func.func @transform_3(%arg0: i32) -> (i32, i32) {
    %c0_i32 = arith.constant 0 : i32
    %c0_i32_0 = arith.constant 0 : i32
    %c0_i32_1 = arith.constant 0 : i32
    return %c0_i32, %c0_i32_0 : i32, i32
  }
  func.func @transform_4(%arg0: i32) -> (i32, i32) {
    %c0_i32 = arith.constant 0 : i32
    %c0_i32_0 = arith.constant 0 : i32
    %c0_i32_1 = arith.constant 0 : i32
    return %c0_i32, %c0_i32_0 : i32, i32
  }
  func.func @transform_5(%arg0: i32) -> (i32, i32) {
    %c0_i32 = arith.constant 0 : i32
    %c0_i32_0 = arith.constant 0 : i32
    return %arg0, %c0_i32 : i32, i32
  }
}

</mosaic_0001>

<llo_original>
// kernel: tpu_custom_call.1
$region0: #{tpu_custom_call.1}
  #allocation0 [shape = 'u32[]', space=smem, size = 0x4, offset = 0x4, fixed_abs, tag = 'smem constant byte address 0x4 - core index']
  #allocation1 [shape = 'u32[144,128]{1,0:T(1,128)}', space=vmem, size = 0x12000, scoped, tag = 'internal scratch']
  %s0 = inlined_call_operand.hbm [shape: bf16[64,896], index: 0, kind: input, shape index: {}]
  %s1 = inlined_call_operand.hbm [shape: bf16[896,512], index: 1, kind: input, shape index: {}]
  %s2 = inlined_call_operand.hbm [shape: f32[1,512], index: 2, kind: input, shape index: {}]
  %s3 = inlined_call_operand.hbm [shape: bf16[512,896], index: 3, kind: input, shape index: {}]
  %s4 = inlined_call_operand.vmem [shape: f32[1,896], index: 4, kind: input, shape index: {}]
  %s5 = inlined_call_operand.hbm [shape: f32[64,896], index: 5, kind: output, shape index: {}]
  %s6 = sld [smem:[#allocation0]]
  $region46: #{tpu_custom_call.1} parent=0
    _
  %s8 = ssub.s32 1, %s6
  %s9 = scalar_select 0, %s8, %s6
  $region1: #{tpu_custom_call.1} parent=0
    #allocation2 [shape = 'u8[114688]{0}', space=vmem, size = 0x1c000, scoped, tag = 'input window, operand 0, single buffered']
    #allocation3 [shape = 's32[1]{0}', space=sflag, size = 0x4, scoped, tag = 'scoped memory for tpu_custom_call.1']
    #allocation4 [shape = 's32[1]{0}', space=sflag, size = 0x4, scoped, tag = 'scoped memory for tpu_custom_call.1']
    #allocation5 [shape = 'u8[917504]{0}', space=vmem, size = 0xe0000, scoped, tag = 'input window, operand 1, single buffered']
    #allocation6 [shape = 's32[1]{0}', space=sflag, size = 0x4, scoped, tag = 'scoped memory for tpu_custom_call.1']
    #allocation7 [shape = 'u8[2048]{0}', space=vmem, size = 0x800, scoped, tag = 'input window, operand 2, single buffered']
    #allocation8 [shape = 'u8[917504]{0}', space=vmem, size = 0xe0000, scoped, tag = 'input window, operand 3, single buffered']
    #allocation9 [shape = 's32[1]{0}', space=sflag, size = 0x4, scoped, tag = 'scoped memory for tpu_custom_call.1']
    #allocation10 [shape = 'u8[229376]{0}', space=vmem, size = 0x38000, scoped, tag = 'output window, operand 0, single buffered']
    %10 = vsyncpa [#allocation3], 0
    %11 = vsyncpa [#allocation6], 0
    %12 = vsyncpa [#allocation9], 0
    %13 = vsyncpa [#allocation4], 0
    // Predicated region
    $region2: #{tpu_custom_call.1} parent=1 // pred_check
      _
    $region3: #{tpu_custom_call.1} parent=1 // pred_check_branch
      %15 = sbr.rel (0) target = $region5
    $region4: #{tpu_custom_call.1} parent=1 // pred_region
      %s17 = ssub.s32 3584, 3584
      %18 = vsyncadd [#allocation3], %s17
      %s19 = sshll.u32 [#allocation2], 4
      %s20 = int_to_ptr.vmem [resolvable:$true] %s19
      %25 = dma.hbm_to_vmem [thread:$0]  %s0, 3584, %s20, [#allocation3], 448, 448, 28
    $region5: #{tpu_custom_call.1} parent=1 // pred_fallthru
      _
    // Predicated region
    $region6: #{tpu_custom_call.1} parent=1 // pred_check
      _
    $region7: #{tpu_custom_call.1} parent=1 // pred_check_branch
      %27 = sbr.rel (0) target = $region9
    $region8: #{tpu_custom_call.1} parent=1 // pred_region
      %s29 = ssub.s32 28672, 28672
      %30 = vsyncadd [#allocation6], %s29
      %s31 = sshll.u32 [#allocation5], 4
      %s32 = int_to_ptr.vmem [resolvable:$true] %s31
      %37 = dma.hbm_to_vmem [thread:$0]  %s1, 28672, %s32, [#allocation6], 256, 256, 16
    $region9: #{tpu_custom_call.1} parent=1 // pred_fallthru
      _
    // Predicated region
    $region10: #{tpu_custom_call.1} parent=1 // pred_check
      _
    $region11: #{tpu_custom_call.1} parent=1 // pred_check_branch
      %39 = sbr.rel (0) target = $region13
    $region12: #{tpu_custom_call.1} parent=1 // pred_region
      %s41 = ssub.s32 64, 64
      %42 = vsyncadd [#allocation6], %s41
      %s44 = sshll.u32 [#allocation7], 4
      %s45 = int_to_ptr.vmem [resolvable:$true] %s44
      %47 = dma.hbm_to_vmem [thread:$0]  %s2, 64, %s45, [#allocation6]
    $region13: #{tpu_custom_call.1} parent=1 // pred_fallthru
      _
    // Predicated region
    $region14: #{tpu_custom_call.1} parent=1 // pred_check
      _
    $region15: #{tpu_custom_call.1} parent=1 // pred_check_branch
      %49 = sbr.rel (0) target = $region17
    $region16: #{tpu_custom_call.1} parent=1 // pred_region
      %s51 = ssub.s32 28672, 28672
      %52 = vsyncadd [#allocation9], %s51
      %s53 = sshll.u32 [#allocation8], 4
      %s54 = int_to_ptr.vmem [resolvable:$true] %s53
      %59 = dma.hbm_to_vmem [thread:$0]  %s3, 28672, %s54, [#allocation9], 448, 448, 28
    $region17: #{tpu_custom_call.1} parent=1 // pred_fallthru
      _
    // Predicated region
    $region18: #{tpu_custom_call.1} parent=1 // pred_check
      _
    $region19: #{tpu_custom_call.1} parent=1 // pred_check_branch
      %61 = sbr.rel (0) target = $region21
    $region20: #{tpu_custom_call.1} parent=1 // pred_region
      _
    $region21: #{tpu_custom_call.1} parent=1 // pred_fallthru
      _
    // Predicated region
    $region22: #{tpu_custom_call.1} parent=1 // pred_check
      _
    $region23: #{tpu_custom_call.1} parent=1 // pred_check_branch
      %63 = sbr.rel (0) target = $region25
    $region24: #{tpu_custom_call.1} parent=1 // pred_region
      %64 = dma.done [#allocation3], 3584
    $region25: #{tpu_custom_call.1} parent=1 // pred_fallthru
      _
    // Predicated region
    $region26: #{tpu_custom_call.1} parent=1 // pred_check
      _
    $region27: #{tpu_custom_call.1} parent=1 // pred_check_branch
      %66 = sbr.rel (0) target = $region29
    $region28: #{tpu_custom_call.1} parent=1 // pred_region
      %67 = dma.done [#allocation6], 28672
    $region29: #{tpu_custom_call.1} parent=1 // pred_fallthru
      _
    // Predicated region
    $region30: #{tpu_custom_call.1} parent=1 // pred_check
      _
    $region31: #{tpu_custom_call.1} parent=1 // pred_check_branch
      %69 = sbr.rel (0) target = $region33
    $region32: #{tpu_custom_call.1} parent=1 // pred_region
      %70 = dma.done [#allocation6], 64
    $region33: #{tpu_custom_call.1} parent=1 // pred_fallthru
      _
    // Predicated region
    $region34: #{tpu_custom_call.1} parent=1 // pred_check
      _
    $region35: #{tpu_custom_call.1} parent=1 // pred_check_branch
      %72 = sbr.rel (0) target = $region37
    $region36: #{tpu_custom_call.1} parent=1 // pred_region
      %73 = dma.done [#allocation9], 28672
    $region37: #{tpu_custom_call.1} parent=1 // pred_fallthru
      _
    %v75 = vld [vmem:[#allocation2] sm:$0xff]
    %v76 = vld [vmem:[#allocation2 + $0x8] sm:$0xff]
    %v77 = vld [vmem:[#allocation2 + $0x10] sm:$0xff]
    %v78 = vld [vmem:[#allocation2 + $0x18] sm:$0xf]
    %v79 = vld [vmem:[#allocation2 + $0x1c] sm:$0xff]
    %v80 = vld [vmem:[#allocation2 + $0x24] sm:$0xff]
    %v81 = vld [vmem:[#allocation2 + $0x2c] sm:$0xff]
    %v82 = vld [vmem:[#allocation2 + $0x34] sm:$0xf]
    %v83 = vld [vmem:[#allocation2 + $0x38] sm:$0xff]
    %v84 = vld [vmem:[#allocation2 + $0x40] sm:$0xff]
    %v85 = vld [vmem:[#allocation2 + $0x48] sm:$0xff]
    %v86 = vld [vmem:[#allocation2 + $0x50] sm:$0xf]
    %v87 = vld [vmem:[#allocation2 + $0x54] sm:$0xff]
    %v88 = vld [vmem:[#allocation2 + $0x5c] sm:$0xff]
    %v89 = vld [vmem:[#allocation2 + $0x64] sm:$0xff]
    %v90 = vld [vmem:[#allocation2 + $0x6c] sm:$0xf]
    %v91 = vld [vmem:[#allocation2 + $0x70] sm:$0xff]
    %v92 = vld [vmem:[#allocation2 + $0x78] sm:$0xff]
    %v93 = vld [vmem:[#allocation2 + $0x80] sm:$0xff]
    %v94 = vld [vmem:[#allocation2 + $0x88] sm:$0xf]
    %v95 = vld [vmem:[#allocation2 + $0x8c] sm:$0xff]
    %v96 = vld [vmem:[#allocation2 + $0x94] sm:$0xff]
    %v97 = vld [vmem:[#allocation2 + $0x9c] sm:$0xff]
    %v98 = vld [vmem:[#allocation2 + $0xa4] sm:$0xf]
    %v99 = vld [vmem:[#allocation2 + $0xa8] sm:$0xff]
    %v100 = vld [vmem:[#allocation2 + $0xb0] sm:$0xff]
    %v101 = vld [vmem:[#allocation2 + $0xb8] sm:$0xff]
    %v102 = vld [vmem:[#allocation2 + $0xc0] sm:$0xf]
    %v103 = vld [vmem:[#allocation2 + $0xc4] sm:$0xff]
    %v104 = vld [vmem:[#allocation2 + $0xcc] sm:$0xff]
    %v105 = vld [vmem:[#allocation2 + $0xd4] sm:$0xff]
    %v106 = vld [vmem:[#allocation2 + $0xdc] sm:$0xf]
    %v107 = vld [vmem:[#allocation5] sm:$0xff]
    %v108 = vld [vmem:[#allocation5 + $0x8] sm:$0xff]
    %v109 = vld [vmem:[#allocation5 + $0x10] sm:$0xff]
    %v110 = vld [vmem:[#allocation5 + $0x18] sm:$0xff]
    %v111 = vld [vmem:[#allocation5 + $0x20] sm:$0xff]
    %v112 = vld [vmem:[#allocation5 + $0x28] sm:$0xff]
    %v113 = vld [vmem:[#allocation5 + $0x30] sm:$0xff]
    %v114 = vld [vmem:[#allocation5 + $0x38] sm:$0xff]
    %v115 = vld [vmem:[#allocation5 + $0x40] sm:$0xff]
    %v116 = vld [vmem:[#allocation5 + $0x48] sm:$0xff]
    %v117 = vld [vmem:[#allocation5 + $0x50] sm:$0xff]
    %v118 = vld [vmem:[#allocation5 + $0x58] sm:$0xff]
    %v119 = vld [vmem:[#allocation5 + $0x60] sm:$0xff]
    %v120 = vld [vmem:[#allocation5 + $0x68] sm:$0xff]
    %v121 = vld [vmem:[#allocation5 + $0x70] sm:$0xff]
    %v122 = vld [vmem:[#allocation5 + $0x78] sm:$0xff]
    %v123 = vld [vmem:[#allocation5 + $0x80] sm:$0xff]
    %v124 = vld [vmem:[#allocation5 + $0x88] sm:$0xff]
    %v125 = vld [vmem:[#allocation5 + $0x90] sm:$0xff]
    %v126 = vld [vmem:[#allocation5 + $0x98] sm:$0xff]
    %v127 = vld [vmem:[#allocation5 + $0xa0] sm:$0xff]
    %v128 = vld [vmem:[#allocation5 + $0xa8] sm:$0xff]
    %v129 = vld [vmem:[#allocation5 + $0xb0] sm:$0xff]
    %v130 = vld [vmem:[#allocation5 + $0xb8] sm:$0xff]
    %v131 = vld [vmem:[#allocation5 + $0xc0] sm:$0xff]
    %v132 = vld [vmem:[#allocation5 + $0xc8] sm:$0xff]
    %v133 = vld [vmem:[#allocation5 + $0xd0] sm:$0xff]
    %v134 = vld [vmem:[#allocation5 + $0xd8] sm:$0xff]
    %v135 = vld [vmem:[#allocation5 + $0xe0] sm:$0xff]
    %v136 = vld [vmem:[#allocation5 + $0xe8] sm:$0xff]
    %v137 = vld [vmem:[#allocation5 + $0xf0] sm:$0xff]
    %v138 = vld [vmem:[#allocation5 + $0xf8] sm:$0xff]
    %v139 = vld [vmem:[#allocation5 + $0x100] sm:$0xff]
    %v140 = vld [vmem:[#allocation5 + $0x108] sm:$0xff]
    %v141 = vld [vmem:[#allocation5 + $0x110] sm:$0xff]
    %v142 = vld [vmem:[#allocation5 + $0x118] sm:$0xff]
    %v143 = vld [vmem:[#allocation5 + $0x120] sm:$0xff]
    %v144 = vld [vmem:[#allocation5 + $0x128] sm:$0xff]
    %v145 = vld [vmem:[#allocation5 + $0x130] sm:$0xff]
    %v146 = vld [vmem:[#allocation5 + $0x138] sm:$0xff]
    %v147 = vld [vmem:[#allocation5 + $0x140] sm:$0xff]
    %v148 = vld [vmem:[#allocation5 + $0x148] sm:$0xff]
    %v149 = vld [vmem:[#allocation5 + $0x150] sm:$0xff]
    %v150 = vld [vmem:[#allocation5 + $0x158] sm:$0xff]
    %v151 = vld [vmem:[#allocation5 + $0x160] sm:$0xff]
    %v152 = vld [vmem:[#allocation5 + $0x168] sm:$0xff]
    %v153 = vld [vmem:[#allocation5 + $0x170] sm:$0xff]
    %v154 = vld [vmem:[#allocation5 + $0x178] sm:$0xff]
    %v155 = vld [vmem:[#allocation5 + $0x180] sm:$0xff]
    %v156 = vld [vmem:[#allocation5 + $0x188] sm:$0xff]
    %v157 = vld [vmem:[#allocation5 + $0x190] sm:$0xff]
    %v158 = vld [vmem:[#allocation5 + $0x198] sm:$0xff]
    %v159 = vld [vmem:[#allocation5 + $0x1a0] sm:$0xff]
    %v160 = vld [vmem:[#allocation5 + $0x1a8] sm:$0xff]
    %v161 = vld [vmem:[#allocation5 + $0x1b0] sm:$0xff]
    %v162 = vld [vmem:[#allocation5 + $0x1b8] sm:$0xff]
    %v163 = vld [vmem:[#allocation5 + $0x1c0] sm:$0xff]
    %v164 = vld [vmem:[#allocation5 + $0x1c8] sm:$0xff]
    %v165 = vld [vmem:[#allocation5 + $0x1d0] sm:$0xff]
    %v166 = vld [vmem:[#allocation5 + $0x1d8] sm:$0xff]
    %v167 = vld [vmem:[#allocation5 + $0x1e0] sm:$0xff]
    %v168 = vld [vmem:[#allocation5 + $0x1e8] sm:$0xff]
    %v169 = vld [vmem:[#allocation5 + $0x1f0] sm:$0xff]
    %v170 = vld [vmem:[#allocation5 + $0x1f8] sm:$0xff]
    %v171 = vld [vmem:[#allocation5 + $0x200] sm:$0xff]
    %v172 = vld [vmem:[#allocation5 + $0x208] sm:$0xff]
    %v173 = vld [vmem:[#allocation5 + $0x210] sm:$0xff]
    %v174 = vld [vmem:[#allocation5 + $0x218] sm:$0xff]
    %v175 = vld [vmem:[#allocation5 + $0x220] sm:$0xff]
    %v176 = vld [vmem:[#allocation5 + $0x228] sm:$0xff]
    %v177 = vld [vmem:[#allocation5 + $0x230] sm:$0xff]
    %v178 = vld [vmem:[#allocation5 + $0x238] sm:$0xff]
    %v179 = vld [vmem:[#allocation5 + $0x240] sm:$0xff]
    %v180 = vld [vmem:[#allocation5 + $0x248] sm:$0xff]
    %v181 = vld [vmem:[#allocation5 + $0x250] sm:$0xff]
    %v182 = vld [vmem:[#allocation5 + $0x258] sm:$0xff]
    %v183 = vld [vmem:[#allocation5 + $0x260] sm:$0xff]
    %v184 = vld [vmem:[#allocation5 + $0x268] sm:$0xff]
    %v185 = vld [vmem:[#allocation5 + $0x270] sm:$0xff]
    %v186 = vld [vmem:[#allocation5 + $0x278] sm:$0xff]
    %v187 = vld [vmem:[#allocation5 + $0x280] sm:$0xff]
    %v188 = vld [vmem:[#allocation5 + $0x288] sm:$0xff]
    %v189 = vld [vmem:[#allocation5 + $0x290] sm:$0xff]
    %v190 = vld [vmem:[#allocation5 + $0x298] sm:$0xff]
    %v191 = vld [vmem:[#allocation5 + $0x2a0] sm:$0xff]
    %v192 = vld [vmem:[#allocation5 + $0x2a8] sm:$0xff]
    %v193 = vld [vmem:[#allocation5 + $0x2b0] sm:$0xff]
    %v194 = vld [vmem:[#allocation5 + $0x2b8] sm:$0xff]
    %v195 = vld [vmem:[#allocation5 + $0x2c0] sm:$0xff]
    %v196 = vld [vmem:[#allocation5 + $0x2c8] sm:$0xff]
    %v197 = vld [vmem:[#allocation5 + $0x2d0] sm:$0xff]
    %v198 = vld [vmem:[#allocation5 + $0x2d8] sm:$0xff]
    %v199 = vld [vmem:[#allocation5 + $0x2e0] sm:$0xff]
    %v200 = vld [vmem:[#allocation5 + $0x2e8] sm:$0xff]
    %v201 = vld [vmem:[#allocation5 + $0x2f0] sm:$0xff]
    %v202 = vld [vmem:[#allocation5 + $0x2f8] sm:$0xff]
    %v203 = vld [vmem:[#allocation5 + $0x300] sm:$0xff]
    %v204 = vld [vmem:[#allocation5 + $0x308] sm:$0xff]
    %v205 = vld [vmem:[#allocation5 + $0x310] sm:$0xff]
    %v206 = vld [vmem:[#allocation5 + $0x318] sm:$0xff]
    %v207 = vld [vmem:[#allocation5 + $0x320] sm:$0xff]
    %v208 = vld [vmem:[#allocation5 + $0x328] sm:$0xff]
    %v209 = vld [vmem:[#allocation5 + $0x330] sm:$0xff]
    %v210 = vld [vmem:[#allocation5 + $0x338] sm:$0xff]
    %v211 = vld [vmem:[#allocation5 + $0x340] sm:$0xff]
    %v212 = vld [vmem:[#allocation5 + $0x348] sm:$0xff]
    %v213 = vld [vmem:[#allocation5 + $0x350] sm:$0xff]
    %v214 = vld [vmem:[#allocation5 + $0x358] sm:$0xff]
    %v215 = vld [vmem:[#allocation5 + $0x360] sm:$0xff]
    %v216 = vld [vmem:[#allocation5 + $0x368] sm:$0xff]
    %v217 = vld [vmem:[#allocation5 + $0x370] sm:$0xff]
    %v218 = vld [vmem:[#allocation5 + $0x378] sm:$0xff]
    %v219 = vld [vmem:[#allocation5 + $0x380] sm:$0xff]
    %v220 = vld [vmem:[#allocation5 + $0x388] sm:$0xff]
    %v221 = vld [vmem:[#allocation5 + $0x390] sm:$0xff]
    %v222 = vld [vmem:[#allocation5 + $0x398] sm:$0xff]
    %v223 = vld [vmem:[#allocation5 + $0x3a0] sm:$0xff]
    %v224 = vld [vmem:[#allocation5 + $0x3a8] sm:$0xff]
    %v225 = vld [vmem:[#allocation5 + $0x3b0] sm:$0xff]
    %v226 = vld [vmem:[#allocation5 + $0x3b8] sm:$0xff]
    %v227 = vld [vmem:[#allocation5 + $0x3c0] sm:$0xff]
    %v228 = vld [vmem:[#allocation5 + $0x3c8] sm:$0xff]
    %v229 = vld [vmem:[#allocation5 + $0x3d0] sm:$0xff]
    %v230 = vld [vmem:[#allocation5 + $0x3d8] sm:$0xff]
    %v231 = vld [vmem:[#allocation5 + $0x3e0] sm:$0xff]
    %v232 = vld [vmem:[#allocation5 + $0x3e8] sm:$0xff]
    %v233 = vld [vmem:[#allocation5 + $0x3f0] sm:$0xff]
    %v234 = vld [vmem:[#allocation5 + $0x3f8] sm:$0xff]
    %v235 = vld [vmem:[#allocation5 + $0x400] sm:$0xff]
    %v236 = vld [vmem:[#allocation5 + $0x408] sm:$0xff]
    %v237 = vld [vmem:[#allocation5 + $0x410] sm:$0xff]
    %v238 = vld [vmem:[#allocation5 + $0x418] sm:$0xff]
    %v239 = vld [vmem:[#allocation5 + $0x420] sm:$0xff]
    %v240 = vld [vmem:[#allocation5 + $0x428] sm:$0xff]
    %v241 = vld [vmem:[#allocation5 + $0x430] sm:$0xff]
    %v242 = vld [vmem:[#allocation5 + $0x438] sm:$0xff]
    %v243 = vld [vmem:[#allocation5 + $0x440] sm:$0xff]
    %v244 = vld [vmem:[#allocation5 + $0x448] sm:$0xff]
    %v245 = vld [vmem:[#allocation5 + $0x450] sm:$0xff]
    %v246 = vld [vmem:[#allocation5 + $0x458] sm:$0xff]
    %v247 = vld [vmem:[#allocation5 + $0x460] sm:$0xff]
    %v248 = vld [vmem:[#allocation5 + $0x468] sm:$0xff]
    %v249 = vld [vmem:[#allocation5 + $0x470] sm:$0xff]
    %v250 = vld [vmem:[#allocation5 + $0x478] sm:$0xff]
    %v251 = vld [vmem:[#allocation5 + $0x480] sm:$0xff]
    %v252 = vld [vmem:[#allocation5 + $0x488] sm:$0xff]
    %v253 = vld [vmem:[#allocation5 + $0x490] sm:$0xff]
    %v254 = vld [vmem:[#allocation5 + $0x498] sm:$0xff]
    %v255 = vld [vmem:[#allocation5 + $0x4a0] sm:$0xff]
    %v256 = vld [vmem:[#allocation5 + $0x4a8] sm:$0xff]
    %v257 = vld [vmem:[#allocation5 + $0x4b0] sm:$0xff]
    %v258 = vld [vmem:[#allocation5 + $0x4b8] sm:$0xff]
    %v259 = vld [vmem:[#allocation5 + $0x4c0] sm:$0xff]
    %v260 = vld [vmem:[#allocation5 + $0x4c8] sm:$0xff]
    %v261 = vld [vmem:[#allocation5 + $0x4d0] sm:$0xff]
    %v262 = vld [vmem:[#allocation5 + $0x4d8] sm:$0xff]
    %v263 = vld [vmem:[#allocation5 + $0x4e0] sm:$0xff]
    %v264 = vld [vmem:[#allocation5 + $0x4e8] sm:$0xff]
    %v265 = vld [vmem:[#allocation5 + $0x4f0] sm:$0xff]
    %v266 = vld [vmem:[#allocation5 + $0x4f8] sm:$0xff]
    %v267 = vld [vmem:[#allocation5 + $0x500] sm:$0xff]
    %v268 = vld [vmem:[#allocation5 + $0x508] sm:$0xff]
    %v269 = vld [vmem:[#allocation5 + $0x510] sm:$0xff]
    %v270 = vld [vmem:[#allocation5 + $0x518] sm:$0xff]
    %v271 = vld [vmem:[#allocation5 + $0x520] sm:$0xff]
    %v272 = vld [vmem:[#allocation5 + $0x528] sm:$0xff]
    %v273 = vld [vmem:[#allocation5 + $0x530] sm:$0xff]
    %v274 = vld [vmem:[#allocation5 + $0x538] sm:$0xff]
    %v275 = vld [vmem:[#allocation5 + $0x540] sm:$0xff]
    %v276 = vld [vmem:[#allocation5 + $0x548] sm:$0xff]
    %v277 = vld [vmem:[#allocation5 + $0x550] sm:$0xff]
    %v278 = vld [vmem:[#allocation5 + $0x558] sm:$0xff]
    %v279 = vld [vmem:[#allocation5 + $0x560] sm:$0xff]
    %v280 = vld [vmem:[#allocation5 + $0x568] sm:$0xff]
    %v281 = vld [vmem:[#allocation5 + $0x570] sm:$0xff]
    %v282 = vld [vmem:[#allocation5 + $0x578] sm:$0xff]
    %v283 = vld [vmem:[#allocation5 + $0x580] sm:$0xff]
    %v284 = vld [vmem:[#allocation5 + $0x588] sm:$0xff]
    %v285 = vld [vmem:[#allocation5 + $0x590] sm:$0xff]
    %v286 = vld [vmem:[#allocation5 + $0x598] sm:$0xff]
    %v287 = vld [vmem:[#allocation5 + $0x5a0] sm:$0xff]
    %v288 = vld [vmem:[#allocation5 + $0x5a8] sm:$0xff]
    %v289 = vld [vmem:[#allocation5 + $0x5b0] sm:$0xff]
    %v290 = vld [vmem:[#allocation5 + $0x5b8] sm:$0xff]
    %v291 = vld [vmem:[#allocation5 + $0x5c0] sm:$0xff]
    %v292 = vld [vmem:[#allocation5 + $0x5c8] sm:$0xff]
    %v293 = vld [vmem:[#allocation5 + $0x5d0] sm:$0xff]
    %v294 = vld [vmem:[#allocation5 + $0x5d8] sm:$0xff]
    %v295 = vld [vmem:[#allocation5 + $0x5e0] sm:$0xff]
    %v296 = vld [vmem:[#allocation5 + $0x5e8] sm:$0xff]
    %v297 = vld [vmem:[#allocation5 + $0x5f0] sm:$0xff]
    %v298 = vld [vmem:[#allocation5 + $0x5f8] sm:$0xff]
    %v299 = vld [vmem:[#allocation5 + $0x600] sm:$0xff]
    %v300 = vld [vmem:[#allocation5 + $0x608] sm:$0xff]
    %v301 = vld [vmem:[#allocation5 + $0x610] sm:$0xff]
    %v302 = vld [vmem:[#allocation5 + $0x618] sm:$0xff]
    %v303 = vld [vmem:[#allocation5 + $0x620] sm:$0xff]
    %v304 = vld [vmem:[#allocation5 + $0x628] sm:$0xff]
    %v305 = vld [vmem:[#allocation5 + $0x630] sm:$0xff]
    %v306 = vld [vmem:[#allocation5 + $0x638] sm:$0xff]
    %v307 = vld [vmem:[#allocation5 + $0x640] sm:$0xff]
    %v308 = vld [vmem:[#allocation5 + $0x648] sm:$0xff]
    %v309 = vld [vmem:[#allocation5 + $0x650] sm:$0xff]
    %v310 = vld [vmem:[#allocation5 + $0x658] sm:$0xff]
    %v311 = vld [vmem:[#allocation5 + $0x660] sm:$0xff]
    %v312 = vld [vmem:[#allocation5 + $0x668] sm:$0xff]
    %v313 = vld [vmem:[#allocation5 + $0x670] sm:$0xff]
    %v314 = vld [vmem:[#allocation5 + $0x678] sm:$0xff]
    %v315 = vld [vmem:[#allocation5 + $0x680] sm:$0xff]
    %v316 = vld [vmem:[#allocation5 + $0x688] sm:$0xff]
    %v317 = vld [vmem:[#allocation5 + $0x690] sm:$0xff]
    %v318 = vld [vmem:[#allocation5 + $0x698] sm:$0xff]
    %v319 = vld [vmem:[#allocation5 + $0x6a0] sm:$0xff]
    %v320 = vld [vmem:[#allocation5 + $0x6a8] sm:$0xff]
    %v321 = vld [vmem:[#allocation5 + $0x6b0] sm:$0xff]
    %v322 = vld [vmem:[#allocation5 + $0x6b8] sm:$0xff]
    %v323 = vld [vmem:[#allocation5 + $0x6c0] sm:$0xff]
    %v324 = vld [vmem:[#allocation5 + $0x6c8] sm:$0xff]
    %v325 = vld [vmem:[#allocation5 + $0x6d0] sm:$0xff]
    %v326 = vld [vmem:[#allocation5 + $0x6d8] sm:$0xff]
    %v327 = vld [vmem:[#allocation5 + $0x6e0] sm:$0xff]
    %v328 = vld [vmem:[#allocation5 + $0x6e8] sm:$0xff]
    %v329 = vld [vmem:[#allocation5 + $0x6f0] sm:$0xff]
    %v330 = vld [vmem:[#allocation5 + $0x6f8] sm:$0xff]
    %v331 = vld [vmem:[#allocation7] sm:$0xf]
    %v333 = vlaneseq
    %v334 = vshrl.u32 %v333, 7
    %v335 = vsub.s32 0, %v334
    %v336 = vrot.slane %v331, %v335
    %v337 = vlaneseq
    %v338 = vshrl.u32 %v337, 7
    %v339 = vsub.s32 1, %v338
    %v340 = vrot.slane %v331, %v339
    %v341 = vlaneseq
    %v342 = vshrl.u32 %v341, 7
    %v343 = vsub.s32 2, %v342
    %v344 = vrot.slane %v331, %v343
    %v345 = vlaneseq
    %v346 = vshrl.u32 %v345, 7
    %v347 = vsub.s32 3, %v346
    %v348 = vrot.slane %v331, %v347
    %v385 = vunpack.c.l.b16 %v75
    %v386 = vunpack.c.h.b16 %v75
    %v387 = vunpack.c.l.b16 %v76
    %v388 = vunpack.c.h.b16 %v76
    %v389 = vunpack.c.l.b16 %v77
    %v390 = vunpack.c.h.b16 %v77
    %v391 = vunpack.c.l.b16 %v78
    %v392 = vunpack.c.l.b16 %v79
    %v393 = vunpack.c.h.b16 %v79
    %v394 = vunpack.c.l.b16 %v80
    %v395 = vunpack.c.h.b16 %v80
    %v396 = vunpack.c.l.b16 %v81
    %v397 = vunpack.c.h.b16 %v81
    %v398 = vunpack.c.l.b16 %v82
    %v399 = vunpack.c.l.b16 %v83
    %v400 = vunpack.c.h.b16 %v83
    %v401 = vunpack.c.l.b16 %v84
    %v402 = vunpack.c.h.b16 %v84
    %v403 = vunpack.c.l.b16 %v85
    %v404 = vunpack.c.h.b16 %v85
    %v405 = vunpack.c.l.b16 %v86
    %v406 = vunpack.c.l.b16 %v87
    %v407 = vunpack.c.h.b16 %v87
    %v408 = vunpack.c.l.b16 %v88
    %v409 = vunpack.c.h.b16 %v88
    %v410 = vunpack.c.l.b16 %v89
    %v411 = vunpack.c.h.b16 %v89
    %v412 = vunpack.c.l.b16 %v90
    %v413 = vunpack.c.l.b16 %v91
    %v414 = vunpack.c.h.b16 %v91
    %v415 = vunpack.c.l.b16 %v92
    %v416 = vunpack.c.h.b16 %v92
    %v417 = vunpack.c.l.b16 %v93
    %v418 = vunpack.c.h.b16 %v93
    %v419 = vunpack.c.l.b16 %v94
    %v420 = vunpack.c.l.b16 %v95
    %v421 = vunpack.c.h.b16 %v95
    %v422 = vunpack.c.l.b16 %v96
    %v423 = vunpack.c.h.b16 %v96
    %v424 = vunpack.c.l.b16 %v97
    %v425 = vunpack.c.h.b16 %v97
    %v426 = vunpack.c.l.b16 %v98
    %v427 = vunpack.c.l.b16 %v99
    %v428 = vunpack.c.h.b16 %v99
    %v429 = vunpack.c.l.b16 %v100
    %v430 = vunpack.c.h.b16 %v100
    %v431 = vunpack.c.l.b16 %v101
    %v432 = vunpack.c.h.b16 %v101
    %v433 = vunpack.c.l.b16 %v102
    %v434 = vunpack.c.l.b16 %v103
    %v435 = vunpack.c.h.b16 %v103
    %v436 = vunpack.c.l.b16 %v104
    %v437 = vunpack.c.h.b16 %v104
    %v438 = vunpack.c.l.b16 %v105
    %v439 = vunpack.c.h.b16 %v105
    %v440 = vunpack.c.l.b16 %v106
    %v441 = vpack.c.b16 %v392, %v385
    %v442 = vpack.c.b16 %v393, %v386
    %v443 = vpack.c.b16 %v394, %v387
    %v444 = vpack.c.b16 %v395, %v388
    %v445 = vpack.c.b16 %v396, %v389
    %v446 = vpack.c.b16 %v397, %v390
    %v447 = vpack.c.b16 %v398, %v391
    %v448 = vpack.c.b16 %v406, %v399
    %v449 = vpack.c.b16 %v407, %v400
    %v450 = vpack.c.b16 %v408, %v401
    %v451 = vpack.c.b16 %v409, %v402
    %v452 = vpack.c.b16 %v410, %v403
    %v453 = vpack.c.b16 %v411, %v404
    %v454 = vpack.c.b16 %v412, %v405
    %v455 = vpack.c.b16 %v420, %v413
    %v456 = vpack.c.b16 %v421, %v414
    %v457 = vpack.c.b16 %v422, %v415
    %v458 = vpack.c.b16 %v423, %v416
    %v459 = vpack.c.b16 %v424, %v417
    %v460 = vpack.c.b16 %v425, %v418
    %v461 = vpack.c.b16 %v426, %v419
    %v462 = vpack.c.b16 %v434, %v427
    %v463 = vpack.c.b16 %v435, %v428
    %v464 = vpack.c.b16 %v436, %v429
    %v465 = vpack.c.b16 %v437, %v430
    %v466 = vpack.c.b16 %v438, %v431
    %v467 = vpack.c.b16 %v439, %v432
    %v468 = vpack.c.b16 %v440, %v433
    %v721 = vunpack.c.l.b16 %v107
    %v722 = vunpack.c.h.b16 %v107
    %v723 = vunpack.c.l.b16 %v108
    %v724 = vunpack.c.h.b16 %v108
    %v725 = vunpack.c.l.b16 %v109
    %v726 = vunpack.c.h.b16 %v109
    %v727 = vunpack.c.l.b16 %v110
    %v728 = vunpack.c.h.b16 %v110
    %v729 = vunpack.c.l.b16 %v111
    %v730 = vunpack.c.h.b16 %v111
    %v731 = vunpack.c.l.b16 %v112
    %v732 = vunpack.c.h.b16 %v112
    %v733 = vunpack.c.l.b16 %v113
    %v734 = vunpack.c.h.b16 %v113
    %v735 = vunpack.c.l.b16 %v114
    %v736 = vunpack.c.h.b16 %v114
    %v737 = vunpack.c.l.b16 %v115
    %v738 = vunpack.c.h.b16 %v115
    %v739 = vunpack.c.l.b16 %v116
    %v740 = vunpack.c.h.b16 %v116
    %v741 = vunpack.c.l.b16 %v117
    %v742 = vunpack.c.h.b16 %v117
    %v743 = vunpack.c.l.b16 %v118
    %v744 = vunpack.c.h.b16 %v118
    %v745 = vunpack.c.l.b16 %v119
    %v746 = vunpack.c.h.b16 %v119
    %v747 = vunpack.c.l.b16 %v120
    %v748 = vunpack.c.h.b16 %v120
    %v749 = vunpack.c.l.b16 %v121
    %v750 = vunpack.c.h.b16 %v121
    %v751 = vunpack.c.l.b16 %v122
    %v752 = vunpack.c.h.b16 %v122
    %v753 = vunpack.c.l.b16 %v123
    %v754 = vunpack.c.h.b16 %v123
    %v755 = vunpack.c.l.b16 %v124
    %v756 = vunpack.c.h.b16 %v124
    %v757 = vunpack.c.l.b16 %v125
    %v758 = vunpack.c.h.b16 %v125
    %v759 = vunpack.c.l.b16 %v126
    %v760 = vunpack.c.h.b16 %v126
    %v761 = vunpack.c.l.b16 %v127
    %v762 = vunpack.c.h.b16 %v127
    %v763 = vunpack.c.l.b16 %v128
    %v764 = vunpack.c.h.b16 %v128
    %v765 = vunpack.c.l.b16 %v129
    %v766 = vunpack.c.h.b16 %v129
    %v767 = vunpack.c.l.b16 %v130
    %v768 = vunpack.c.h.b16 %v130
    %v769 = vunpack.c.l.b16 %v131
    %v770 = vunpack.c.h.b16 %v131
    %v771 = vunpack.c.l.b16 %v132
    %v772 = vunpack.c.h.b16 %v132
    %v773 = vunpack.c.l.b16 %v133
    %v774 = vunpack.c.h.b16 %v133
    %v775 = vunpack.c.l.b16 %v134
    %v776 = vunpack.c.h.b16 %v134
    %v777 = vunpack.c.l.b16 %v135
    %v778 = vunpack.c.h.b16 %v135
    %v779 = vunpack.c.l.b16 %v136
    %v780 = vunpack.c.h.b16 %v136
    %v781 = vunpack.c.l.b16 %v137
    %v782 = vunpack.c.h.b16 %v137
    %v783 = vunpack.c.l.b16 %v138
    %v784 = vunpack.c.h.b16 %v138
    %v785 = vunpack.c.l.b16 %v139
    %v786 = vunpack.c.h.b16 %v139
    %v787 = vunpack.c.l.b16 %v140
    %v788 = vunpack.c.h.b16 %v140
    %v789 = vunpack.c.l.b16 %v141
    %v790 = vunpack.c.h.b16 %v141
    %v791 = vunpack.c.l.b16 %v142
    %v792 = vunpack.c.h.b16 %v142
    %v793 = vunpack.c.l.b16 %v143
    %v794 = vunpack.c.h.b16 %v143
    %v795 = vunpack.c.l.b16 %v144
    %v796 = vunpack.c.h.b16 %v144
    %v797 = vunpack.c.l.b16 %v145
    %v798 = vunpack.c.h.b16 %v145
    %v799 = vunpack.c.l.b16 %v146
    %v800 = vunpack.c.h.b16 %v146
    %v801 = vunpack.c.l.b16 %v147
    %v802 = vunpack.c.h.b16 %v147
    %v803 = vunpack.c.l.b16 %v148
    %v804 = vunpack.c.h.b16 %v148
    %v805 = vunpack.c.l.b16 %v149
    %v806 = vunpack.c.h.b16 %v149
    %v807 = vunpack.c.l.b16 %v150
    %v808 = vunpack.c.h.b16 %v150
    %v809 = vunpack.c.l.b16 %v151
    %v810 = vunpack.c.h.b16 %v151
    %v811 = vunpack.c.l.b16 %v152
    %v812 = vunpack.c.h.b16 %v152
    %v813 = vunpack.c.l.b16 %v153
    %v814 = vunpack.c.h.b16 %v153
    %v815 = vunpack.c.l.b16 %v154
    %v816 = vunpack.c.h.b16 %v154
    %v817 = vunpack.c.l.b16 %v155
    %v818 = vunpack.c.h.b16 %v155
    %v819 = vunpack.c.l.b16 %v156
    %v820 = vunpack.c.h.b16 %v156
    %v821 = vunpack.c.l.b16 %v157
    %v822 = vunpack.c.h.b16 %v157
    %v823 = vunpack.c.l.b16 %v158
    %v824 = vunpack.c.h.b16 %v158
    %v825 = vunpack.c.l.b16 %v159
    %v826 = vunpack.c.h.b16 %v159
    %v827 = vunpack.c.l.b16 %v160
    %v828 = vunpack.c.h.b16 %v160
    %v829 = vunpack.c.l.b16 %v161
    %v830 = vunpack.c.h.b16 %v161
    %v831 = vunpack.c.l.b16 %v162
    %v832 = vunpack.c.h.b16 %v162
    %v833 = vunpack.c.l.b16 %v163
    %v834 = vunpack.c.h.b16 %v163
    %v835 = vunpack.c.l.b16 %v164
    %v836 = vunpack.c.h.b16 %v164
    %v837 = vunpack.c.l.b16 %v165
    %v838 = vunpack.c.h.b16 %v165
    %v839 = vunpack.c.l.b16 %v166
    %v840 = vunpack.c.h.b16 %v166
    %v841 = vunpack.c.l.b16 %v167
    %v842 = vunpack.c.h.b16 %v167
    %v843 = vunpack.c.l.b16 %v168
    %v844 = vunpack.c.h.b16 %v168
    %v845 = vunpack.c.l.b16 %v169
    %v846 = vunpack.c.h.b16 %v169
    %v847 = vunpack.c.l.b16 %v170
    %v848 = vunpack.c.h.b16 %v170
    %v849 = vunpack.c.l.b16 %v171
    %v850 = vunpack.c.h.b16 %v171
    %v851 = vunpack.c.l.b16 %v172
    %v852 = vunpack.c.h.b16 %v172
    %v853 = vunpack.c.l.b16 %v173
    %v854 = vunpack.c.h.b16 %v173
    %v855 = vunpack.c.l.b16 %v174
    %v856 = vunpack.c.h.b16 %v174
    %v857 = vunpack.c.l.b16 %v175
    %v858 = vunpack.c.h.b16 %v175
    %v859 = vunpack.c.l.b16 %v176
    %v860 = vunpack.c.h.b16 %v176
    %v861 = vunpack.c.l.b16 %v177
    %v862 = vunpack.c.h.b16 %v177
    %v863 = vunpack.c.l.b16 %v178
    %v864 = vunpack.c.h.b16 %v178
    %v865 = vunpack.c.l.b16 %v179
    %v866 = vunpack.c.h.b16 %v179
    %v867 = vunpack.c.l.b16 %v180
    %v868 = vunpack.c.h.b16 %v180
    %v869 = vunpack.c.l.b16 %v181
    %v870 = vunpack.c.h.b16 %v181
    %v871 = vunpack.c.l.b16 %v182
    %v872 = vunpack.c.h.b16 %v182
    %v873 = vunpack.c.l.b16 %v183
    %v874 = vunpack.c.h.b16 %v183
    %v875 = vunpack.c.l.b16 %v184
    %v876 = vunpack.c.h.b16 %v184
    %v877 = vunpack.c.l.b16 %v185
    %v878 = vunpack.c.h.b16 %v185
    %v879 = vunpack.c.l.b16 %v186
    %v880 = vunpack.c.h.b16 %v186
    %v881 = vunpack.c.l.b16 %v187
    %v882 = vunpack.c.h.b16 %v187
    %v883 = vunpack.c.l.b16 %v188
    %v884 = vunpack.c.h.b16 %v188
    %v885 = vunpack.c.l.b16 %v189
    %v886 = vunpack.c.h.b16 %v189
    %v887 = vunpack.c.l.b16 %v190
    %v888 = vunpack.c.h.b16 %v190
    %v889 = vunpack.c.l.b16 %v191
    %v890 = vunpack.c.h.b16 %v191
    %v891 = vunpack.c.l.b16 %v192
    %v892 = vunpack.c.h.b16 %v192
    %v893 = vunpack.c.l.b16 %v193
    %v894 = vunpack.c.h.b16 %v193
    %v895 = vunpack.c.l.b16 %v194
    %v896 = vunpack.c.h.b16 %v194
    %v897 = vunpack.c.l.b16 %v195
    %v898 = vunpack.c.h.b16 %v195
    %v899 = vunpack.c.l.b16 %v196
    %v900 = vunpack.c.h.b16 %v196
    %v901 = vunpack.c.l.b16 %v197
    %v902 = vunpack.c.h.b16 %v197
    %v903 = vunpack.c.l.b16 %v198
    %v904 = vunpack.c.h.b16 %v198
    %v905 = vunpack.c.l.b16 %v199
    %v906 = vunpack.c.h.b16 %v199
    %v907 = vunpack.c.l.b16 %v200
    %v908 = vunpack.c.h.b16 %v200
    %v909 = vunpack.c.l.b16 %v201
    %v910 = vunpack.c.h.b16 %v201
    %v911 = vunpack.c.l.b16 %v202
    %v912 = vunpack.c.h.b16 %v202
    %v913 = vunpack.c.l.b16 %v203
    %v914 = vunpack.c.h.b16 %v203
    %v915 = vunpack.c.l.b16 %v204
    %v916 = vunpack.c.h.b16 %v204
    %v917 = vunpack.c.l.b16 %v205
    %v918 = vunpack.c.h.b16 %v205
    %v919 = vunpack.c.l.b16 %v206
    %v920 = vunpack.c.h.b16 %v206
    %v921 = vunpack.c.l.b16 %v207
    %v922 = vunpack.c.h.b16 %v207
    %v923 = vunpack.c.l.b16 %v208
    %v924 = vunpack.c.h.b16 %v208
    %v925 = vunpack.c.l.b16 %v209
    %v926 = vunpack.c.h.b16 %v209
    %v927 = vunpack.c.l.b16 %v210
    %v928 = vunpack.c.h.b16 %v210
    %v929 = vunpack.c.l.b16 %v211
    %v930 = vunpack.c.h.b16 %v211
    %v931 = vunpack.c.l.b16 %v212
    %v932 = vunpack.c.h.b16 %v212
    %v933 = vunpack.c.l.b16 %v213
    %v934 = vunpack.c.h.b16 %v213
    %v935 = vunpack.c.l.b16 %v214
    %v936 = vunpack.c.h.b16 %v214
    %v937 = vunpack.c.l.b16 %v215
    %v938 = vunpack.c.h.b16 %v215
    %v939 = vunpack.c.l.b16 %v216
    %v940 = vunpack.c.h.b16 %v216
    %v941 = vunpack.c.l.b16 %v217
    %v942 = vunpack.c.h.b16 %v217
    %v943 = vunpack.c.l.b16 %v218
    %v944 = vunpack.c.h.b16 %v218
    %v945 = vunpack.c.l.b16 %v219
    %v946 = vunpack.c.h.b16 %v219
    %v947 = vunpack.c.l.b16 %v220
    %v948 = vunpack.c.h.b16 %v220
    %v949 = vunpack.c.l.b16 %v221
    %v950 = vunpack.c.h.b16 %v221
    %v951 = vunpack.c.l.b16 %v222
    %v952 = vunpack.c.h.b16 %v222
    %v953 = vunpack.c.l.b16 %v223
    %v954 = vunpack.c.h.b16 %v223
    %v955 = vunpack.c.l.b16 %v224
    %v956 = vunpack.c.h.b16 %v224
    %v957 = vunpack.c.l.b16 %v225
    %v958 = vunpack.c.h.b16 %v225
    %v959 = vunpack.c.l.b16 %v226
    %v960 = vunpack.c.h.b16 %v226
    %v961 = vunpack.c.l.b16 %v227
    %v962 = vunpack.c.h.b16 %v227
    %v963 = vunpack.c.l.b16 %v228
    %v964 = vunpack.c.h.b16 %v228
    %v965 = vunpack.c.l.b16 %v229
    %v966 = vunpack.c.h.b16 %v229
    %v967 = vunpack.c.l.b16 %v230
    %v968 = vunpack.c.h.b16 %v230
    %v969 = vunpack.c.l.b16 %v231
    %v970 = vunpack.c.h.b16 %v231
    %v971 = vunpack.c.l.b16 %v232
    %v972 = vunpack.c.h.b16 %v232
    %v973 = vunpack.c.l.b16 %v233
    %v974 = vunpack.c.h.b16 %v233
    %v975 = vunpack.c.l.b16 %v234
    %v976 = vunpack.c.h.b16 %v234
    %v977 = vunpack.c.l.b16 %v235
    %v978 = vunpack.c.h.b16 %v235
    %v979 = vunpack.c.l.b16 %v236
    %v980 = vunpack.c.h.b16 %v236
    %v981 = vunpack.c.l.b16 %v237
    %v982 = vunpack.c.h.b16 %v237
    %v983 = vunpack.c.l.b16 %v238
    %v984 = vunpack.c.h.b16 %v238
    %v985 = vunpack.c.l.b16 %v239
    %v986 = vunpack.c.h.b16 %v239
    %v987 = vunpack.c.l.b16 %v240
    %v988 = vunpack.c.h.b16 %v240
    %v989 = vunpack.c.l.b16 %v241
    %v990 = vunpack.c.h.b16 %v241
    %v991 = vunpack.c.l.b16 %v242
    %v992 = vunpack.c.h.b16 %v242
    %v993 = vunpack.c.l.b16 %v243
    %v994 = vunpack.c.h.b16 %v243
    %v995 = vunpack.c.l.b16 %v244
    %v996 = vunpack.c.h.b16 %v244
    %v997 = vunpack.c.l.b16 %v245
    %v998 = vunpack.c.h.b16 %v245
    %v999 = vunpack.c.l.b16 %v246
    %v1000 = vunpack.c.h.b16 %v246
    %v1001 = vunpack.c.l.b16 %v247
    %v1002 = vunpack.c.h.b16 %v247
    %v1003 = vunpack.c.l.b16 %v248
    %v1004 = vunpack.c.h.b16 %v248
    %v1005 = vunpack.c.l.b16 %v249
    %v1006 = vunpack.c.h.b16 %v249
    %v1007 = vunpack.c.l.b16 %v250
    %v1008 = vunpack.c.h.b16 %v250
    %v1009 = vunpack.c.l.b16 %v251
    %v1010 = vunpack.c.h.b16 %v251
    %v1011 = vunpack.c.l.b16 %v252
    %v1012 = vunpack.c.h.b16 %v252
    %v1013 = vunpack.c.l.b16 %v253
    %v1014 = vunpack.c.h.b16 %v253
    %v1015 = vunpack.c.l.b16 %v254
    %v1016 = vunpack.c.h.b16 %v254
    %v1017 = vunpack.c.l.b16 %v255
    %v1018 = vunpack.c.h.b16 %v255
    %v1019 = vunpack.c.l.b16 %v256
    %v1020 = vunpack.c.h.b16 %v256
    %v1021 = vunpack.c.l.b16 %v257
    %v1022 = vunpack.c.h.b16 %v257
    %v1023 = vunpack.c.l.b16 %v258
    %v1024 = vunpack.c.h.b16 %v258
    %v1025 = vunpack.c.l.b16 %v259
    %v1026 = vunpack.c.h.b16 %v259
    %v1027 = vunpack.c.l.b16 %v260
    %v1028 = vunpack.c.h.b16 %v260
    %v1029 = vunpack.c.l.b16 %v261
    %v1030 = vunpack.c.h.b16 %v261
    %v1031 = vunpack.c.l.b16 %v262
    %v1032 = vunpack.c.h.b16 %v262
    %v1033 = vunpack.c.l.b16 %v263
    %v1034 = vunpack.c.h.b16 %v263
    %v1035 = vunpack.c.l.b16 %v264
    %v1036 = vunpack.c.h.b16 %v264
    %v1037 = vunpack.c.l.b16 %v265
    %v1038 = vunpack.c.h.b16 %v265
    %v1039 = vunpack.c.l.b16 %v266
    %v1040 = vunpack.c.h.b16 %v266
    %v1041 = vunpack.c.l.b16 %v267
    %v1042 = vunpack.c.h.b16 %v267
    %v1043 = vunpack.c.l.b16 %v268
    %v1044 = vunpack.c.h.b16 %v268
    %v1045 = vunpack.c.l.b16 %v269
    %v1046 = vunpack.c.h.b16 %v269
    %v1047 = vunpack.c.l.b16 %v270
    %v1048 = vunpack.c.h.b16 %v270
    %v1049 = vunpack.c.l.b16 %v271
    %v1050 = vunpack.c.h.b16 %v271
    %v1051 = vunpack.c.l.b16 %v272
    %v1052 = vunpack.c.h.b16 %v272
    %v1053 = vunpack.c.l.b16 %v273
    %v1054 = vunpack.c.h.b16 %v273
    %v1055 = vunpack.c.l.b16 %v274
    %v1056 = vunpack.c.h.b16 %v274
    %v1057 = vunpack.c.l.b16 %v275
    %v1058 = vunpack.c.h.b16 %v275
    %v1059 = vunpack.c.l.b16 %v276
    %v1060 = vunpack.c.h.b16 %v276
    %v1061 = vunpack.c.l.b16 %v277
    %v1062 = vunpack.c.h.b16 %v277
    %v1063 = vunpack.c.l.b16 %v278
    %v1064 = vunpack.c.h.b16 %v278
    %v1065 = vunpack.c.l.b16 %v279
    %v1066 = vunpack.c.h.b16 %v279
    %v1067 = vunpack.c.l.b16 %v280
    %v1068 = vunpack.c.h.b16 %v280
    %v1069 = vunpack.c.l.b16 %v281
    %v1070 = vunpack.c.h.b16 %v281
    %v1071 = vunpack.c.l.b16 %v282
    %v1072 = vunpack.c.h.b16 %v282
    %v1073 = vunpack.c.l.b16 %v283
    %v1074 = vunpack.c.h.b16 %v283
    %v1075 = vunpack.c.l.b16 %v284
    %v1076 = vunpack.c.h.b16 %v284
    %v1077 = vunpack.c.l.b16 %v285
    %v1078 = vunpack.c.h.b16 %v285
    %v1079 = vunpack.c.l.b16 %v286
    %v1080 = vunpack.c.h.b16 %v286
    %v1081 = vunpack.c.l.b16 %v287
    %v1082 = vunpack.c.h.b16 %v287
    %v1083 = vunpack.c.l.b16 %v288
    %v1084 = vunpack.c.h.b16 %v288
    %v1085 = vunpack.c.l.b16 %v289
    %v1086 = vunpack.c.h.b16 %v289
    %v1087 = vunpack.c.l.b16 %v290
    %v1088 = vunpack.c.h.b16 %v290
    %v1089 = vunpack.c.l.b16 %v291
    %v1090 = vunpack.c.h.b16 %v291
    %v1091 = vunpack.c.l.b16 %v292
    %v1092 = vunpack.c.h.b16 %v292
    %v1093 = vunpack.c.l.b16 %v293
    %v1094 = vunpack.c.h.b16 %v293
    %v1095 = vunpack.c.l.b16 %v294
    %v1096 = vunpack.c.h.b16 %v294
    %v1097 = vunpack.c.l.b16 %v295
    %v1098 = vunpack.c.h.b16 %v295
    %v1099 = vunpack.c.l.b16 %v296
    %v1100 = vunpack.c.h.b16 %v296
    %v1101 = vunpack.c.l.b16 %v297
    %v1102 = vunpack.c.h.b16 %v297
    %v1103 = vunpack.c.l.b16 %v298
    %v1104 = vunpack.c.h.b16 %v298
    %v1105 = vunpack.c.l.b16 %v299
    %v1106 = vunpack.c.h.b16 %v299
    %v1107 = vunpack.c.l.b16 %v300
    %v1108 = vunpack.c.h.b16 %v300
    %v1109 = vunpack.c.l.b16 %v301
    %v1110 = vunpack.c.h.b16 %v301
    %v1111 = vunpack.c.l.b16 %v302
    %v1112 = vunpack.c.h.b16 %v302
    %v1113 = vunpack.c.l.b16 %v303
    %v1114 = vunpack.c.h.b16 %v303
    %v1115 = vunpack.c.l.b16 %v304
    %v1116 = vunpack.c.h.b16 %v304
    %v1117 = vunpack.c.l.b16 %v305
    %v1118 = vunpack.c.h.b16 %v305
    %v1119 = vunpack.c.l.b16 %v306
    %v1120 = vunpack.c.h.b16 %v306
    %v1121 = vunpack.c.l.b16 %v307
    %v1122 = vunpack.c.h.b16 %v307
    %v1123 = vunpack.c.l.b16 %v308
    %v1124 = vunpack.c.h.b16 %v308
    %v1125 = vunpack.c.l.b16 %v309
    %v1126 = vunpack.c.h.b16 %v309
    %v1127 = vunpack.c.l.b16 %v310
    %v1128 = vunpack.c.h.b16 %v310
    %v1129 = vunpack.c.l.b16 %v311
    %v1130 = vunpack.c.h.b16 %v311
    %v1131 = vunpack.c.l.b16 %v312
    %v1132 = vunpack.c.h.b16 %v312
    %v1133 = vunpack.c.l.b16 %v313
    %v1134 = vunpack.c.h.b16 %v313
    %v1135 = vunpack.c.l.b16 %v314
    %v1136 = vunpack.c.h.b16 %v314
    %v1137 = vunpack.c.l.b16 %v315
    %v1138 = vunpack.c.h.b16 %v315
    %v1139 = vunpack.c.l.b16 %v316
    %v1140 = vunpack.c.h.b16 %v316
    %v1141 = vunpack.c.l.b16 %v317
    %v1142 = vunpack.c.h.b16 %v317
    %v1143 = vunpack.c.l.b16 %v318
    %v1144 = vunpack.c.h.b16 %v318
    %v1145 = vunpack.c.l.b16 %v319
    %v1146 = vunpack.c.h.b16 %v319
    %v1147 = vunpack.c.l.b16 %v320
    %v1148 = vunpack.c.h.b16 %v320
    %v1149 = vunpack.c.l.b16 %v321
    %v1150 = vunpack.c.h.b16 %v321
    %v1151 = vunpack.c.l.b16 %v322
    %v1152 = vunpack.c.h.b16 %v322
    %v1153 = vunpack.c.l.b16 %v323
    %v1154 = vunpack.c.h.b16 %v323
    %v1155 = vunpack.c.l.b16 %v324
    %v1156 = vunpack.c.h.b16 %v324
    %v1157 = vunpack.c.l.b16 %v325
    %v1158 = vunpack.c.h.b16 %v325
    %v1159 = vunpack.c.l.b16 %v326
    %v1160 = vunpack.c.h.b16 %v326
    %v1161 = vunpack.c.l.b16 %v327
    %v1162 = vunpack.c.h.b16 %v327
    %v1163 = vunpack.c.l.b16 %v328
    %v1164 = vunpack.c.h.b16 %v328
    %v1165 = vunpack.c.l.b16 %v329
    %v1166 = vunpack.c.h.b16 %v329
    %v1167 = vunpack.c.l.b16 %v330
    %v1168 = vunpack.c.h.b16 %v330
    %v1169 = vpack.c.b16 %v725, %v721
    %v1170 = vpack.c.b16 %v726, %v722
    %v1171 = vpack.c.b16 %v727, %v723
    %v1172 = vpack.c.b16 %v728, %v724
    %v1173 = vpack.c.b16 %v733, %v729
    %v1174 = vpack.c.b16 %v734, %v730
    %v1175 = vpack.c.b16 %v735, %v731
    %v1176 = vpack.c.b16 %v736, %v732
    %v1177 = vpack.c.b16 %v741, %v737
    %v1178 = vpack.c.b16 %v742, %v738
    %v1179 = vpack.c.b16 %v743, %v739
    %v1180 = vpack.c.b16 %v744, %v740
    %v1181 = vpack.c.b16 %v749, %v745
    %v1182 = vpack.c.b16 %v750, %v746
    %v1183 = vpack.c.b16 %v751, %v747
    %v1184 = vpack.c.b16 %v752, %v748
    %v1185 = vpack.c.b16 %v757, %v753
    %v1186 = vpack.c.b16 %v758, %v754
    %v1187 = vpack.c.b16 %v759, %v755
    %v1188 = vpack.c.b16 %v760, %v756
    %v1189 = vpack.c.b16 %v765, %v761
    %v1190 = vpack.c.b16 %v766, %v762
    %v1191 = vpack.c.b16 %v767, %v763
    %v1192 = vpack.c.b16 %v768, %v764
    %v1193 = vpack.c.b16 %v773, %v769
    %v1194 = vpack.c.b16 %v774, %v770
    %v1195 = vpack.c.b16 %v775, %v771
    %v1196 = vpack.c.b16 %v776, %v772
    %v1197 = vpack.c.b16 %v781, %v777
    %v1198 = vpack.c.b16 %v782, %v778
    %v1199 = vpack.c.b16 %v783, %v779
    %v1200 = vpack.c.b16 %v784, %v780
    %v1201 = vpack.c.b16 %v789, %v785
    %v1202 = vpack.c.b16 %v790, %v786
    %v1203 = vpack.c.b16 %v791, %v787
    %v1204 = vpack.c.b16 %v792, %v788
    %v1205 = vpack.c.b16 %v797, %v793
    %v1206 = vpack.c.b16 %v798, %v794
    %v1207 = vpack.c.b16 %v799, %v795
    %v1208 = vpack.c.b16 %v800, %v796
    %v1209 = vpack.c.b16 %v805, %v801
    %v1210 = vpack.c.b16 %v806, %v802
    %v1211 = vpack.c.b16 %v807, %v803
    %v1212 = vpack.c.b16 %v808, %v804
    %v1213 = vpack.c.b16 %v813, %v809
    %v1214 = vpack.c.b16 %v814, %v810
    %v1215 = vpack.c.b16 %v815, %v811
    %v1216 = vpack.c.b16 %v816, %v812
    %v1217 = vpack.c.b16 %v821, %v817
    %v1218 = vpack.c.b16 %v822, %v818
    %v1219 = vpack.c.b16 %v823, %v819
    %v1220 = vpack.c.b16 %v824, %v820
    %v1221 = vpack.c.b16 %v829, %v825
    %v1222 = vpack.c.b16 %v830, %v826
    %v1223 = vpack.c.b16 %v831, %v827
    %v1224 = vpack.c.b16 %v832, %v828
    %v1225 = vpack.c.b16 %v837, %v833
    %v1226 = vpack.c.b16 %v838, %v834
    %v1227 = vpack.c.b16 %v839, %v835
    %v1228 = vpack.c.b16 %v840, %v836
    %v1229 = vpack.c.b16 %v845, %v841
    %v1230 = vpack.c.b16 %v846, %v842
    %v1231 = vpack.c.b16 %v847, %v843
    %v1232 = vpack.c.b16 %v848, %v844
    %v1233 = vpack.c.b16 %v853, %v849
    %v1234 = vpack.c.b16 %v854, %v850
    %v1235 = vpack.c.b16 %v855, %v851
    %v1236 = vpack.c.b16 %v856, %v852
    %v1237 = vpack.c.b16 %v861, %v857
    %v1238 = vpack.c.b16 %v862, %v858
    %v1239 = vpack.c.b16 %v863, %v859
    %v1240 = vpack.c.b16 %v864, %v860
    %v1241 = vpack.c.b16 %v869, %v865
    %v1242 = vpack.c.b16 %v870, %v866
    %v1243 = vpack.c.b16 %v871, %v867
    %v1244 = vpack.c.b16 %v872, %v868
    %v1245 = vpack.c.b16 %v877, %v873
    %v1246 = vpack.c.b16 %v878, %v874
    %v1247 = vpack.c.b16 %v879, %v875
    %v1248 = vpack.c.b16 %v880, %v876
    %v1249 = vpack.c.b16 %v885, %v881
    %v1250 = vpack.c.b16 %v886, %v882
    %v1251 = vpack.c.b16 %v887, %v883
    %v1252 = vpack.c.b16 %v888, %v884
    %v1253 = vpack.c.b16 %v893, %v889
    %v1254 = vpack.c.b16 %v894, %v890
    %v1255 = vpack.c.b16 %v895, %v891
    %v1256 = vpack.c.b16 %v896, %v892
    %v1257 = vpack.c.b16 %v901, %v897
    %v1258 = vpack.c.b16 %v902, %v898
    %v1259 = vpack.c.b16 %v903, %v899
    %v1260 = vpack.c.b16 %v904, %v900
    %v1261 = vpack.c.b16 %v909, %v905
    %v1262 = vpack.c.b16 %v910, %v906
    %v1263 = vpack.c.b16 %v911, %v907
    %v1264 = vpack.c.b16 %v912, %v908
    %v1265 = vpack.c.b16 %v917, %v913
    %v1266 = vpack.c.b16 %v918, %v914
    %v1267 = vpack.c.b16 %v919, %v915
    %v1268 = vpack.c.b16 %v920, %v916
    %v1269 = vpack.c.b16 %v925, %v921
    %v1270 = vpack.c.b16 %v926, %v922
    %v1271 = vpack.c.b16 %v927, %v923
    %v1272 = vpack.c.b16 %v928, %v924
    %v1273 = vpack.c.b16 %v933, %v929
    %v1274 = vpack.c.b16 %v934, %v930
    %v1275 = vpack.c.b16 %v935, %v931
    %v1276 = vpack.c.b16 %v936, %v932
    %v1277 = vpack.c.b16 %v941, %v937
    %v1278 = vpack.c.b16 %v942, %v938
    %v1279 = vpack.c.b16 %v943, %v939
    %v1280 = vpack.c.b16 %v944, %v940
    %v1281 = vpack.c.b16 %v949, %v945
    %v1282 = vpack.c.b16 %v950, %v946
    %v1283 = vpack.c.b16 %v951, %v947
    %v1284 = vpack.c.b16 %v952, %v948
    %v1285 = vpack.c.b16 %v957, %v953
    %v1286 = vpack.c.b16 %v958, %v954
    %v1287 = vpack.c.b16 %v959, %v955
    %v1288 = vpack.c.b16 %v960, %v956
    %v1289 = vpack.c.b16 %v965, %v961
    %v1290 = vpack.c.b16 %v966, %v962
    %v1291 = vpack.c.b16 %v967, %v963
    %v1292 = vpack.c.b16 %v968, %v964
    %v1293 = vpack.c.b16 %v973, %v969
    %v1294 = vpack.c.b16 %v974, %v970
    %v1295 = vpack.c.b16 %v975, %v971
    %v1296 = vpack.c.b16 %v976, %v972
    %v1297 = vpack.c.b16 %v981, %v977
    %v1298 = vpack.c.b16 %v982, %v978
    %v1299 = vpack.c.b16 %v983, %v979
    %v1300 = vpack.c.b16 %v984, %v980
    %v1301 = vpack.c.b16 %v989, %v985
    %v1302 = vpack.c.b16 %v990, %v986
    %v1303 = vpack.c.b16 %v991, %v987
    %v1304 = vpack.c.b16 %v992, %v988
    %v1305 = vpack.c.b16 %v997, %v993
    %v1306 = vpack.c.b16 %v998, %v994
    %v1307 = vpack.c.b16 %v999, %v995
    %v1308 = vpack.c.b16 %v1000, %v996
    %v1309 = vpack.c.b16 %v1005, %v1001
    %v1310 = vpack.c.b16 %v1006, %v1002
    %v1311 = vpack.c.b16 %v1007, %v1003
    %v1312 = vpack.c.b16 %v1008, %v1004
    %v1313 = vpack.c.b16 %v1013, %v1009
    %v1314 = vpack.c.b16 %v1014, %v1010
    %v1315 = vpack.c.b16 %v1015, %v1011
    %v1316 = vpack.c.b16 %v1016, %v1012
    %v1317 = vpack.c.b16 %v1021, %v1017
    %v1318 = vpack.c.b16 %v1022, %v1018
    %v1319 = vpack.c.b16 %v1023, %v1019
    %v1320 = vpack.c.b16 %v1024, %v1020
    %v1321 = vpack.c.b16 %v1029, %v1025
    %v1322 = vpack.c.b16 %v1030, %v1026
    %v1323 = vpack.c.b16 %v1031, %v1027
    %v1324 = vpack.c.b16 %v1032, %v1028
    %v1325 = vpack.c.b16 %v1037, %v1033
    %v1326 = vpack.c.b16 %v1038, %v1034
    %v1327 = vpack.c.b16 %v1039, %v1035
    %v1328 = vpack.c.b16 %v1040, %v1036
    %v1329 = vpack.c.b16 %v1045, %v1041
    %v1330 = vpack.c.b16 %v1046, %v1042
    %v1331 = vpack.c.b16 %v1047, %v1043
    %v1332 = vpack.c.b16 %v1048, %v1044
    %v1333 = vpack.c.b16 %v1053, %v1049
    %v1334 = vpack.c.b16 %v1054, %v1050
    %v1335 = vpack.c.b16 %v1055, %v1051
    %v1336 = vpack.c.b16 %v1056, %v1052
    %v1337 = vpack.c.b16 %v1061, %v1057
    %v1338 = vpack.c.b16 %v1062, %v1058
    %v1339 = vpack.c.b16 %v1063, %v1059
    %v1340 = vpack.c.b16 %v1064, %v1060
    %v1341 = vpack.c.b16 %v1069, %v1065
    %v1342 = vpack.c.b16 %v1070, %v1066
    %v1343 = vpack.c.b16 %v1071, %v1067
    %v1344 = vpack.c.b16 %v1072, %v1068
    %v1345 = vpack.c.b16 %v1077, %v1073
    %v1346 = vpack.c.b16 %v1078, %v1074
    %v1347 = vpack.c.b16 %v1079, %v1075
    %v1348 = vpack.c.b16 %v1080, %v1076
    %v1349 = vpack.c.b16 %v1085, %v1081
    %v1350 = vpack.c.b16 %v1086, %v1082
    %v1351 = vpack.c.b16 %v1087, %v1083
    %v1352 = vpack.c.b16 %v1088, %v1084
    %v1353 = vpack.c.b16 %v1093, %v1089
    %v1354 = vpack.c.b16 %v1094, %v1090
    %v1355 = vpack.c.b16 %v1095, %v1091
    %v1356 = vpack.c.b16 %v1096, %v1092
    %v1357 = vpack.c.b16 %v1101, %v1097
    %v1358 = vpack.c.b16 %v1102, %v1098
    %v1359 = vpack.c.b16 %v1103, %v1099
    %v1360 = vpack.c.b16 %v1104, %v1100
    %v1361 = vpack.c.b16 %v1109, %v1105
    %v1362 = vpack.c.b16 %v1110, %v1106
    %v1363 = vpack.c.b16 %v1111, %v1107
    %v1364 = vpack.c.b16 %v1112, %v1108
    %v1365 = vpack.c.b16 %v1117, %v1113
    %v1366 = vpack.c.b16 %v1118, %v1114
    %v1367 = vpack.c.b16 %v1119, %v1115
    %v1368 = vpack.c.b16 %v1120, %v1116
    %v1369 = vpack.c.b16 %v1125, %v1121
    %v1370 = vpack.c.b16 %v1126, %v1122
    %v1371 = vpack.c.b16 %v1127, %v1123
    %v1372 = vpack.c.b16 %v1128, %v1124
    %v1373 = vpack.c.b16 %v1133, %v1129
    %v1374 = vpack.c.b16 %v1134, %v1130
    %v1375 = vpack.c.b16 %v1135, %v1131
    %v1376 = vpack.c.b16 %v1136, %v1132
    %v1377 = vpack.c.b16 %v1141, %v1137
    %v1378 = vpack.c.b16 %v1142, %v1138
    %v1379 = vpack.c.b16 %v1143, %v1139
    %v1380 = vpack.c.b16 %v1144, %v1140
    %v1381 = vpack.c.b16 %v1149, %v1145
    %v1382 = vpack.c.b16 %v1150, %v1146
    %v1383 = vpack.c.b16 %v1151, %v1147
    %v1384 = vpack.c.b16 %v1152, %v1148
    %v1385 = vpack.c.b16 %v1157, %v1153
    %v1386 = vpack.c.b16 %v1158, %v1154
    %v1387 = vpack.c.b16 %v1159, %v1155
    %v1388 = vpack.c.b16 %v1160, %v1156
    %v1389 = vpack.c.b16 %v1165, %v1161
    %v1390 = vpack.c.b16 %v1166, %v1162
    %v1391 = vpack.c.b16 %v1167, %v1163
    %v1392 = vpack.c.b16 %v1168, %v1164
    %1617 = vmatprep.subr.bf16.mxu0 %v1198
    %1618 = vmatpush1.bf16.msra.mxu0 %v1197
    %1619 = vmatprep.subr.bf16.mxu0 %v1194
    %1620 = vmatpush1.bf16.msra.mxu0 %v1193
    %1621 = vmatprep.subr.bf16.mxu0 %v1190
    %1622 = vmatpush1.bf16.msra.mxu0 %v1189
    %1623 = vmatprep.subr.bf16.mxu0 %v1186
    %1624 = vmatpush1.bf16.msra.mxu0 %v1185
    %1625 = vmatprep.subr.bf16.mxu0 %v1182
    %1626 = vmatpush1.bf16.msra.mxu0 %v1181
    %1627 = vmatprep.subr.bf16.mxu0 %v1178
    %1628 = vmatpush1.bf16.msra.mxu0 %v1177
    %1629 = vmatprep.subr.bf16.mxu0 %v1174
    %1630 = vmatpush1.bf16.msra.mxu0 %v1173
    %1631 = vmatprep.subr.bf16.mxu0 %v1170
    %1632 = vmatpush1.bf16.msra.mxu0 %v1169
    %1633 = vmatprep.subr.bf16.mxu0 %v1230
    %1634 = vmatpush2.bf16.msra.mxu0 %v1229
    %1635 = vmatprep.subr.bf16.mxu0 %v1226
    %1636 = vmatpush2.bf16.msra.mxu0 %v1225
    %1637 = vmatprep.subr.bf16.mxu0 %v1222
    %1638 = vmatpush2.bf16.msra.mxu0 %v1221
    %1639 = vmatprep.subr.bf16.mxu0 %v1218
    %1640 = vmatpush2.bf16.msra.mxu0 %v1217
    %1641 = vmatprep.subr.bf16.mxu0 %v1214
    %1642 = vmatpush2.bf16.msra.mxu0 %v1213
    %1643 = vmatprep.subr.bf16.mxu0 %v1210
    %1644 = vmatpush2.bf16.msra.mxu0 %v1209
    %1645 = vmatprep.subr.bf16.mxu0 %v1206
    %1646 = vmatpush2.bf16.msra.mxu0 %v1205
    %1647 = vmatprep.subr.bf16.mxu0 %v1202
    %1648 = vmatpush2.bf16.msra.mxu0 %v1201
    %1649 = vmatprep.mubr.bf16.mxu0 %v442
    %1650 = vmatmul.mubr.bf16.gmra.mxu0 %v441
    %v1651 = vpop.f32.mrf.mxu0
    %v1652 = vadd.f32 %v336, %v1651
    %v1653 = vpop.f32.mrf.mxu0
    %v1654 = vadd.f32 %v340, %v1653
    %v1655 = vpop.f32.mrf.mxu0
    %v1656 = vadd.f32 %v336, %v1655
    %v1657 = vpop.f32.mrf.mxu0
    %v1658 = vadd.f32 %v340, %v1657
    %1659 = vmatprep.mubr.bf16.mxu0 %v449
    %1660 = vmatmul.mubr.bf16.gmra.mxu0 %v448
    %v1661 = vpop.f32.mrf.mxu0
    %v1662 = vadd.f32 %v336, %v1661
    %v1663 = vpop.f32.mrf.mxu0
    %v1664 = vadd.f32 %v340, %v1663
    %v1665 = vpop.f32.mrf.mxu0
    %v1666 = vadd.f32 %v336, %v1665
    %v1667 = vpop.f32.mrf.mxu0
    %v1668 = vadd.f32 %v340, %v1667
    %1669 = vmatprep.mubr.bf16.mxu0 %v456
    %1670 = vmatmul.mubr.bf16.gmra.mxu0 %v455
    %v1671 = vpop.f32.mrf.mxu0
    %v1672 = vadd.f32 %v336, %v1671
    %v1673 = vpop.f32.mrf.mxu0
    %v1674 = vadd.f32 %v340, %v1673
    %v1675 = vpop.f32.mrf.mxu0
    %v1676 = vadd.f32 %v336, %v1675
    %v1677 = vpop.f32.mrf.mxu0
    %v1678 = vadd.f32 %v340, %v1677
    %1679 = vmatprep.mubr.bf16.mxu0 %v463
    %1680 = vmatmul.mubr.bf16.gmra.mxu0 %v462
    %v1681 = vpop.f32.mrf.mxu0
    %v1682 = vadd.f32 %v336, %v1681
    %v1683 = vpop.f32.mrf.mxu0
    %v1684 = vadd.f32 %v340, %v1683
    %v1685 = vpop.f32.mrf.mxu0
    %v1686 = vadd.f32 %v336, %v1685
    %v1687 = vpop.f32.mrf.mxu0
    %v1688 = vadd.f32 %v340, %v1687
    %1689 = vdwg.mxu0
    %1690 = vmatprep.subr.bf16.mxu0 %v1262
    %1691 = vmatpush1.bf16.msra.mxu0 %v1261
    %1692 = vmatprep.subr.bf16.mxu0 %v1258
    %1693 = vmatpush1.bf16.msra.mxu0 %v1257
    %1694 = vmatprep.subr.bf16.mxu0 %v1254
    %1695 = vmatpush1.bf16.msra.mxu0 %v1253
    %1696 = vmatprep.subr.bf16.mxu0 %v1250
    %1697 = vmatpush1.bf16.msra.mxu0 %v1249
    %1698 = vmatprep.subr.bf16.mxu0 %v1246
    %1699 = vmatpush1.bf16.msra.mxu0 %v1245
    %1700 = vmatprep.subr.bf16.mxu0 %v1242
    %1701 = vmatpush1.bf16.msra.mxu0 %v1241
    %1702 = vmatprep.subr.bf16.mxu0 %v1238
    %1703 = vmatpush1.bf16.msra.mxu0 %v1237
    %1704 = vmatprep.subr.bf16.mxu0 %v1234
    %1705 = vmatpush1.bf16.msra.mxu0 %v1233
    %1706 = vmatprep.subr.bf16.mxu0 %v1294
    %1707 = vmatpush2.bf16.msra.mxu0 %v1293
    %1708 = vmatprep.subr.bf16.mxu0 %v1290
    %1709 = vmatpush2.bf16.msra.mxu0 %v1289
    %1710 = vmatprep.subr.bf16.mxu0 %v1286
    %1711 = vmatpush2.bf16.msra.mxu0 %v1285
    %1712 = vmatprep.subr.bf16.mxu0 %v1282
    %1713 = vmatpush2.bf16.msra.mxu0 %v1281
    %1714 = vmatprep.subr.bf16.mxu0 %v1278
    %1715 = vmatpush2.bf16.msra.mxu0 %v1277
    %1716 = vmatprep.subr.bf16.mxu0 %v1274
    %1717 = vmatpush2.bf16.msra.mxu0 %v1273
    %1718 = vmatprep.subr.bf16.mxu0 %v1270
    %1719 = vmatpush2.bf16.msra.mxu0 %v1269
    %1720 = vmatprep.subr.bf16.mxu0 %v1266
    %1721 = vmatpush2.bf16.msra.mxu0 %v1265
    %1722 = vmatprep.mubr.bf16.mxu0 %v444
    %1723 = vmatmul.mubr.bf16.gmra.mxu0 %v443
    %v1724 = vpop.f32.mrf.mxu0
    %v1725 = vadd.f32 %v1652, %v1724
    %v1726 = vpop.f32.mrf.mxu0
    %v1727 = vadd.f32 %v1654, %v1726
    %v1728 = vpop.f32.mrf.mxu0
    %v1729 = vadd.f32 %v1656, %v1728
    %v1730 = vpop.f32.mrf.mxu0
    %v1731 = vadd.f32 %v1658, %v1730
    %1732 = vmatprep.mubr.bf16.mxu0 %v451
    %1733 = vmatmul.mubr.bf16.gmra.mxu0 %v450
    %v1734 = vpop.f32.mrf.mxu0
    %v1735 = vadd.f32 %v1662, %v1734
    %v1736 = vpop.f32.mrf.mxu0
    %v1737 = vadd.f32 %v1664, %v1736
    %v1738 = vpop.f32.mrf.mxu0
    %v1739 = vadd.f32 %v1666, %v1738
    %v1740 = vpop.f32.mrf.mxu0
    %v1741 = vadd.f32 %v1668, %v1740
    %1742 = vmatprep.mubr.bf16.mxu0 %v458
    %1743 = vmatmul.mubr.bf16.gmra.mxu0 %v457
    %v1744 = vpop.f32.mrf.mxu0
    %v1745 = vadd.f32 %v1672, %v1744
    %v1746 = vpop.f32.mrf.mxu0
    %v1747 = vadd.f32 %v1674, %v1746
    %v1748 = vpop.f32.mrf.mxu0
    %v1749 = vadd.f32 %v1676, %v1748
    %v1750 = vpop.f32.mrf.mxu0
    %v1751 = vadd.f32 %v1678, %v1750
    %1752 = vmatprep.mubr.bf16.mxu0 %v465
    %1753 = vmatmul.mubr.bf16.gmra.mxu0 %v464
    %v1754 = vpop.f32.mrf.mxu0
    %v1755 = vadd.f32 %v1682, %v1754
    %v1756 = vpop.f32.mrf.mxu0
    %v1757 = vadd.f32 %v1684, %v1756
    %v1758 = vpop.f32.mrf.mxu0
    %v1759 = vadd.f32 %v1686, %v1758
    %v1760 = vpop.f32.mrf.mxu0
    %v1761 = vadd.f32 %v1688, %v1760
    %1762 = vdwg.mxu0
    %1763 = vmatprep.subr.bf16.mxu0 %v1326
    %1764 = vmatpush1.bf16.msra.mxu0 %v1325
    %1765 = vmatprep.subr.bf16.mxu0 %v1322
    %1766 = vmatpush1.bf16.msra.mxu0 %v1321
    %1767 = vmatprep.subr.bf16.mxu0 %v1318
    %1768 = vmatpush1.bf16.msra.mxu0 %v1317
    %1769 = vmatprep.subr.bf16.mxu0 %v1314
    %1770 = vmatpush1.bf16.msra.mxu0 %v1313
    %1771 = vmatprep.subr.bf16.mxu0 %v1310
    %1772 = vmatpush1.bf16.msra.mxu0 %v1309
    %1773 = vmatprep.subr.bf16.mxu0 %v1306
    %1774 = vmatpush1.bf16.msra.mxu0 %v1305
    %1775 = vmatprep.subr.bf16.mxu0 %v1302
    %1776 = vmatpush1.bf16.msra.mxu0 %v1301
    %1777 = vmatprep.subr.bf16.mxu0 %v1298
    %1778 = vmatpush1.bf16.msra.mxu0 %v1297
    %1779 = vmatprep.subr.bf16.mxu0 %v1358
    %1780 = vmatpush2.bf16.msra.mxu0 %v1357
    %1781 = vmatprep.subr.bf16.mxu0 %v1354
    %1782 = vmatpush2.bf16.msra.mxu0 %v1353
    %1783 = vmatprep.subr.bf16.mxu0 %v1350
    %1784 = vmatpush2.bf16.msra.mxu0 %v1349
    %1785 = vmatprep.subr.bf16.mxu0 %v1346
    %1786 = vmatpush2.bf16.msra.mxu0 %v1345
    %1787 = vmatprep.subr.bf16.mxu0 %v1342
    %1788 = vmatpush2.bf16.msra.mxu0 %v1341
    %1789 = vmatprep.subr.bf16.mxu0 %v1338
    %1790 = vmatpush2.bf16.msra.mxu0 %v1337
    %1791 = vmatprep.subr.bf16.mxu0 %v1334
    %1792 = vmatpush2.bf16.msra.mxu0 %v1333
    %1793 = vmatprep.subr.bf16.mxu0 %v1330
    %1794 = vmatpush2.bf16.msra.mxu0 %v1329
    %1795 = vmatprep.mubr.bf16.mxu0 %v446
    %1796 = vmatmul.mubr.bf16.gmra.mxu0 %v445
    %v1797 = vpop.f32.mrf.mxu0
    %v1798 = vadd.f32 %v1725, %v1797
    %v1799 = vpop.f32.mrf.mxu0
    %v1800 = vadd.f32 %v1727, %v1799
    %v1801 = vpop.f32.mrf.mxu0
    %v1802 = vadd.f32 %v1729, %v1801
    %v1803 = vpop.f32.mrf.mxu0
    %v1804 = vadd.f32 %v1731, %v1803
    %1805 = vmatprep.mubr.bf16.mxu0 %v453
    %1806 = vmatmul.mubr.bf16.gmra.mxu0 %v452
    %v1807 = vpop.f32.mrf.mxu0
    %v1808 = vadd.f32 %v1735, %v1807
    %v1809 = vpop.f32.mrf.mxu0
    %v1810 = vadd.f32 %v1737, %v1809
    %v1811 = vpop.f32.mrf.mxu0
    %v1812 = vadd.f32 %v1739, %v1811
    %v1813 = vpop.f32.mrf.mxu0
    %v1814 = vadd.f32 %v1741, %v1813
    %1815 = vmatprep.mubr.bf16.mxu0 %v460
    %1816 = vmatmul.mubr.bf16.gmra.mxu0 %v459
    %v1817 = vpop.f32.mrf.mxu0
    %v1818 = vadd.f32 %v1745, %v1817
    %v1819 = vpop.f32.mrf.mxu0
    %v1820 = vadd.f32 %v1747, %v1819
    %v1821 = vpop.f32.mrf.mxu0
    %v1822 = vadd.f32 %v1749, %v1821
    %v1823 = vpop.f32.mrf.mxu0
    %v1824 = vadd.f32 %v1751, %v1823
    %1825 = vmatprep.mubr.bf16.mxu0 %v467
    %1826 = vmatmul.mubr.bf16.gmra.mxu0 %v466
    %v1827 = vpop.f32.mrf.mxu0
    %v1828 = vadd.f32 %v1755, %v1827
    %v1829 = vpop.f32.mrf.mxu0
    %v1830 = vadd.f32 %v1757, %v1829
    %v1831 = vpop.f32.mrf.mxu0
    %v1832 = vadd.f32 %v1759, %v1831
    %v1833 = vpop.f32.mrf.mxu0
    %v1834 = vadd.f32 %v1761, %v1833
    %1835 = vdwg.mxu0
    %1836 = vmatprep.subr.bf16.mxu0 %v1390
    %1837 = vmatpush1.bf16.msra.mxu0 %v1389
    %1838 = vmatprep.subr.bf16.mxu0 %v1386
    %1839 = vmatpush1.bf16.msra.mxu0 %v1385
    %1840 = vmatprep.subr.bf16.mxu0 %v1382
    %1841 = vmatpush1.bf16.msra.mxu0 %v1381
    %1842 = vmatprep.subr.bf16.mxu0 %v1378
    %1843 = vmatpush1.bf16.msra.mxu0 %v1377
    %1844 = vmatprep.subr.bf16.mxu0 %v1374
    %1845 = vmatpush1.bf16.msra.mxu0 %v1373
    %1846 = vmatprep.subr.bf16.mxu0 %v1370
    %1847 = vmatpush1.bf16.msra.mxu0 %v1369
    %1848 = vmatprep.subr.bf16.mxu0 %v1366
    %1849 = vmatpush1.bf16.msra.mxu0 %v1365
    %1850 = vmatprep.subr.bf16.mxu0 %v1362
    %1851 = vmatpush1.bf16.msra.mxu0 %v1361
    %1852 = vmatprep.subr.bf16.mxu0 0
    %1853 = vmatpush2.bf16.msra.mxu0 0
    %1854 = vmatprep.subr.bf16.mxu0 0
    %1855 = vmatpush2.bf16.msra.mxu0 0
    %1856 = vmatprep.subr.bf16.mxu0 0
    %1857 = vmatpush2.bf16.msra.mxu0 0
    %1858 = vmatprep.subr.bf16.mxu0 0
    %1859 = vmatpush2.bf16.msra.mxu0 0
    %1860 = vmatprep.subr.bf16.mxu0 0
    %1861 = vmatpush2.bf16.msra.mxu0 0
    %1862 = vmatprep.subr.bf16.mxu0 0
    %1863 = vmatpush2.bf16.msra.mxu0 0
    %1864 = vmatprep.subr.bf16.mxu0 0
    %1865 = vmatpush2.bf16.msra.mxu0 0
    %1866 = vmatprep.subr.bf16.mxu0 0
    %1867 = vmatpush2.bf16.msra.mxu0 0
    %1868 = vmatprep.mubr.bf16.mxu0 0
    %1869 = vmatmul.mubr.bf16.gmra.mxu0 %v447
    %v1870 = vpop.f32.mrf.mxu0
    %v1871 = vadd.f32 %v1798, %v1870
    %v1872 = vpop.f32.mrf.mxu0
    %v1873 = vadd.f32 %v1800, %v1872
    %v1874 = vpop.f32.mrf.mxu0
    %v1875 = vadd.f32 %v1802, %v1874
    %v1876 = vpop.f32.mrf.mxu0
    %v1877 = vadd.f32 %v1804, %v1876
    %1878 = vmatprep.mubr.bf16.mxu0 0
    %1879 = vmatmul.mubr.bf16.gmra.mxu0 %v454
    %v1880 = vpop.f32.mrf.mxu0
    %v1881 = vadd.f32 %v1808, %v1880
    %v1882 = vpop.f32.mrf.mxu0
    %v1883 = vadd.f32 %v1810, %v1882
    %v1884 = vpop.f32.mrf.mxu0
    %v1885 = vadd.f32 %v1812, %v1884
    %v1886 = vpop.f32.mrf.mxu0
    %v1887 = vadd.f32 %v1814, %v1886
    %1888 = vmatprep.mubr.bf16.mxu0 0
    %1889 = vmatmul.mubr.bf16.gmra.mxu0 %v461
    %v1890 = vpop.f32.mrf.mxu0
    %v1891 = vadd.f32 %v1818, %v1890
    %v1892 = vpop.f32.mrf.mxu0
    %v1893 = vadd.f32 %v1820, %v1892
    %v1894 = vpop.f32.mrf.mxu0
    %v1895 = vadd.f32 %v1822, %v1894
    %v1896 = vpop.f32.mrf.mxu0
    %v1897 = vadd.f32 %v1824, %v1896
    %1898 = vmatprep.mubr.bf16.mxu0 0
    %1899 = vmatmul.mubr.bf16.gmra.mxu0 %v468
    %v1900 = vpop.f32.mrf.mxu0
    %v1901 = vadd.f32 %v1828, %v1900
    %v1902 = vpop.f32.mrf.mxu0
    %v1903 = vadd.f32 %v1830, %v1902
    %v1904 = vpop.f32.mrf.mxu0
    %v1905 = vadd.f32 %v1832, %v1904
    %v1906 = vpop.f32.mrf.mxu0
    %v1907 = vadd.f32 %v1834, %v1906
    %1908 = vdwg.mxu0
    %1909 = vmatprep.subr.bf16.mxu0 %v1200
    %1910 = vmatpush1.bf16.msra.mxu0 %v1199
    %1911 = vmatprep.subr.bf16.mxu0 %v1196
    %1912 = vmatpush1.bf16.msra.mxu0 %v1195
    %1913 = vmatprep.subr.bf16.mxu0 %v1192
    %1914 = vmatpush1.bf16.msra.mxu0 %v1191
    %1915 = vmatprep.subr.bf16.mxu0 %v1188
    %1916 = vmatpush1.bf16.msra.mxu0 %v1187
    %1917 = vmatprep.subr.bf16.mxu0 %v1184
    %1918 = vmatpush1.bf16.msra.mxu0 %v1183
    %1919 = vmatprep.subr.bf16.mxu0 %v1180
    %1920 = vmatpush1.bf16.msra.mxu0 %v1179
    %1921 = vmatprep.subr.bf16.mxu0 %v1176
    %1922 = vmatpush1.bf16.msra.mxu0 %v1175
    %1923 = vmatprep.subr.bf16.mxu0 %v1172
    %1924 = vmatpush1.bf16.msra.mxu0 %v1171
    %1925 = vmatprep.subr.bf16.mxu0 %v1232
    %1926 = vmatpush2.bf16.msra.mxu0 %v1231
    %1927 = vmatprep.subr.bf16.mxu0 %v1228
    %1928 = vmatpush2.bf16.msra.mxu0 %v1227
    %1929 = vmatprep.subr.bf16.mxu0 %v1224
    %1930 = vmatpush2.bf16.msra.mxu0 %v1223
    %1931 = vmatprep.subr.bf16.mxu0 %v1220
    %1932 = vmatpush2.bf16.msra.mxu0 %v1219
    %1933 = vmatprep.subr.bf16.mxu0 %v1216
    %1934 = vmatpush2.bf16.msra.mxu0 %v1215
    %1935 = vmatprep.subr.bf16.mxu0 %v1212
    %1936 = vmatpush2.bf16.msra.mxu0 %v1211
    %1937 = vmatprep.subr.bf16.mxu0 %v1208
    %1938 = vmatpush2.bf16.msra.mxu0 %v1207
    %1939 = vmatprep.subr.bf16.mxu0 %v1204
    %1940 = vmatpush2.bf16.msra.mxu0 %v1203
    %1941 = vmatprep.mubr.bf16.mxu0 %v442
    %1942 = vmatmul.mubr.bf16.gmra.mxu0 %v441
    %v1943 = vpop.f32.mrf.mxu0
    %v1944 = vadd.f32 %v344, %v1943
    %v1945 = vpop.f32.mrf.mxu0
    %v1946 = vadd.f32 %v348, %v1945
    %v1947 = vpop.f32.mrf.mxu0
    %v1948 = vadd.f32 %v344, %v1947
    %v1949 = vpop.f32.mrf.mxu0
    %v1950 = vadd.f32 %v348, %v1949
    %1951 = vmatprep.mubr.bf16.mxu0 %v449
    %1952 = vmatmul.mubr.bf16.gmra.mxu0 %v448
    %v1953 = vpop.f32.mrf.mxu0
    %v1954 = vadd.f32 %v344, %v1953
    %v1955 = vpop.f32.mrf.mxu0
    %v1956 = vadd.f32 %v348, %v1955
    %v1957 = vpop.f32.mrf.mxu0
    %v1958 = vadd.f32 %v344, %v1957
    %v1959 = vpop.f32.mrf.mxu0
    %v1960 = vadd.f32 %v348, %v1959
    %1961 = vmatprep.mubr.bf16.mxu0 %v456
    %1962 = vmatmul.mubr.bf16.gmra.mxu0 %v455
    %v1963 = vpop.f32.mrf.mxu0
    %v1964 = vadd.f32 %v344, %v1963
    %v1965 = vpop.f32.mrf.mxu0
    %v1966 = vadd.f32 %v348, %v1965
    %v1967 = vpop.f32.mrf.mxu0
    %v1968 = vadd.f32 %v344, %v1967
    %v1969 = vpop.f32.mrf.mxu0
    %v1970 = vadd.f32 %v348, %v1969
    %1971 = vmatprep.mubr.bf16.mxu0 %v463
    %1972 = vmatmul.mubr.bf16.gmra.mxu0 %v462
    %v1973 = vpop.f32.mrf.mxu0
    %v1974 = vadd.f32 %v344, %v1973
    %v1975 = vpop.f32.mrf.mxu0
    %v1976 = vadd.f32 %v348, %v1975
    %v1977 = vpop.f32.mrf.mxu0
    %v1978 = vadd.f32 %v344, %v1977
    %v1979 = vpop.f32.mrf.mxu0
    %v1980 = vadd.f32 %v348, %v1979
    %1981 = vdwg.mxu0
    %1982 = vmatprep.subr.bf16.mxu0 %v1264
    %1983 = vmatpush1.bf16.msra.mxu0 %v1263
    %1984 = vmatprep.subr.bf16.mxu0 %v1260
    %1985 = vmatpush1.bf16.msra.mxu0 %v1259
    %1986 = vmatprep.subr.bf16.mxu0 %v1256
    %1987 = vmatpush1.bf16.msra.mxu0 %v1255
    %1988 = vmatprep.subr.bf16.mxu0 %v1252
    %1989 = vmatpush1.bf16.msra.mxu0 %v1251
    %1990 = vmatprep.subr.bf16.mxu0 %v1248
    %1991 = vmatpush1.bf16.msra.mxu0 %v1247
    %1992 = vmatprep.subr.bf16.mxu0 %v1244
    %1993 = vmatpush1.bf16.msra.mxu0 %v1243
    %1994 = vmatprep.subr.bf16.mxu0 %v1240
    %1995 = vmatpush1.bf16.msra.mxu0 %v1239
    %1996 = vmatprep.subr.bf16.mxu0 %v1236
    %1997 = vmatpush1.bf16.msra.mxu0 %v1235
    %1998 = vmatprep.subr.bf16.mxu0 %v1296
    %1999 = vmatpush2.bf16.msra.mxu0 %v1295
    %2000 = vmatprep.subr.bf16.mxu0 %v1292
    %2001 = vmatpush2.bf16.msra.mxu0 %v1291
    %2002 = vmatprep.subr.bf16.mxu0 %v1288
    %2003 = vmatpush2.bf16.msra.mxu0 %v1287
    %2004 = vmatprep.subr.bf16.mxu0 %v1284
    %2005 = vmatpush2.bf16.msra.mxu0 %v1283
    %2006 = vmatprep.subr.bf16.mxu0 %v1280
    %2007 = vmatpush2.bf16.msra.mxu0 %v1279
    %2008 = vmatprep.subr.bf16.mxu0 %v1276
    %2009 = vmatpush2.bf16.msra.mxu0 %v1275
    %2010 = vmatprep.subr.bf16.mxu0 %v1272
    %2011 = vmatpush2.bf16.msra.mxu0 %v1271
    %2012 = vmatprep.subr.bf16.mxu0 %v1268
    %2013 = vmatpush2.bf16.msra.mxu0 %v1267
    %2014 = vmatprep.mubr.bf16.mxu0 %v444
    %2015 = vmatmul.mubr.bf16.gmra.mxu0 %v443
    %v2016 = vpop.f32.mrf.mxu0
    %v2017 = vadd.f32 %v1944, %v2016
    %v2018 = vpop.f32.mrf.mxu0
    %v2019 = vadd.f32 %v1946, %v2018
    %v2020 = vpop.f32.mrf.mxu0
    %v2021 = vadd.f32 %v1948, %v2020
    %v2022 = vpop.f32.mrf.mxu0
    %v2023 = vadd.f32 %v1950, %v2022
    %2024 = vmatprep.mubr.bf16.mxu0 %v451
    %2025 = vmatmul.mubr.bf16.gmra.mxu0 %v450
    %v2026 = vpop.f32.mrf.mxu0
    %v2027 = vadd.f32 %v1954, %v2026
    %v2028 = vpop.f32.mrf.mxu0
    %v2029 = vadd.f32 %v1956, %v2028
    %v2030 = vpop.f32.mrf.mxu0
    %v2031 = vadd.f32 %v1958, %v2030
    %v2032 = vpop.f32.mrf.mxu0
    %v2033 = vadd.f32 %v1960, %v2032
    %2034 = vmatprep.mubr.bf16.mxu0 %v458
    %2035 = vmatmul.mubr.bf16.gmra.mxu0 %v457
    %v2036 = vpop.f32.mrf.mxu0
    %v2037 = vadd.f32 %v1964, %v2036
    %v2038 = vpop.f32.mrf.mxu0
    %v2039 = vadd.f32 %v1966, %v2038
    %v2040 = vpop.f32.mrf.mxu0
    %v2041 = vadd.f32 %v1968, %v2040
    %v2042 = vpop.f32.mrf.mxu0
    %v2043 = vadd.f32 %v1970, %v2042
    %2044 = vmatprep.mubr.bf16.mxu0 %v465
    %2045 = vmatmul.mubr.bf16.gmra.mxu0 %v464
    %v2046 = vpop.f32.mrf.mxu0
    %v2047 = vadd.f32 %v1974, %v2046
    %v2048 = vpop.f32.mrf.mxu0
    %v2049 = vadd.f32 %v1976, %v2048
    %v2050 = vpop.f32.mrf.mxu0
    %v2051 = vadd.f32 %v1978, %v2050
    %v2052 = vpop.f32.mrf.mxu0
    %v2053 = vadd.f32 %v1980, %v2052
    %2054 = vdwg.mxu0
    %2055 = vmatprep.subr.bf16.mxu0 %v1328
    %2056 = vmatpush1.bf16.msra.mxu0 %v1327
    %2057 = vmatprep.subr.bf16.mxu0 %v1324
    %2058 = vmatpush1.bf16.msra.mxu0 %v1323
    %2059 = vmatprep.subr.bf16.mxu0 %v1320
    %2060 = vmatpush1.bf16.msra.mxu0 %v1319
    %2061 = vmatprep.subr.bf16.mxu0 %v1316
    %2062 = vmatpush1.bf16.msra.mxu0 %v1315
    %2063 = vmatprep.subr.bf16.mxu0 %v1312
    %2064 = vmatpush1.bf16.msra.mxu0 %v1311
    %2065 = vmatprep.subr.bf16.mxu0 %v1308
    %2066 = vmatpush1.bf16.msra.mxu0 %v1307
    %2067 = vmatprep.subr.bf16.mxu0 %v1304
    %2068 = vmatpush1.bf16.msra.mxu0 %v1303
    %2069 = vmatprep.subr.bf16.mxu0 %v1300
    %2070 = vmatpush1.bf16.msra.mxu0 %v1299
    %2071 = vmatprep.subr.bf16.mxu0 %v1360
    %2072 = vmatpush2.bf16.msra.mxu0 %v1359
    %2073 = vmatprep.subr.bf16.mxu0 %v1356
    %2074 = vmatpush2.bf16.msra.mxu0 %v1355
    %2075 = vmatprep.subr.bf16.mxu0 %v1352
    %2076 = vmatpush2.bf16.msra.mxu0 %v1351
    %2077 = vmatprep.subr.bf16.mxu0 %v1348
    %2078 = vmatpush2.bf16.msra.mxu0 %v1347
    %2079 = vmatprep.subr.bf16.mxu0 %v1344
    %2080 = vmatpush2.bf16.msra.mxu0 %v1343
    %2081 = vmatprep.subr.bf16.mxu0 %v1340
    %2082 = vmatpush2.bf16.msra.mxu0 %v1339
    %2083 = vmatprep.subr.bf16.mxu0 %v1336
    %2084 = vmatpush2.bf16.msra.mxu0 %v1335
    %2085 = vmatprep.subr.bf16.mxu0 %v1332
    %2086 = vmatpush2.bf16.msra.mxu0 %v1331
    %2087 = vmatprep.mubr.bf16.mxu0 %v446
    %2088 = vmatmul.mubr.bf16.gmra.mxu0 %v445
    %v2089 = vpop.f32.mrf.mxu0
    %v2090 = vadd.f32 %v2017, %v2089
    %v2091 = vpop.f32.mrf.mxu0
    %v2092 = vadd.f32 %v2019, %v2091
    %v2093 = vpop.f32.mrf.mxu0
    %v2094 = vadd.f32 %v2021, %v2093
    %v2095 = vpop.f32.mrf.mxu0
    %v2096 = vadd.f32 %v2023, %v2095
    %2097 = vmatprep.mubr.bf16.mxu0 %v453
    %2098 = vmatmul.mubr.bf16.gmra.mxu0 %v452
    %v2099 = vpop.f32.mrf.mxu0
    %v2100 = vadd.f32 %v2027, %v2099
    %v2101 = vpop.f32.mrf.mxu0
    %v2102 = vadd.f32 %v2029, %v2101
    %v2103 = vpop.f32.mrf.mxu0
    %v2104 = vadd.f32 %v2031, %v2103
    %v2105 = vpop.f32.mrf.mxu0
    %v2106 = vadd.f32 %v2033, %v2105
    %2107 = vmatprep.mubr.bf16.mxu0 %v460
    %2108 = vmatmul.mubr.bf16.gmra.mxu0 %v459
    %v2109 = vpop.f32.mrf.mxu0
    %v2110 = vadd.f32 %v2037, %v2109
    %v2111 = vpop.f32.mrf.mxu0
    %v2112 = vadd.f32 %v2039, %v2111
    %v2113 = vpop.f32.mrf.mxu0
    %v2114 = vadd.f32 %v2041, %v2113
    %v2115 = vpop.f32.mrf.mxu0
    %v2116 = vadd.f32 %v2043, %v2115
    %2117 = vmatprep.mubr.bf16.mxu0 %v467
    %2118 = vmatmul.mubr.bf16.gmra.mxu0 %v466
    %v2119 = vpop.f32.mrf.mxu0
    %v2120 = vadd.f32 %v2047, %v2119
    %v2121 = vpop.f32.mrf.mxu0
    %v2122 = vadd.f32 %v2049, %v2121
    %v2123 = vpop.f32.mrf.mxu0
    %v2124 = vadd.f32 %v2051, %v2123
    %v2125 = vpop.f32.mrf.mxu0
    %v2126 = vadd.f32 %v2053, %v2125
    %2127 = vdwg.mxu0
    %2128 = vmatprep.subr.bf16.mxu0 %v1392
    %2129 = vmatpush1.bf16.msra.mxu0 %v1391
    %2130 = vmatprep.subr.bf16.mxu0 %v1388
    %2131 = vmatpush1.bf16.msra.mxu0 %v1387
    %2132 = vmatprep.subr.bf16.mxu0 %v1384
    %2133 = vmatpush1.bf16.msra.mxu0 %v1383
    %2134 = vmatprep.subr.bf16.mxu0 %v1380
    %2135 = vmatpush1.bf16.msra.mxu0 %v1379
    %2136 = vmatprep.subr.bf16.mxu0 %v1376
    %2137 = vmatpush1.bf16.msra.mxu0 %v1375
    %2138 = vmatprep.subr.bf16.mxu0 %v1372
    %2139 = vmatpush1.bf16.msra.mxu0 %v1371
    %2140 = vmatprep.subr.bf16.mxu0 %v1368
    %2141 = vmatpush1.bf16.msra.mxu0 %v1367
    %2142 = vmatprep.subr.bf16.mxu0 %v1364
    %2143 = vmatpush1.bf16.msra.mxu0 %v1363
    %2144 = vmatprep.subr.bf16.mxu0 0
    %2145 = vmatpush2.bf16.msra.mxu0 0
    %2146 = vmatprep.subr.bf16.mxu0 0
    %2147 = vmatpush2.bf16.msra.mxu0 0
    %2148 = vmatprep.subr.bf16.mxu0 0
    %2149 = vmatpush2.bf16.msra.mxu0 0
    %2150 = vmatprep.subr.bf16.mxu0 0
    %2151 = vmatpush2.bf16.msra.mxu0 0
    %2152 = vmatprep.subr.bf16.mxu0 0
    %2153 = vmatpush2.bf16.msra.mxu0 0
    %2154 = vmatprep.subr.bf16.mxu0 0
    %2155 = vmatpush2.bf16.msra.mxu0 0
    %2156 = vmatprep.subr.bf16.mxu0 0
    %2157 = vmatpush2.bf16.msra.mxu0 0
    %2158 = vmatprep.subr.bf16.mxu0 0
    %2159 = vmatpush2.bf16.msra.mxu0 0
    %2160 = vmatprep.mubr.bf16.mxu0 0
    %2161 = vmatmul.mubr.bf16.gmra.mxu0 %v447
    %v2162 = vpop.f32.mrf.mxu0
    %v2163 = vadd.f32 %v2090, %v2162
    %v2164 = vpop.f32.mrf.mxu0
    %v2165 = vadd.f32 %v2092, %v2164
    %v2166 = vpop.f32.mrf.mxu0
    %v2167 = vadd.f32 %v2094, %v2166
    %v2168 = vpop.f32.mrf.mxu0
    %v2169 = vadd.f32 %v2096, %v2168
    %2170 = vmatprep.mubr.bf16.mxu0 0
    %2171 = vmatmul.mubr.bf16.gmra.mxu0 %v454
    %v2172 = vpop.f32.mrf.mxu0
    %v2173 = vadd.f32 %v2100, %v2172
    %v2174 = vpop.f32.mrf.mxu0
    %v2175 = vadd.f32 %v2102, %v2174
    %v2176 = vpop.f32.mrf.mxu0
    %v2177 = vadd.f32 %v2104, %v2176
    %v2178 = vpop.f32.mrf.mxu0
    %v2179 = vadd.f32 %v2106, %v2178
    %2180 = vmatprep.mubr.bf16.mxu0 0
    %2181 = vmatmul.mubr.bf16.gmra.mxu0 %v461
    %v2182 = vpop.f32.mrf.mxu0
    %v2183 = vadd.f32 %v2110, %v2182
    %v2184 = vpop.f32.mrf.mxu0
    %v2185 = vadd.f32 %v2112, %v2184
    %v2186 = vpop.f32.mrf.mxu0
    %v2187 = vadd.f32 %v2114, %v2186
    %v2188 = vpop.f32.mrf.mxu0
    %v2189 = vadd.f32 %v2116, %v2188
    %2190 = vmatprep.mubr.bf16.mxu0 0
    %2191 = vmatmul.mubr.bf16.gmra.mxu0 %v468
    %v2192 = vpop.f32.mrf.mxu0
    %v2193 = vadd.f32 %v2120, %v2192
    %v2194 = vpop.f32.mrf.mxu0
    %v2195 = vadd.f32 %v2122, %v2194
    %v2196 = vpop.f32.mrf.mxu0
    %v2197 = vadd.f32 %v2124, %v2196
    %v2198 = vpop.f32.mrf.mxu0
    %v2199 = vadd.f32 %v2126, %v2198
    %2200 = vdwg.mxu0
    %v2201 = vmax.f32 %v1871, 0.0
    %v2202 = vmax.f32 %v1873, 0.0
    %v2203 = vmax.f32 %v2163, 0.0
    %v2204 = vmax.f32 %v2165, 0.0
    %v2205 = vmax.f32 %v1875, 0.0
    %v2206 = vmax.f32 %v1877, 0.0
    %v2207 = vmax.f32 %v2167, 0.0
    %v2208 = vmax.f32 %v2169, 0.0
    %v2209 = vmax.f32 %v1881, 0.0
    %v2210 = vmax.f32 %v1883, 0.0
    %v2211 = vmax.f32 %v2173, 0.0
    %v2212 = vmax.f32 %v2175, 0.0
    %v2213 = vmax.f32 %v1885, 0.0
    %v2214 = vmax.f32 %v1887, 0.0
    %v2215 = vmax.f32 %v2177, 0.0
    %v2216 = vmax.f32 %v2179, 0.0
    %v2217 = vmax.f32 %v1891, 0.0
    %v2218 = vmax.f32 %v1893, 0.0
    %v2219 = vmax.f32 %v2183, 0.0
    %v2220 = vmax.f32 %v2185, 0.0
    %v2221 = vmax.f32 %v1895, 0.0
    %v2222 = vmax.f32 %v1897, 0.0
    %v2223 = vmax.f32 %v2187, 0.0
    %v2224 = vmax.f32 %v2189, 0.0
    %v2225 = vmax.f32 %v1901, 0.0
    %v2226 = vmax.f32 %v1903, 0.0
    %v2227 = vmax.f32 %v2193, 0.0
    %v2228 = vmax.f32 %v2195, 0.0
    %v2229 = vmax.f32 %v1905, 0.0
    %v2230 = vmax.f32 %v1907, 0.0
    %v2231 = vmax.f32 %v2197, 0.0
    %v2232 = vmax.f32 %v2199, 0.0
    %v2233 = vpack.c.bf16 %v2205, %v2201
    %v2234 = vpack.c.bf16 %v2206, %v2202
    %v2235 = vpack.c.bf16 %v2207, %v2203
    %v2236 = vpack.c.bf16 %v2208, %v2204
    %v2237 = vpack.c.bf16 %v2213, %v2209
    %v2238 = vpack.c.bf16 %v2214, %v2210
    %v2239 = vpack.c.bf16 %v2215, %v2211
    %v2240 = vpack.c.bf16 %v2216, %v2212
    %v2241 = vpack.c.bf16 %v2221, %v2217
    %v2242 = vpack.c.bf16 %v2222, %v2218
    %v2243 = vpack.c.bf16 %v2223, %v2219
    %v2244 = vpack.c.bf16 %v2224, %v2220
    %v2245 = vpack.c.bf16 %v2229, %v2225
    %v2246 = vpack.c.bf16 %v2230, %v2226
    %v2247 = vpack.c.bf16 %v2231, %v2227
    %v2248 = vpack.c.bf16 %v2232, %v2228
    %v2249 = vld [vmem:[#allocation8] sm:$0xff]
    %v2250 = vld [vmem:[#allocation8 + $0x8] sm:$0xff]
    %v2251 = vld [vmem:[#allocation8 + $0x10] sm:$0xff]
    %v2252 = vld [vmem:[#allocation8 + $0x18] sm:$0xf]
    %v2253 = vld [vmem:[#allocation8 + $0x1c] sm:$0xff]
    %v2254 = vld [vmem:[#allocation8 + $0x24] sm:$0xff]
    %v2255 = vld [vmem:[#allocation8 + $0x2c] sm:$0xff]
    %v2256 = vld [vmem:[#allocation8 + $0x34] sm:$0xf]
    %v2257 = vld [vmem:[#allocation8 + $0x38] sm:$0xff]
    %v2258 = vld [vmem:[#allocation8 + $0x40] sm:$0xff]
    %v2259 = vld [vmem:[#allocation8 + $0x48] sm:$0xff]
    %v2260 = vld [vmem:[#allocation8 + $0x50] sm:$0xf]
    %v2261 = vld [vmem:[#allocation8 + $0x54] sm:$0xff]
    %v2262 = vld [vmem:[#allocation8 + $0x5c] sm:$0xff]
    %v2263 = vld [vmem:[#allocation8 + $0x64] sm:$0xff]
    %v2264 = vld [vmem:[#allocation8 + $0x6c] sm:$0xf]
    %v2265 = vld [vmem:[#allocation8 + $0x70] sm:$0xff]
    %v2266 = vld [vmem:[#allocation8 + $0x78] sm:$0xff]
    %v2267 = vld [vmem:[#allocation8 + $0x80] sm:$0xff]
    %v2268 = vld [vmem:[#allocation8 + $0x88] sm:$0xf]
    %v2269 = vld [vmem:[#allocation8 + $0x8c] sm:$0xff]
    %v2270 = vld [vmem:[#allocation8 + $0x94] sm:$0xff]
    %v2271 = vld [vmem:[#allocation8 + $0x9c] sm:$0xff]
    %v2272 = vld [vmem:[#allocation8 + $0xa4] sm:$0xf]
    %v2273 = vld [vmem:[#allocation8 + $0xa8] sm:$0xff]
    %v2274 = vld [vmem:[#allocation8 + $0xb0] sm:$0xff]
    %v2275 = vld [vmem:[#allocation8 + $0xb8] sm:$0xff]
    %v2276 = vld [vmem:[#allocation8 + $0xc0] sm:$0xf]
    %v2277 = vld [vmem:[#allocation8 + $0xc4] sm:$0xff]
    %v2278 = vld [vmem:[#allocation8 + $0xcc] sm:$0xff]
    %v2279 = vld [vmem:[#allocation8 + $0xd4] sm:$0xff]
    %v2280 = vld [vmem:[#allocation8 + $0xdc] sm:$0xf]
    %v2281 = vld [vmem:[#allocation8 + $0xe0] sm:$0xff]
    %v2282 = vld [vmem:[#allocation8 + $0xe8] sm:$0xff]
    %v2283 = vld [vmem:[#allocation8 + $0xf0] sm:$0xff]
    %v2284 = vld [vmem:[#allocation8 + $0xf8] sm:$0xf]
    %v2285 = vld [vmem:[#allocation8 + $0xfc] sm:$0xff]
    %v2286 = vld [vmem:[#allocation8 + $0x104] sm:$0xff]
    %v2287 = vld [vmem:[#allocation8 + $0x10c] sm:$0xff]
    %v2288 = vld [vmem:[#allocation8 + $0x114] sm:$0xf]
    %v2289 = vld [vmem:[#allocation8 + $0x118] sm:$0xff]
    %v2290 = vld [vmem:[#allocation8 + $0x120] sm:$0xff]
    %v2291 = vld [vmem:[#allocation8 + $0x128] sm:$0xff]
    %v2292 = vld [vmem:[#allocation8 + $0x130] sm:$0xf]
    %v2293 = vld [vmem:[#allocation8 + $0x134] sm:$0xff]
    %v2294 = vld [vmem:[#allocation8 + $0x13c] sm:$0xff]
    %v2295 = vld [vmem:[#allocation8 + $0x144] sm:$0xff]
    %v2296 = vld [vmem:[#allocation8 + $0x14c] sm:$0xf]
    %v2297 = vld [vmem:[#allocation8 + $0x150] sm:$0xff]
    %v2298 = vld [vmem:[#allocation8 + $0x158] sm:$0xff]
    %v2299 = vld [vmem:[#allocation8 + $0x160] sm:$0xff]
    %v2300 = vld [vmem:[#allocation8 + $0x168] sm:$0xf]
    %v2301 = vld [vmem:[#allocation8 + $0x16c] sm:$0xff]
    %v2302 = vld [vmem:[#allocation8 + $0x174] sm:$0xff]
    %v2303 = vld [vmem:[#allocation8 + $0x17c] sm:$0xff]
    %v2304 = vld [vmem:[#allocation8 + $0x184] sm:$0xf]
    %v2305 = vld [vmem:[#allocation8 + $0x188] sm:$0xff]
    %v2306 = vld [vmem:[#allocation8 + $0x190] sm:$0xff]
    %v2307 = vld [vmem:[#allocation8 + $0x198] sm:$0xff]
    %v2308 = vld [vmem:[#allocation8 + $0x1a0] sm:$0xf]
    %v2309 = vld [vmem:[#allocation8 + $0x1a4] sm:$0xff]
    %v2310 = vld [vmem:[#allocation8 + $0x1ac] sm:$0xff]
    %v2311 = vld [vmem:[#allocation8 + $0x1b4] sm:$0xff]
    %v2312 = vld [vmem:[#allocation8 + $0x1bc] sm:$0xf]
    %v2313 = vld [vmem:[#allocation8 + $0x1c0] sm:$0xff]
    %v2314 = vld [vmem:[#allocation8 + $0x1c8] sm:$0xff]
    %v2315 = vld [vmem:[#allocation8 + $0x1d0] sm:$0xff]
    %v2316 = vld [vmem:[#allocation8 + $0x1d8] sm:$0xf]
    %v2317 = vld [vmem:[#allocation8 + $0x1dc] sm:$0xff]
    %v2318 = vld [vmem:[#allocation8 + $0x1e4] sm:$0xff]
    %v2319 = vld [vmem:[#allocation8 + $0x1ec] sm:$0xff]
    %v2320 = vld [vmem:[#allocation8 + $0x1f4] sm:$0xf]
    %v2321 = vld [vmem:[#allocation8 + $0x1f8] sm:$0xff]
    %v2322 = vld [vmem:[#allocation8 + $0x200] sm:$0xff]
    %v2323 = vld [vmem:[#allocation8 + $0x208] sm:$0xff]
    %v2324 = vld [vmem:[#allocation8 + $0x210] sm:$0xf]
    %v2325 = vld [vmem:[#allocation8 + $0x214] sm:$0xff]
    %v2326 = vld [vmem:[#allocation8 + $0x21c] sm:$0xff]
    %v2327 = vld [vmem:[#allocation8 + $0x224] sm:$0xff]
    %v2328 = vld [vmem:[#allocation8 + $0x22c] sm:$0xf]
    %v2329 = vld [vmem:[#allocation8 + $0x230] sm:$0xff]
    %v2330 = vld [vmem:[#allocation8 + $0x238] sm:$0xff]
    %v2331 = vld [vmem:[#allocation8 + $0x240] sm:$0xff]
    %v2332 = vld [vmem:[#allocation8 + $0x248] sm:$0xf]
    %v2333 = vld [vmem:[#allocation8 + $0x24c] sm:$0xff]
    %v2334 = vld [vmem:[#allocation8 + $0x254] sm:$0xff]
    %v2335 = vld [vmem:[#allocation8 + $0x25c] sm:$0xff]
    %v2336 = vld [vmem:[#allocation8 + $0x264] sm:$0xf]
    %v2337 = vld [vmem:[#allocation8 + $0x268] sm:$0xff]
    %v2338 = vld [vmem:[#allocation8 + $0x270] sm:$0xff]
    %v2339 = vld [vmem:[#allocation8 + $0x278] sm:$0xff]
    %v2340 = vld [vmem:[#allocation8 + $0x280] sm:$0xf]
    %v2341 = vld [vmem:[#allocation8 + $0x284] sm:$0xff]
    %v2342 = vld [vmem:[#allocation8 + $0x28c] sm:$0xff]
    %v2343 = vld [vmem:[#allocation8 + $0x294] sm:$0xff]
    %v2344 = vld [vmem:[#allocation8 + $0x29c] sm:$0xf]
    %v2345 = vld [vmem:[#allocation8 + $0x2a0] sm:$0xff]
    %v2346 = vld [vmem:[#allocation8 + $0x2a8] sm:$0xff]
    %v2347 = vld [vmem:[#allocation8 + $0x2b0] sm:$0xff]
    %v2348 = vld [vmem:[#allocation8 + $0x2b8] sm:$0xf]
    %v2349 = vld [vmem:[#allocation8 + $0x2bc] sm:$0xff]
    %v2350 = vld [vmem:[#allocation8 + $0x2c4] sm:$0xff]
    %v2351 = vld [vmem:[#allocation8 + $0x2cc] sm:$0xff]
    %v2352 = vld [vmem:[#allocation8 + $0x2d4] sm:$0xf]
    %v2353 = vld [vmem:[#allocation8 + $0x2d8] sm:$0xff]
    %v2354 = vld [vmem:[#allocation8 + $0x2e0] sm:$0xff]
    %v2355 = vld [vmem:[#allocation8 + $0x2e8] sm:$0xff]
    %v2356 = vld [vmem:[#allocation8 + $0x2f0] sm:$0xf]
    %v2357 = vld [vmem:[#allocation8 + $0x2f4] sm:$0xff]
    %v2358 = vld [vmem:[#allocation8 + $0x2fc] sm:$0xff]
    %v2359 = vld [vmem:[#allocation8 + $0x304] sm:$0xff]
    %v2360 = vld [vmem:[#allocation8 + $0x30c] sm:$0xf]
    %v2361 = vld [vmem:[#allocation8 + $0x310] sm:$0xff]
    %v2362 = vld [vmem:[#allocation8 + $0x318] sm:$0xff]
    %v2363 = vld [vmem:[#allocation8 + $0x320] sm:$0xff]
    %v2364 = vld [vmem:[#allocation8 + $0x328] sm:$0xf]
    %v2365 = vld [vmem:[#allocation8 + $0x32c] sm:$0xff]
    %v2366 = vld [vmem:[#allocation8 + $0x334] sm:$0xff]
    %v2367 = vld [vmem:[#allocation8 + $0x33c] sm:$0xff]
    %v2368 = vld [vmem:[#allocation8 + $0x344] sm:$0xf]
    %v2369 = vld [vmem:[#allocation8 + $0x348] sm:$0xff]
    %v2370 = vld [vmem:[#allocation8 + $0x350] sm:$0xff]
    %v2371 = vld [vmem:[#allocation8 + $0x358] sm:$0xff]
    %v2372 = vld [vmem:[#allocation8 + $0x360] sm:$0xf]
    %v2373 = vld [vmem:[#allocation8 + $0x364] sm:$0xff]
    %v2374 = vld [vmem:[#allocation8 + $0x36c] sm:$0xff]
    %v2375 = vld [vmem:[#allocation8 + $0x374] sm:$0xff]
    %v2376 = vld [vmem:[#allocation8 + $0x37c] sm:$0xf]
    %v2377 = vld [vmem:[#allocation8 + $0x380] sm:$0xff]
    %v2378 = vld [vmem:[#allocation8 + $0x388] sm:$0xff]
    %v2379 = vld [vmem:[#allocation8 + $0x390] sm:$0xff]
    %v2380 = vld [vmem:[#allocation8 + $0x398] sm:$0xf]
    %v2381 = vld [vmem:[#allocation8 + $0x39c] sm:$0xff]
    %v2382 = vld [vmem:[#allocation8 + $0x3a4] sm:$0xff]
    %v2383 = vld [vmem:[#allocation8 + $0x3ac] sm:$0xff]
    %v2384 = vld [vmem:[#allocation8 + $0x3b4] sm:$0xf]
    %v2385 = vld [vmem:[#allocation8 + $0x3b8] sm:$0xff]
    %v2386 = vld [vmem:[#allocation8 + $0x3c0] sm:$0xff]
    %v2387 = vld [vmem:[#allocation8 + $0x3c8] sm:$0xff]
    %v2388 = vld [vmem:[#allocation8 + $0x3d0] sm:$0xf]
    %v2389 = vld [vmem:[#allocation8 + $0x3d4] sm:$0xff]
    %v2390 = vld [vmem:[#allocation8 + $0x3dc] sm:$0xff]
    %v2391 = vld [vmem:[#allocation8 + $0x3e4] sm:$0xff]
    %v2392 = vld [vmem:[#allocation8 + $0x3ec] sm:$0xf]
    %v2393 = vld [vmem:[#allocation8 + $0x3f0] sm:$0xff]
    %v2394 = vld [vmem:[#allocation8 + $0x3f8] sm:$0xff]
    %v2395 = vld [vmem:[#allocation8 + $0x400] sm:$0xff]
    %v2396 = vld [vmem:[#allocation8 + $0x408] sm:$0xf]
    %v2397 = vld [vmem:[#allocation8 + $0x40c] sm:$0xff]
    %v2398 = vld [vmem:[#allocation8 + $0x414] sm:$0xff]
    %v2399 = vld [vmem:[#allocation8 + $0x41c] sm:$0xff]
    %v2400 = vld [vmem:[#allocation8 + $0x424] sm:$0xf]
    %v2401 = vld [vmem:[#allocation8 + $0x428] sm:$0xff]
    %v2402 = vld [vmem:[#allocation8 + $0x430] sm:$0xff]
    %v2403 = vld [vmem:[#allocation8 + $0x438] sm:$0xff]
    %v2404 = vld [vmem:[#allocation8 + $0x440] sm:$0xf]
    %v2405 = vld [vmem:[#allocation8 + $0x444] sm:$0xff]
    %v2406 = vld [vmem:[#allocation8 + $0x44c] sm:$0xff]
    %v2407 = vld [vmem:[#allocation8 + $0x454] sm:$0xff]
    %v2408 = vld [vmem:[#allocation8 + $0x45c] sm:$0xf]
    %v2409 = vld [vmem:[#allocation8 + $0x460] sm:$0xff]
    %v2410 = vld [vmem:[#allocation8 + $0x468] sm:$0xff]
    %v2411 = vld [vmem:[#allocation8 + $0x470] sm:$0xff]
    %v2412 = vld [vmem:[#allocation8 + $0x478] sm:$0xf]
    %v2413 = vld [vmem:[#allocation8 + $0x47c] sm:$0xff]
    %v2414 = vld [vmem:[#allocation8 + $0x484] sm:$0xff]
    %v2415 = vld [vmem:[#allocation8 + $0x48c] sm:$0xff]
    %v2416 = vld [vmem:[#allocation8 + $0x494] sm:$0xf]
    %v2417 = vld [vmem:[#allocation8 + $0x498] sm:$0xff]
    %v2418 = vld [vmem:[#allocation8 + $0x4a0] sm:$0xff]
    %v2419 = vld [vmem:[#allocation8 + $0x4a8] sm:$0xff]
    %v2420 = vld [vmem:[#allocation8 + $0x4b0] sm:$0xf]
    %v2421 = vld [vmem:[#allocation8 + $0x4b4] sm:$0xff]
    %v2422 = vld [vmem:[#allocation8 + $0x4bc] sm:$0xff]
    %v2423 = vld [vmem:[#allocation8 + $0x4c4] sm:$0xff]
    %v2424 = vld [vmem:[#allocation8 + $0x4cc] sm:$0xf]
    %v2425 = vld [vmem:[#allocation8 + $0x4d0] sm:$0xff]
    %v2426 = vld [vmem:[#allocation8 + $0x4d8] sm:$0xff]
    %v2427 = vld [vmem:[#allocation8 + $0x4e0] sm:$0xff]
    %v2428 = vld [vmem:[#allocation8 + $0x4e8] sm:$0xf]
    %v2429 = vld [vmem:[#allocation8 + $0x4ec] sm:$0xff]
    %v2430 = vld [vmem:[#allocation8 + $0x4f4] sm:$0xff]
    %v2431 = vld [vmem:[#allocation8 + $0x4fc] sm:$0xff]
    %v2432 = vld [vmem:[#allocation8 + $0x504] sm:$0xf]
    %v2433 = vld [vmem:[#allocation8 + $0x508] sm:$0xff]
    %v2434 = vld [vmem:[#allocation8 + $0x510] sm:$0xff]
    %v2435 = vld [vmem:[#allocation8 + $0x518] sm:$0xff]
    %v2436 = vld [vmem:[#allocation8 + $0x520] sm:$0xf]
    %v2437 = vld [vmem:[#allocation8 + $0x524] sm:$0xff]
    %v2438 = vld [vmem:[#allocation8 + $0x52c] sm:$0xff]
    %v2439 = vld [vmem:[#allocation8 + $0x534] sm:$0xff]
    %v2440 = vld [vmem:[#allocation8 + $0x53c] sm:$0xf]
    %v2441 = vld [vmem:[#allocation8 + $0x540] sm:$0xff]
    %v2442 = vld [vmem:[#allocation8 + $0x548] sm:$0xff]
    %v2443 = vld [vmem:[#allocation8 + $0x550] sm:$0xff]
    %v2444 = vld [vmem:[#allocation8 + $0x558] sm:$0xf]
    %v2445 = vld [vmem:[#allocation8 + $0x55c] sm:$0xff]
    %v2446 = vld [vmem:[#allocation8 + $0x564] sm:$0xff]
    %v2447 = vld [vmem:[#allocation8 + $0x56c] sm:$0xff]
    %v2448 = vld [vmem:[#allocation8 + $0x574] sm:$0xf]
    %v2449 = vld [vmem:[#allocation8 + $0x578] sm:$0xff]
    %v2450 = vld [vmem:[#allocation8 + $0x580] sm:$0xff]
    %v2451 = vld [vmem:[#allocation8 + $0x588] sm:$0xff]
    %v2452 = vld [vmem:[#allocation8 + $0x590] sm:$0xf]
    %v2453 = vld [vmem:[#allocation8 + $0x594] sm:$0xff]
    %v2454 = vld [vmem:[#allocation8 + $0x59c] sm:$0xff]
    %v2455 = vld [vmem:[#allocation8 + $0x5a4] sm:$0xff]
    %v2456 = vld [vmem:[#allocation8 + $0x5ac] sm:$0xf]
    %v2457 = vld [vmem:[#allocation8 + $0x5b0] sm:$0xff]
    %v2458 = vld [vmem:[#allocation8 + $0x5b8] sm:$0xff]
    %v2459 = vld [vmem:[#allocation8 + $0x5c0] sm:$0xff]
    %v2460 = vld [vmem:[#allocation8 + $0x5c8] sm:$0xf]
    %v2461 = vld [vmem:[#allocation8 + $0x5cc] sm:$0xff]
    %v2462 = vld [vmem:[#allocation8 + $0x5d4] sm:$0xff]
    %v2463 = vld [vmem:[#allocation8 + $0x5dc] sm:$0xff]
    %v2464 = vld [vmem:[#allocation8 + $0x5e4] sm:$0xf]
    %v2465 = vld [vmem:[#allocation8 + $0x5e8] sm:$0xff]
    %v2466 = vld [vmem:[#allocation8 + $0x5f0] sm:$0xff]
    %v2467 = vld [vmem:[#allocation8 + $0x5f8] sm:$0xff]
    %v2468 = vld [vmem:[#allocation8 + $0x600] sm:$0xf]
    %v2469 = vld [vmem:[#allocation8 + $0x604] sm:$0xff]
    %v2470 = vld [vmem:[#allocation8 + $0x60c] sm:$0xff]
    %v2471 = vld [vmem:[#allocation8 + $0x614] sm:$0xff]
    %v2472 = vld [vmem:[#allocation8 + $0x61c] sm:$0xf]
    %v2473 = vld [vmem:[#allocation8 + $0x620] sm:$0xff]
    %v2474 = vld [vmem:[#allocation8 + $0x628] sm:$0xff]
    %v2475 = vld [vmem:[#allocation8 + $0x630] sm:$0xff]
    %v2476 = vld [vmem:[#allocation8 + $0x638] sm:$0xf]
    %v2477 = vld [vmem:[#allocation8 + $0x63c] sm:$0xff]
    %v2478 = vld [vmem:[#allocation8 + $0x644] sm:$0xff]
    %v2479 = vld [vmem:[#allocation8 + $0x64c] sm:$0xff]
    %v2480 = vld [vmem:[#allocation8 + $0x654] sm:$0xf]
    %v2481 = vld [vmem:[#allocation8 + $0x658] sm:$0xff]
    %v2482 = vld [vmem:[#allocation8 + $0x660] sm:$0xff]
    %v2483 = vld [vmem:[#allocation8 + $0x668] sm:$0xff]
    %v2484 = vld [vmem:[#allocation8 + $0x670] sm:$0xf]
    %v2485 = vld [vmem:[#allocation8 + $0x674] sm:$0xff]
    %v2486 = vld [vmem:[#allocation8 + $0x67c] sm:$0xff]
    %v2487 = vld [vmem:[#allocation8 + $0x684] sm:$0xff]
    %v2488 = vld [vmem:[#allocation8 + $0x68c] sm:$0xf]
    %v2489 = vld [vmem:[#allocation8 + $0x690] sm:$0xff]
    %v2490 = vld [vmem:[#allocation8 + $0x698] sm:$0xff]
    %v2491 = vld [vmem:[#allocation8 + $0x6a0] sm:$0xff]
    %v2492 = vld [vmem:[#allocation8 + $0x6a8] sm:$0xf]
    %v2493 = vld [vmem:[#allocation8 + $0x6ac] sm:$0xff]
    %v2494 = vld [vmem:[#allocation8 + $0x6b4] sm:$0xff]
    %v2495 = vld [vmem:[#allocation8 + $0x6bc] sm:$0xff]
    %v2496 = vld [vmem:[#allocation8 + $0x6c4] sm:$0xf]
    %v2497 = vld [vmem:[#allocation8 + $0x6c8] sm:$0xff]
    %v2498 = vld [vmem:[#allocation8 + $0x6d0] sm:$0xff]
    %v2499 = vld [vmem:[#allocation8 + $0x6d8] sm:$0xff]
    %v2500 = vld [vmem:[#allocation8 + $0x6e0] sm:$0xf]
    %v2501 = vld [vmem:[#allocation8 + $0x6e4] sm:$0xff]
    %v2502 = vld [vmem:[#allocation8 + $0x6ec] sm:$0xff]
    %v2503 = vld [vmem:[#allocation8 + $0x6f4] sm:$0xff]
    %v2504 = vld [vmem:[#allocation8 + $0x6fc] sm:$0xf]
    %v2505 = vld [vmem:[%s4] sm:$0xff]
    %v2507 = vlaneseq
    %v2508 = vshrl.u32 %v2507, 7
    %v2509 = vsub.s32 0, %v2508
    %v2510 = vrot.slane %v2505, %v2509
    %v2511 = vlaneseq
    %v2512 = vshrl.u32 %v2511, 7
    %v2513 = vsub.s32 1, %v2512
    %v2514 = vrot.slane %v2505, %v2513
    %v2515 = vlaneseq
    %v2516 = vshrl.u32 %v2515, 7
    %v2517 = vsub.s32 2, %v2516
    %v2518 = vrot.slane %v2505, %v2517
    %v2519 = vlaneseq
    %v2520 = vshrl.u32 %v2519, 7
    %v2521 = vsub.s32 3, %v2520
    %v2522 = vrot.slane %v2505, %v2521
    %v2523 = vlaneseq
    %v2524 = vshrl.u32 %v2523, 7
    %v2525 = vsub.s32 4, %v2524
    %v2526 = vrot.slane %v2505, %v2525
    %v2527 = vlaneseq
    %v2528 = vshrl.u32 %v2527, 7
    %v2529 = vsub.s32 5, %v2528
    %v2530 = vrot.slane %v2505, %v2529
    %v2531 = vlaneseq
    %v2532 = vshrl.u32 %v2531, 7
    %v2533 = vsub.s32 6, %v2532
    %v2534 = vrot.slane %v2505, %v2533
    %v2798 = vunpack.c.l.b16 %v2249
    %v2799 = vunpack.c.h.b16 %v2249
    %v2800 = vunpack.c.l.b16 %v2250
    %v2801 = vunpack.c.h.b16 %v2250
    %v2802 = vunpack.c.l.b16 %v2251
    %v2803 = vunpack.c.h.b16 %v2251
    %v2804 = vunpack.c.l.b16 %v2252
    %v2805 = vunpack.c.l.b16 %v2253
    %v2806 = vunpack.c.h.b16 %v2253
    %v2807 = vunpack.c.l.b16 %v2254
    %v2808 = vunpack.c.h.b16 %v2254
    %v2809 = vunpack.c.l.b16 %v2255
    %v2810 = vunpack.c.h.b16 %v2255
    %v2811 = vunpack.c.l.b16 %v2256
    %v2812 = vunpack.c.l.b16 %v2257
    %v2813 = vunpack.c.h.b16 %v2257
    %v2814 = vunpack.c.l.b16 %v2258
    %v2815 = vunpack.c.h.b16 %v2258
    %v2816 = vunpack.c.l.b16 %v2259
    %v2817 = vunpack.c.h.b16 %v2259
    %v2818 = vunpack.c.l.b16 %v2260
    %v2819 = vunpack.c.l.b16 %v2261
    %v2820 = vunpack.c.h.b16 %v2261
    %v2821 = vunpack.c.l.b16 %v2262
    %v2822 = vunpack.c.h.b16 %v2262
    %v2823 = vunpack.c.l.b16 %v2263
    %v2824 = vunpack.c.h.b16 %v2263
    %v2825 = vunpack.c.l.b16 %v2264
    %v2826 = vunpack.c.l.b16 %v2265
    %v2827 = vunpack.c.h.b16 %v2265
    %v2828 = vunpack.c.l.b16 %v2266
    %v2829 = vunpack.c.h.b16 %v2266
    %v2830 = vunpack.c.l.b16 %v2267
    %v2831 = vunpack.c.h.b16 %v2267
    %v2832 = vunpack.c.l.b16 %v2268
    %v2833 = vunpack.c.l.b16 %v2269
    %v2834 = vunpack.c.h.b16 %v2269
    %v2835 = vunpack.c.l.b16 %v2270
    %v2836 = vunpack.c.h.b16 %v2270
    %v2837 = vunpack.c.l.b16 %v2271
    %v2838 = vunpack.c.h.b16 %v2271
    %v2839 = vunpack.c.l.b16 %v2272
    %v2840 = vunpack.c.l.b16 %v2273
    %v2841 = vunpack.c.h.b16 %v2273
    %v2842 = vunpack.c.l.b16 %v2274
    %v2843 = vunpack.c.h.b16 %v2274
    %v2844 = vunpack.c.l.b16 %v2275
    %v2845 = vunpack.c.h.b16 %v2275
    %v2846 = vunpack.c.l.b16 %v2276
    %v2847 = vunpack.c.l.b16 %v2277
    %v2848 = vunpack.c.h.b16 %v2277
    %v2849 = vunpack.c.l.b16 %v2278
    %v2850 = vunpack.c.h.b16 %v2278
    %v2851 = vunpack.c.l.b16 %v2279
    %v2852 = vunpack.c.h.b16 %v2279
    %v2853 = vunpack.c.l.b16 %v2280
    %v2854 = vunpack.c.l.b16 %v2281
    %v2855 = vunpack.c.h.b16 %v2281
    %v2856 = vunpack.c.l.b16 %v2282
    %v2857 = vunpack.c.h.b16 %v2282
    %v2858 = vunpack.c.l.b16 %v2283
    %v2859 = vunpack.c.h.b16 %v2283
    %v2860 = vunpack.c.l.b16 %v2284
    %v2861 = vunpack.c.l.b16 %v2285
    %v2862 = vunpack.c.h.b16 %v2285
    %v2863 = vunpack.c.l.b16 %v2286
    %v2864 = vunpack.c.h.b16 %v2286
    %v2865 = vunpack.c.l.b16 %v2287
    %v2866 = vunpack.c.h.b16 %v2287
    %v2867 = vunpack.c.l.b16 %v2288
    %v2868 = vunpack.c.l.b16 %v2289
    %v2869 = vunpack.c.h.b16 %v2289
    %v2870 = vunpack.c.l.b16 %v2290
    %v2871 = vunpack.c.h.b16 %v2290
    %v2872 = vunpack.c.l.b16 %v2291
    %v2873 = vunpack.c.h.b16 %v2291
    %v2874 = vunpack.c.l.b16 %v2292
    %v2875 = vunpack.c.l.b16 %v2293
    %v2876 = vunpack.c.h.b16 %v2293
    %v2877 = vunpack.c.l.b16 %v2294
    %v2878 = vunpack.c.h.b16 %v2294
    %v2879 = vunpack.c.l.b16 %v2295
    %v2880 = vunpack.c.h.b16 %v2295
    %v2881 = vunpack.c.l.b16 %v2296
    %v2882 = vunpack.c.l.b16 %v2297
    %v2883 = vunpack.c.h.b16 %v2297
    %v2884 = vunpack.c.l.b16 %v2298
    %v2885 = vunpack.c.h.b16 %v2298
    %v2886 = vunpack.c.l.b16 %v2299
    %v2887 = vunpack.c.h.b16 %v2299
    %v2888 = vunpack.c.l.b16 %v2300
    %v2889 = vunpack.c.l.b16 %v2301
    %v2890 = vunpack.c.h.b16 %v2301
    %v2891 = vunpack.c.l.b16 %v2302
    %v2892 = vunpack.c.h.b16 %v2302
    %v2893 = vunpack.c.l.b16 %v2303
    %v2894 = vunpack.c.h.b16 %v2303
    %v2895 = vunpack.c.l.b16 %v2304
    %v2896 = vunpack.c.l.b16 %v2305
    %v2897 = vunpack.c.h.b16 %v2305
    %v2898 = vunpack.c.l.b16 %v2306
    %v2899 = vunpack.c.h.b16 %v2306
    %v2900 = vunpack.c.l.b16 %v2307
    %v2901 = vunpack.c.h.b16 %v2307
    %v2902 = vunpack.c.l.b16 %v2308
    %v2903 = vunpack.c.l.b16 %v2309
    %v2904 = vunpack.c.h.b16 %v2309
    %v2905 = vunpack.c.l.b16 %v2310
    %v2906 = vunpack.c.h.b16 %v2310
    %v2907 = vunpack.c.l.b16 %v2311
    %v2908 = vunpack.c.h.b16 %v2311
    %v2909 = vunpack.c.l.b16 %v2312
    %v2910 = vunpack.c.l.b16 %v2313
    %v2911 = vunpack.c.h.b16 %v2313
    %v2912 = vunpack.c.l.b16 %v2314
    %v2913 = vunpack.c.h.b16 %v2314
    %v2914 = vunpack.c.l.b16 %v2315
    %v2915 = vunpack.c.h.b16 %v2315
    %v2916 = vunpack.c.l.b16 %v2316
    %v2917 = vunpack.c.l.b16 %v2317
    %v2918 = vunpack.c.h.b16 %v2317
    %v2919 = vunpack.c.l.b16 %v2318
    %v2920 = vunpack.c.h.b16 %v2318
    %v2921 = vunpack.c.l.b16 %v2319
    %v2922 = vunpack.c.h.b16 %v2319
    %v2923 = vunpack.c.l.b16 %v2320
    %v2924 = vunpack.c.l.b16 %v2321
    %v2925 = vunpack.c.h.b16 %v2321
    %v2926 = vunpack.c.l.b16 %v2322
    %v2927 = vunpack.c.h.b16 %v2322
    %v2928 = vunpack.c.l.b16 %v2323
    %v2929 = vunpack.c.h.b16 %v2323
    %v2930 = vunpack.c.l.b16 %v2324
    %v2931 = vunpack.c.l.b16 %v2325
    %v2932 = vunpack.c.h.b16 %v2325
    %v2933 = vunpack.c.l.b16 %v2326
    %v2934 = vunpack.c.h.b16 %v2326
    %v2935 = vunpack.c.l.b16 %v2327
    %v2936 = vunpack.c.h.b16 %v2327
    %v2937 = vunpack.c.l.b16 %v2328
    %v2938 = vunpack.c.l.b16 %v2329
    %v2939 = vunpack.c.h.b16 %v2329
    %v2940 = vunpack.c.l.b16 %v2330
    %v2941 = vunpack.c.h.b16 %v2330
    %v2942 = vunpack.c.l.b16 %v2331
    %v2943 = vunpack.c.h.b16 %v2331
    %v2944 = vunpack.c.l.b16 %v2332
    %v2945 = vunpack.c.l.b16 %v2333
    %v2946 = vunpack.c.h.b16 %v2333
    %v2947 = vunpack.c.l.b16 %v2334
    %v2948 = vunpack.c.h.b16 %v2334
    %v2949 = vunpack.c.l.b16 %v2335
    %v2950 = vunpack.c.h.b16 %v2335
    %v2951 = vunpack.c.l.b16 %v2336
    %v2952 = vunpack.c.l.b16 %v2337
    %v2953 = vunpack.c.h.b16 %v2337
    %v2954 = vunpack.c.l.b16 %v2338
    %v2955 = vunpack.c.h.b16 %v2338
    %v2956 = vunpack.c.l.b16 %v2339
    %v2957 = vunpack.c.h.b16 %v2339
    %v2958 = vunpack.c.l.b16 %v2340
    %v2959 = vunpack.c.l.b16 %v2341
    %v2960 = vunpack.c.h.b16 %v2341
    %v2961 = vunpack.c.l.b16 %v2342
    %v2962 = vunpack.c.h.b16 %v2342
    %v2963 = vunpack.c.l.b16 %v2343
    %v2964 = vunpack.c.h.b16 %v2343
    %v2965 = vunpack.c.l.b16 %v2344
    %v2966 = vunpack.c.l.b16 %v2345
    %v2967 = vunpack.c.h.b16 %v2345
    %v2968 = vunpack.c.l.b16 %v2346
    %v2969 = vunpack.c.h.b16 %v2346
    %v2970 = vunpack.c.l.b16 %v2347
    %v2971 = vunpack.c.h.b16 %v2347
    %v2972 = vunpack.c.l.b16 %v2348
    %v2973 = vunpack.c.l.b16 %v2349
    %v2974 = vunpack.c.h.b16 %v2349
    %v2975 = vunpack.c.l.b16 %v2350
    %v2976 = vunpack.c.h.b16 %v2350
    %v2977 = vunpack.c.l.b16 %v2351
    %v2978 = vunpack.c.h.b16 %v2351
    %v2979 = vunpack.c.l.b16 %v2352
    %v2980 = vunpack.c.l.b16 %v2353
    %v2981 = vunpack.c.h.b16 %v2353
    %v2982 = vunpack.c.l.b16 %v2354
    %v2983 = vunpack.c.h.b16 %v2354
    %v2984 = vunpack.c.l.b16 %v2355
    %v2985 = vunpack.c.h.b16 %v2355
    %v2986 = vunpack.c.l.b16 %v2356
    %v2987 = vunpack.c.l.b16 %v2357
    %v2988 = vunpack.c.h.b16 %v2357
    %v2989 = vunpack.c.l.b16 %v2358
    %v2990 = vunpack.c.h.b16 %v2358
    %v2991 = vunpack.c.l.b16 %v2359
    %v2992 = vunpack.c.h.b16 %v2359
    %v2993 = vunpack.c.l.b16 %v2360
    %v2994 = vunpack.c.l.b16 %v2361
    %v2995 = vunpack.c.h.b16 %v2361
    %v2996 = vunpack.c.l.b16 %v2362
    %v2997 = vunpack.c.h.b16 %v2362
    %v2998 = vunpack.c.l.b16 %v2363
    %v2999 = vunpack.c.h.b16 %v2363
    %v3000 = vunpack.c.l.b16 %v2364
    %v3001 = vunpack.c.l.b16 %v2365
    %v3002 = vunpack.c.h.b16 %v2365
    %v3003 = vunpack.c.l.b16 %v2366
    %v3004 = vunpack.c.h.b16 %v2366
    %v3005 = vunpack.c.l.b16 %v2367
    %v3006 = vunpack.c.h.b16 %v2367
    %v3007 = vunpack.c.l.b16 %v2368
    %v3008 = vunpack.c.l.b16 %v2369
    %v3009 = vunpack.c.h.b16 %v2369
    %v3010 = vunpack.c.l.b16 %v2370
    %v3011 = vunpack.c.h.b16 %v2370
    %v3012 = vunpack.c.l.b16 %v2371
    %v3013 = vunpack.c.h.b16 %v2371
    %v3014 = vunpack.c.l.b16 %v2372
    %v3015 = vunpack.c.l.b16 %v2373
    %v3016 = vunpack.c.h.b16 %v2373
    %v3017 = vunpack.c.l.b16 %v2374
    %v3018 = vunpack.c.h.b16 %v2374
    %v3019 = vunpack.c.l.b16 %v2375
    %v3020 = vunpack.c.h.b16 %v2375
    %v3021 = vunpack.c.l.b16 %v2376
    %v3022 = vunpack.c.l.b16 %v2377
    %v3023 = vunpack.c.h.b16 %v2377
    %v3024 = vunpack.c.l.b16 %v2378
    %v3025 = vunpack.c.h.b16 %v2378
    %v3026 = vunpack.c.l.b16 %v2379
    %v3027 = vunpack.c.h.b16 %v2379
    %v3028 = vunpack.c.l.b16 %v2380
    %v3029 = vunpack.c.l.b16 %v2381
    %v3030 = vunpack.c.h.b16 %v2381
    %v3031 = vunpack.c.l.b16 %v2382
    %v3032 = vunpack.c.h.b16 %v2382
    %v3033 = vunpack.c.l.b16 %v2383
    %v3034 = vunpack.c.h.b16 %v2383
    %v3035 = vunpack.c.l.b16 %v2384
    %v3036 = vunpack.c.l.b16 %v2385
    %v3037 = vunpack.c.h.b16 %v2385
    %v3038 = vunpack.c.l.b16 %v2386
    %v3039 = vunpack.c.h.b16 %v2386
    %v3040 = vunpack.c.l.b16 %v2387
    %v3041 = vunpack.c.h.b16 %v2387
    %v3042 = vunpack.c.l.b16 %v2388
    %v3043 = vunpack.c.l.b16 %v2389
    %v3044 = vunpack.c.h.b16 %v2389
    %v3045 = vunpack.c.l.b16 %v2390
    %v3046 = vunpack.c.h.b16 %v2390
    %v3047 = vunpack.c.l.b16 %v2391
    %v3048 = vunpack.c.h.b16 %v2391
    %v3049 = vunpack.c.l.b16 %v2392
    %v3050 = vunpack.c.l.b16 %v2393
    %v3051 = vunpack.c.h.b16 %v2393
    %v3052 = vunpack.c.l.b16 %v2394
    %v3053 = vunpack.c.h.b16 %v2394
    %v3054 = vunpack.c.l.b16 %v2395
    %v3055 = vunpack.c.h.b16 %v2395
    %v3056 = vunpack.c.l.b16 %v2396
    %v3057 = vunpack.c.l.b16 %v2397
    %v3058 = vunpack.c.h.b16 %v2397
    %v3059 = vunpack.c.l.b16 %v2398
    %v3060 = vunpack.c.h.b16 %v2398
    %v3061 = vunpack.c.l.b16 %v2399
    %v3062 = vunpack.c.h.b16 %v2399
    %v3063 = vunpack.c.l.b16 %v2400
    %v3064 = vunpack.c.l.b16 %v2401
    %v3065 = vunpack.c.h.b16 %v2401
    %v3066 = vunpack.c.l.b16 %v2402
    %v3067 = vunpack.c.h.b16 %v2402
    %v3068 = vunpack.c.l.b16 %v2403
    %v3069 = vunpack.c.h.b16 %v2403
    %v3070 = vunpack.c.l.b16 %v2404
    %v3071 = vunpack.c.l.b16 %v2405
    %v3072 = vunpack.c.h.b16 %v2405
    %v3073 = vunpack.c.l.b16 %v2406
    %v3074 = vunpack.c.h.b16 %v2406
    %v3075 = vunpack.c.l.b16 %v2407
    %v3076 = vunpack.c.h.b16 %v2407
    %v3077 = vunpack.c.l.b16 %v2408
    %v3078 = vunpack.c.l.b16 %v2409
    %v3079 = vunpack.c.h.b16 %v2409
    %v3080 = vunpack.c.l.b16 %v2410
    %v3081 = vunpack.c.h.b16 %v2410
    %v3082 = vunpack.c.l.b16 %v2411
    %v3083 = vunpack.c.h.b16 %v2411
    %v3084 = vunpack.c.l.b16 %v2412
    %v3085 = vunpack.c.l.b16 %v2413
    %v3086 = vunpack.c.h.b16 %v2413
    %v3087 = vunpack.c.l.b16 %v2414
    %v3088 = vunpack.c.h.b16 %v2414
    %v3089 = vunpack.c.l.b16 %v2415
    %v3090 = vunpack.c.h.b16 %v2415
    %v3091 = vunpack.c.l.b16 %v2416
    %v3092 = vunpack.c.l.b16 %v2417
    %v3093 = vunpack.c.h.b16 %v2417
    %v3094 = vunpack.c.l.b16 %v2418
    %v3095 = vunpack.c.h.b16 %v2418
    %v3096 = vunpack.c.l.b16 %v2419
    %v3097 = vunpack.c.h.b16 %v2419
    %v3098 = vunpack.c.l.b16 %v2420
    %v3099 = vunpack.c.l.b16 %v2421
    %v3100 = vunpack.c.h.b16 %v2421
    %v3101 = vunpack.c.l.b16 %v2422
    %v3102 = vunpack.c.h.b16 %v2422
    %v3103 = vunpack.c.l.b16 %v2423
    %v3104 = vunpack.c.h.b16 %v2423
    %v3105 = vunpack.c.l.b16 %v2424
    %v3106 = vunpack.c.l.b16 %v2425
    %v3107 = vunpack.c.h.b16 %v2425
    %v3108 = vunpack.c.l.b16 %v2426
    %v3109 = vunpack.c.h.b16 %v2426
    %v3110 = vunpack.c.l.b16 %v2427
    %v3111 = vunpack.c.h.b16 %v2427
    %v3112 = vunpack.c.l.b16 %v2428
    %v3113 = vunpack.c.l.b16 %v2429
    %v3114 = vunpack.c.h.b16 %v2429
    %v3115 = vunpack.c.l.b16 %v2430
    %v3116 = vunpack.c.h.b16 %v2430
    %v3117 = vunpack.c.l.b16 %v2431
    %v3118 = vunpack.c.h.b16 %v2431
    %v3119 = vunpack.c.l.b16 %v2432
    %v3120 = vunpack.c.l.b16 %v2433
    %v3121 = vunpack.c.h.b16 %v2433
    %v3122 = vunpack.c.l.b16 %v2434
    %v3123 = vunpack.c.h.b16 %v2434
    %v3124 = vunpack.c.l.b16 %v2435
    %v3125 = vunpack.c.h.b16 %v2435
    %v3126 = vunpack.c.l.b16 %v2436
    %v3127 = vunpack.c.l.b16 %v2437
    %v3128 = vunpack.c.h.b16 %v2437
    %v3129 = vunpack.c.l.b16 %v2438
    %v3130 = vunpack.c.h.b16 %v2438
    %v3131 = vunpack.c.l.b16 %v2439
    %v3132 = vunpack.c.h.b16 %v2439
    %v3133 = vunpack.c.l.b16 %v2440
    %v3134 = vunpack.c.l.b16 %v2441
    %v3135 = vunpack.c.h.b16 %v2441
    %v3136 = vunpack.c.l.b16 %v2442
    %v3137 = vunpack.c.h.b16 %v2442
    %v3138 = vunpack.c.l.b16 %v2443
    %v3139 = vunpack.c.h.b16 %v2443
    %v3140 = vunpack.c.l.b16 %v2444
    %v3141 = vunpack.c.l.b16 %v2445
    %v3142 = vunpack.c.h.b16 %v2445
    %v3143 = vunpack.c.l.b16 %v2446
    %v3144 = vunpack.c.h.b16 %v2446
    %v3145 = vunpack.c.l.b16 %v2447
    %v3146 = vunpack.c.h.b16 %v2447
    %v3147 = vunpack.c.l.b16 %v2448
    %v3148 = vunpack.c.l.b16 %v2449
    %v3149 = vunpack.c.h.b16 %v2449
    %v3150 = vunpack.c.l.b16 %v2450
    %v3151 = vunpack.c.h.b16 %v2450
    %v3152 = vunpack.c.l.b16 %v2451
    %v3153 = vunpack.c.h.b16 %v2451
    %v3154 = vunpack.c.l.b16 %v2452
    %v3155 = vunpack.c.l.b16 %v2453
    %v3156 = vunpack.c.h.b16 %v2453
    %v3157 = vunpack.c.l.b16 %v2454
    %v3158 = vunpack.c.h.b16 %v2454
    %v3159 = vunpack.c.l.b16 %v2455
    %v3160 = vunpack.c.h.b16 %v2455
    %v3161 = vunpack.c.l.b16 %v2456
    %v3162 = vunpack.c.l.b16 %v2457
    %v3163 = vunpack.c.h.b16 %v2457
    %v3164 = vunpack.c.l.b16 %v2458
    %v3165 = vunpack.c.h.b16 %v2458
    %v3166 = vunpack.c.l.b16 %v2459
    %v3167 = vunpack.c.h.b16 %v2459
    %v3168 = vunpack.c.l.b16 %v2460
    %v3169 = vunpack.c.l.b16 %v2461
    %v3170 = vunpack.c.h.b16 %v2461
    %v3171 = vunpack.c.l.b16 %v2462
    %v3172 = vunpack.c.h.b16 %v2462
    %v3173 = vunpack.c.l.b16 %v2463
    %v3174 = vunpack.c.h.b16 %v2463
    %v3175 = vunpack.c.l.b16 %v2464
    %v3176 = vunpack.c.l.b16 %v2465
    %v3177 = vunpack.c.h.b16 %v2465
    %v3178 = vunpack.c.l.b16 %v2466
    %v3179 = vunpack.c.h.b16 %v2466
    %v3180 = vunpack.c.l.b16 %v2467
    %v3181 = vunpack.c.h.b16 %v2467
    %v3182 = vunpack.c.l.b16 %v2468
    %v3183 = vunpack.c.l.b16 %v2469
    %v3184 = vunpack.c.h.b16 %v2469
    %v3185 = vunpack.c.l.b16 %v2470
    %v3186 = vunpack.c.h.b16 %v2470
    %v3187 = vunpack.c.l.b16 %v2471
    %v3188 = vunpack.c.h.b16 %v2471
    %v3189 = vunpack.c.l.b16 %v2472
    %v3190 = vunpack.c.l.b16 %v2473
    %v3191 = vunpack.c.h.b16 %v2473
    %v3192 = vunpack.c.l.b16 %v2474
    %v3193 = vunpack.c.h.b16 %v2474
    %v3194 = vunpack.c.l.b16 %v2475
    %v3195 = vunpack.c.h.b16 %v2475
    %v3196 = vunpack.c.l.b16 %v2476
    %v3197 = vunpack.c.l.b16 %v2477
    %v3198 = vunpack.c.h.b16 %v2477
    %v3199 = vunpack.c.l.b16 %v2478
    %v3200 = vunpack.c.h.b16 %v2478
    %v3201 = vunpack.c.l.b16 %v2479
    %v3202 = vunpack.c.h.b16 %v2479
    %v3203 = vunpack.c.l.b16 %v2480
    %v3204 = vunpack.c.l.b16 %v2481
    %v3205 = vunpack.c.h.b16 %v2481
    %v3206 = vunpack.c.l.b16 %v2482
    %v3207 = vunpack.c.h.b16 %v2482
    %v3208 = vunpack.c.l.b16 %v2483
    %v3209 = vunpack.c.h.b16 %v2483
    %v3210 = vunpack.c.l.b16 %v2484
    %v3211 = vunpack.c.l.b16 %v2485
    %v3212 = vunpack.c.h.b16 %v2485
    %v3213 = vunpack.c.l.b16 %v2486
    %v3214 = vunpack.c.h.b16 %v2486
    %v3215 = vunpack.c.l.b16 %v2487
    %v3216 = vunpack.c.h.b16 %v2487
    %v3217 = vunpack.c.l.b16 %v2488
    %v3218 = vunpack.c.l.b16 %v2489
    %v3219 = vunpack.c.h.b16 %v2489
    %v3220 = vunpack.c.l.b16 %v2490
    %v3221 = vunpack.c.h.b16 %v2490
    %v3222 = vunpack.c.l.b16 %v2491
    %v3223 = vunpack.c.h.b16 %v2491
    %v3224 = vunpack.c.l.b16 %v2492
    %v3225 = vunpack.c.l.b16 %v2493
    %v3226 = vunpack.c.h.b16 %v2493
    %v3227 = vunpack.c.l.b16 %v2494
    %v3228 = vunpack.c.h.b16 %v2494
    %v3229 = vunpack.c.l.b16 %v2495
    %v3230 = vunpack.c.h.b16 %v2495
    %v3231 = vunpack.c.l.b16 %v2496
    %v3232 = vunpack.c.l.b16 %v2497
    %v3233 = vunpack.c.h.b16 %v2497
    %v3234 = vunpack.c.l.b16 %v2498
    %v3235 = vunpack.c.h.b16 %v2498
    %v3236 = vunpack.c.l.b16 %v2499
    %v3237 = vunpack.c.h.b16 %v2499
    %v3238 = vunpack.c.l.b16 %v2500
    %v3239 = vunpack.c.l.b16 %v2501
    %v3240 = vunpack.c.h.b16 %v2501
    %v3241 = vunpack.c.l.b16 %v2502
    %v3242 = vunpack.c.h.b16 %v2502
    %v3243 = vunpack.c.l.b16 %v2503
    %v3244 = vunpack.c.h.b16 %v2503
    %v3245 = vunpack.c.l.b16 %v2504
    %v3246 = vpack.c.b16 %v2805, %v2798
    %v3247 = vpack.c.b16 %v2806, %v2799
    %v3248 = vpack.c.b16 %v2807, %v2800
    %v3249 = vpack.c.b16 %v2808, %v2801
    %v3250 = vpack.c.b16 %v2809, %v2802
    %v3251 = vpack.c.b16 %v2810, %v2803
    %v3252 = vpack.c.b16 %v2811, %v2804
    %v3253 = vpack.c.b16 %v2819, %v2812
    %v3254 = vpack.c.b16 %v2820, %v2813
    %v3255 = vpack.c.b16 %v2821, %v2814
    %v3256 = vpack.c.b16 %v2822, %v2815
    %v3257 = vpack.c.b16 %v2823, %v2816
    %v3258 = vpack.c.b16 %v2824, %v2817
    %v3259 = vpack.c.b16 %v2825, %v2818
    %v3260 = vpack.c.b16 %v2833, %v2826
    %v3261 = vpack.c.b16 %v2834, %v2827
    %v3262 = vpack.c.b16 %v2835, %v2828
    %v3263 = vpack.c.b16 %v2836, %v2829
    %v3264 = vpack.c.b16 %v2837, %v2830
    %v3265 = vpack.c.b16 %v2838, %v2831
    %v3266 = vpack.c.b16 %v2839, %v2832
    %v3267 = vpack.c.b16 %v2847, %v2840
    %v3268 = vpack.c.b16 %v2848, %v2841
    %v3269 = vpack.c.b16 %v2849, %v2842
    %v3270 = vpack.c.b16 %v2850, %v2843
    %v3271 = vpack.c.b16 %v2851, %v2844
    %v3272 = vpack.c.b16 %v2852, %v2845
    %v3273 = vpack.c.b16 %v2853, %v2846
    %v3274 = vpack.c.b16 %v2861, %v2854
    %v3275 = vpack.c.b16 %v2862, %v2855
    %v3276 = vpack.c.b16 %v2863, %v2856
    %v3277 = vpack.c.b16 %v2864, %v2857
    %v3278 = vpack.c.b16 %v2865, %v2858
    %v3279 = vpack.c.b16 %v2866, %v2859
    %v3280 = vpack.c.b16 %v2867, %v2860
    %v3281 = vpack.c.b16 %v2875, %v2868
    %v3282 = vpack.c.b16 %v2876, %v2869
    %v3283 = vpack.c.b16 %v2877, %v2870
    %v3284 = vpack.c.b16 %v2878, %v2871
    %v3285 = vpack.c.b16 %v2879, %v2872
    %v3286 = vpack.c.b16 %v2880, %v2873
    %v3287 = vpack.c.b16 %v2881, %v2874
    %v3288 = vpack.c.b16 %v2889, %v2882
    %v3289 = vpack.c.b16 %v2890, %v2883
    %v3290 = vpack.c.b16 %v2891, %v2884
    %v3291 = vpack.c.b16 %v2892, %v2885
    %v3292 = vpack.c.b16 %v2893, %v2886
    %v3293 = vpack.c.b16 %v2894, %v2887
    %v3294 = vpack.c.b16 %v2895, %v2888
    %v3295 = vpack.c.b16 %v2903, %v2896
    %v3296 = vpack.c.b16 %v2904, %v2897
    %v3297 = vpack.c.b16 %v2905, %v2898
    %v3298 = vpack.c.b16 %v2906, %v2899
    %v3299 = vpack.c.b16 %v2907, %v2900
    %v3300 = vpack.c.b16 %v2908, %v2901
    %v3301 = vpack.c.b16 %v2909, %v2902
    %v3302 = vpack.c.b16 %v2917, %v2910
    %v3303 = vpack.c.b16 %v2918, %v2911
    %v3304 = vpack.c.b16 %v2919, %v2912
    %v3305 = vpack.c.b16 %v2920, %v2913
    %v3306 = vpack.c.b16 %v2921, %v2914
    %v3307 = vpack.c.b16 %v2922, %v2915
    %v3308 = vpack.c.b16 %v2923, %v2916
    %v3309 = vpack.c.b16 %v2931, %v2924
    %v3310 = vpack.c.b16 %v2932, %v2925
    %v3311 = vpack.c.b16 %v2933, %v2926
    %v3312 = vpack.c.b16 %v2934, %v2927
    %v3313 = vpack.c.b16 %v2935, %v2928
    %v3314 = vpack.c.b16 %v2936, %v2929
    %v3315 = vpack.c.b16 %v2937, %v2930
    %v3316 = vpack.c.b16 %v2945, %v2938
    %v3317 = vpack.c.b16 %v2946, %v2939
    %v3318 = vpack.c.b16 %v2947, %v2940
    %v3319 = vpack.c.b16 %v2948, %v2941
    %v3320 = vpack.c.b16 %v2949, %v2942
    %v3321 = vpack.c.b16 %v2950, %v2943
    %v3322 = vpack.c.b16 %v2951, %v2944
    %v3323 = vpack.c.b16 %v2959, %v2952
    %v3324 = vpack.c.b16 %v2960, %v2953
    %v3325 = vpack.c.b16 %v2961, %v2954
    %v3326 = vpack.c.b16 %v2962, %v2955
    %v3327 = vpack.c.b16 %v2963, %v2956
    %v3328 = vpack.c.b16 %v2964, %v2957
    %v3329 = vpack.c.b16 %v2965, %v2958
    %v3330 = vpack.c.b16 %v2973, %v2966
    %v3331 = vpack.c.b16 %v2974, %v2967
    %v3332 = vpack.c.b16 %v2975, %v2968
    %v3333 = vpack.c.b16 %v2976, %v2969
    %v3334 = vpack.c.b16 %v2977, %v2970
    %v3335 = vpack.c.b16 %v2978, %v2971
    %v3336 = vpack.c.b16 %v2979, %v2972
    %v3337 = vpack.c.b16 %v2987, %v2980
    %v3338 = vpack.c.b16 %v2988, %v2981
    %v3339 = vpack.c.b16 %v2989, %v2982
    %v3340 = vpack.c.b16 %v2990, %v2983
    %v3341 = vpack.c.b16 %v2991, %v2984
    %v3342 = vpack.c.b16 %v2992, %v2985
    %v3343 = vpack.c.b16 %v2993, %v2986
    %v3344 = vpack.c.b16 %v3001, %v2994
    %v3345 = vpack.c.b16 %v3002, %v2995
    %v3346 = vpack.c.b16 %v3003, %v2996
    %v3347 = vpack.c.b16 %v3004, %v2997
    %v3348 = vpack.c.b16 %v3005, %v2998
    %v3349 = vpack.c.b16 %v3006, %v2999
    %v3350 = vpack.c.b16 %v3007, %v3000
    %v3351 = vpack.c.b16 %v3015, %v3008
    %v3352 = vpack.c.b16 %v3016, %v3009
    %v3353 = vpack.c.b16 %v3017, %v3010
    %v3354 = vpack.c.b16 %v3018, %v3011
    %v3355 = vpack.c.b16 %v3019, %v3012
    %v3356 = vpack.c.b16 %v3020, %v3013
    %v3357 = vpack.c.b16 %v3021, %v3014
    %v3358 = vpack.c.b16 %v3029, %v3022
    %v3359 = vpack.c.b16 %v3030, %v3023
    %v3360 = vpack.c.b16 %v3031, %v3024
    %v3361 = vpack.c.b16 %v3032, %v3025
    %v3362 = vpack.c.b16 %v3033, %v3026
    %v3363 = vpack.c.b16 %v3034, %v3027
    %v3364 = vpack.c.b16 %v3035, %v3028
    %v3365 = vpack.c.b16 %v3043, %v3036
    %v3366 = vpack.c.b16 %v3044, %v3037
    %v3367 = vpack.c.b16 %v3045, %v3038
    %v3368 = vpack.c.b16 %v3046, %v3039
    %v3369 = vpack.c.b16 %v3047, %v3040
    %v3370 = vpack.c.b16 %v3048, %v3041
    %v3371 = vpack.c.b16 %v3049, %v3042
    %v3372 = vpack.c.b16 %v3057, %v3050
    %v3373 = vpack.c.b16 %v3058, %v3051
    %v3374 = vpack.c.b16 %v3059, %v3052
    %v3375 = vpack.c.b16 %v3060, %v3053
    %v3376 = vpack.c.b16 %v3061, %v3054
    %v3377 = vpack.c.b16 %v3062, %v3055
    %v3378 = vpack.c.b16 %v3063, %v3056
    %v3379 = vpack.c.b16 %v3071, %v3064
    %v3380 = vpack.c.b16 %v3072, %v3065
    %v3381 = vpack.c.b16 %v3073, %v3066
    %v3382 = vpack.c.b16 %v3074, %v3067
    %v3383 = vpack.c.b16 %v3075, %v3068
    %v3384 = vpack.c.b16 %v3076, %v3069
    %v3385 = vpack.c.b16 %v3077, %v3070
    %v3386 = vpack.c.b16 %v3085, %v3078
    %v3387 = vpack.c.b16 %v3086, %v3079
    %v3388 = vpack.c.b16 %v3087, %v3080
    %v3389 = vpack.c.b16 %v3088, %v3081
    %v3390 = vpack.c.b16 %v3089, %v3082
    %v3391 = vpack.c.b16 %v3090, %v3083
    %v3392 = vpack.c.b16 %v3091, %v3084
    %v3393 = vpack.c.b16 %v3099, %v3092
    %v3394 = vpack.c.b16 %v3100, %v3093
    %v3395 = vpack.c.b16 %v3101, %v3094
    %v3396 = vpack.c.b16 %v3102, %v3095
    %v3397 = vpack.c.b16 %v3103, %v3096
    %v3398 = vpack.c.b16 %v3104, %v3097
    %v3399 = vpack.c.b16 %v3105, %v3098
    %v3400 = vpack.c.b16 %v3113, %v3106
    %v3401 = vpack.c.b16 %v3114, %v3107
    %v3402 = vpack.c.b16 %v3115, %v3108
    %v3403 = vpack.c.b16 %v3116, %v3109
    %v3404 = vpack.c.b16 %v3117, %v3110
    %v3405 = vpack.c.b16 %v3118, %v3111
    %v3406 = vpack.c.b16 %v3119, %v3112
    %v3407 = vpack.c.b16 %v3127, %v3120
    %v3408 = vpack.c.b16 %v3128, %v3121
    %v3409 = vpack.c.b16 %v3129, %v3122
    %v3410 = vpack.c.b16 %v3130, %v3123
    %v3411 = vpack.c.b16 %v3131, %v3124
    %v3412 = vpack.c.b16 %v3132, %v3125
    %v3413 = vpack.c.b16 %v3133, %v3126
    %v3414 = vpack.c.b16 %v3141, %v3134
    %v3415 = vpack.c.b16 %v3142, %v3135
    %v3416 = vpack.c.b16 %v3143, %v3136
    %v3417 = vpack.c.b16 %v3144, %v3137
    %v3418 = vpack.c.b16 %v3145, %v3138
    %v3419 = vpack.c.b16 %v3146, %v3139
    %v3420 = vpack.c.b16 %v3147, %v3140
    %v3421 = vpack.c.b16 %v3155, %v3148
    %v3422 = vpack.c.b16 %v3156, %v3149
    %v3423 = vpack.c.b16 %v3157, %v3150
    %v3424 = vpack.c.b16 %v3158, %v3151
    %v3425 = vpack.c.b16 %v3159, %v3152
    %v3426 = vpack.c.b16 %v3160, %v3153
    %v3427 = vpack.c.b16 %v3161, %v3154
    %v3428 = vpack.c.b16 %v3169, %v3162
    %v3429 = vpack.c.b16 %v3170, %v3163
    %v3430 = vpack.c.b16 %v3171, %v3164
    %v3431 = vpack.c.b16 %v3172, %v3165
    %v3432 = vpack.c.b16 %v3173, %v3166
    %v3433 = vpack.c.b16 %v3174, %v3167
    %v3434 = vpack.c.b16 %v3175, %v3168
    %v3435 = vpack.c.b16 %v3183, %v3176
    %v3436 = vpack.c.b16 %v3184, %v3177
    %v3437 = vpack.c.b16 %v3185, %v3178
    %v3438 = vpack.c.b16 %v3186, %v3179
    %v3439 = vpack.c.b16 %v3187, %v3180
    %v3440 = vpack.c.b16 %v3188, %v3181
    %v3441 = vpack.c.b16 %v3189, %v3182
    %v3442 = vpack.c.b16 %v3197, %v3190
    %v3443 = vpack.c.b16 %v3198, %v3191
    %v3444 = vpack.c.b16 %v3199, %v3192
    %v3445 = vpack.c.b16 %v3200, %v3193
    %v3446 = vpack.c.b16 %v3201, %v3194
    %v3447 = vpack.c.b16 %v3202, %v3195
    %v3448 = vpack.c.b16 %v3203, %v3196
    %v3449 = vpack.c.b16 %v3211, %v3204
    %v3450 = vpack.c.b16 %v3212, %v3205
    %v3451 = vpack.c.b16 %v3213, %v3206
    %v3452 = vpack.c.b16 %v3214, %v3207
    %v3453 = vpack.c.b16 %v3215, %v3208
    %v3454 = vpack.c.b16 %v3216, %v3209
    %v3455 = vpack.c.b16 %v3217, %v3210
    %v3456 = vpack.c.b16 %v3225, %v3218
    %v3457 = vpack.c.b16 %v3226, %v3219
    %v3458 = vpack.c.b16 %v3227, %v3220
    %v3459 = vpack.c.b16 %v3228, %v3221
    %v3460 = vpack.c.b16 %v3229, %v3222
    %v3461 = vpack.c.b16 %v3230, %v3223
    %v3462 = vpack.c.b16 %v3231, %v3224
    %v3463 = vpack.c.b16 %v3239, %v3232
    %v3464 = vpack.c.b16 %v3240, %v3233
    %v3465 = vpack.c.b16 %v3241, %v3234
    %v3466 = vpack.c.b16 %v3242, %v3235
    %v3467 = vpack.c.b16 %v3243, %v3236
    %v3468 = vpack.c.b16 %v3244, %v3237
    %v3469 = vpack.c.b16 %v3245, %v3238
    %3694 = vmatprep.subr.bf16.mxu0 %v3296
    %3695 = vmatpush1.bf16.msra.mxu0 %v3295
    %3696 = vmatprep.subr.bf16.mxu0 %v3289
    %3697 = vmatpush1.bf16.msra.mxu0 %v3288
    %3698 = vmatprep.subr.bf16.mxu0 %v3282
    %3699 = vmatpush1.bf16.msra.mxu0 %v3281
    %3700 = vmatprep.subr.bf16.mxu0 %v3275
    %3701 = vmatpush1.bf16.msra.mxu0 %v3274
    %3702 = vmatprep.subr.bf16.mxu0 %v3268
    %3703 = vmatpush1.bf16.msra.mxu0 %v3267
    %3704 = vmatprep.subr.bf16.mxu0 %v3261
    %3705 = vmatpush1.bf16.msra.mxu0 %v3260
    %3706 = vmatprep.subr.bf16.mxu0 %v3254
    %3707 = vmatpush1.bf16.msra.mxu0 %v3253
    %3708 = vmatprep.subr.bf16.mxu0 %v3247
    %3709 = vmatpush1.bf16.msra.mxu0 %v3246
    %3710 = vmatprep.subr.bf16.mxu0 %v3352
    %3711 = vmatpush2.bf16.msra.mxu0 %v3351
    %3712 = vmatprep.subr.bf16.mxu0 %v3345
    %3713 = vmatpush2.bf16.msra.mxu0 %v3344
    %3714 = vmatprep.subr.bf16.mxu0 %v3338
    %3715 = vmatpush2.bf16.msra.mxu0 %v3337
    %3716 = vmatprep.subr.bf16.mxu0 %v3331
    %3717 = vmatpush2.bf16.msra.mxu0 %v3330
    %3718 = vmatprep.subr.bf16.mxu0 %v3324
    %3719 = vmatpush2.bf16.msra.mxu0 %v3323
    %3720 = vmatprep.subr.bf16.mxu0 %v3317
    %3721 = vmatpush2.bf16.msra.mxu0 %v3316
    %3722 = vmatprep.subr.bf16.mxu0 %v3310
    %3723 = vmatpush2.bf16.msra.mxu0 %v3309
    %3724 = vmatprep.subr.bf16.mxu0 %v3303
    %3725 = vmatpush2.bf16.msra.mxu0 %v3302
    %3726 = vmatprep.mubr.bf16.mxu0 %v2234
    %3727 = vmatmul.mubr.bf16.gmra.mxu0 %v2233
    %v3728 = vpop.f32.mrf.mxu0
    %v3729 = vadd.f32 %v2510, %v3728
    %v3730 = vpop.f32.mrf.mxu0
    %v3731 = vadd.f32 %v2514, %v3730
    %v3732 = vpop.f32.mrf.mxu0
    %v3733 = vadd.f32 %v2510, %v3732
    %v3734 = vpop.f32.mrf.mxu0
    %v3735 = vadd.f32 %v2514, %v3734
    %3736 = vmatprep.mubr.bf16.mxu0 %v2238
    %3737 = vmatmul.mubr.bf16.gmra.mxu0 %v2237
    %v3738 = vpop.f32.mrf.mxu0
    %v3739 = vadd.f32 %v2510, %v3738
    %v3740 = vpop.f32.mrf.mxu0
    %v3741 = vadd.f32 %v2514, %v3740
    %v3742 = vpop.f32.mrf.mxu0
    %v3743 = vadd.f32 %v2510, %v3742
    %v3744 = vpop.f32.mrf.mxu0
    %v3745 = vadd.f32 %v2514, %v3744
    %3746 = vmatprep.mubr.bf16.mxu0 %v2242
    %3747 = vmatmul.mubr.bf16.gmra.mxu0 %v2241
    %v3748 = vpop.f32.mrf.mxu0
    %v3749 = vadd.f32 %v2510, %v3748
    %v3750 = vpop.f32.mrf.mxu0
    %v3751 = vadd.f32 %v2514, %v3750
    %v3752 = vpop.f32.mrf.mxu0
    %v3753 = vadd.f32 %v2510, %v3752
    %v3754 = vpop.f32.mrf.mxu0
    %v3755 = vadd.f32 %v2514, %v3754
    %3756 = vmatprep.mubr.bf16.mxu0 %v2246
    %3757 = vmatmul.mubr.bf16.gmra.mxu0 %v2245
    %v3758 = vpop.f32.mrf.mxu0
    %v3759 = vadd.f32 %v2510, %v3758
    %v3760 = vpop.f32.mrf.mxu0
    %v3761 = vadd.f32 %v2514, %v3760
    %v3762 = vpop.f32.mrf.mxu0
    %v3763 = vadd.f32 %v2510, %v3762
    %v3764 = vpop.f32.mrf.mxu0
    %v3765 = vadd.f32 %v2514, %v3764
    %3766 = vdwg.mxu0
    %3767 = vmatprep.subr.bf16.mxu0 %v3408
    %3768 = vmatpush1.bf16.msra.mxu0 %v3407
    %3769 = vmatprep.subr.bf16.mxu0 %v3401
    %3770 = vmatpush1.bf16.msra.mxu0 %v3400
    %3771 = vmatprep.subr.bf16.mxu0 %v3394
    %3772 = vmatpush1.bf16.msra.mxu0 %v3393
    %3773 = vmatprep.subr.bf16.mxu0 %v3387
    %3774 = vmatpush1.bf16.msra.mxu0 %v3386
    %3775 = vmatprep.subr.bf16.mxu0 %v3380
    %3776 = vmatpush1.bf16.msra.mxu0 %v3379
    %3777 = vmatprep.subr.bf16.mxu0 %v3373
    %3778 = vmatpush1.bf16.msra.mxu0 %v3372
    %3779 = vmatprep.subr.bf16.mxu0 %v3366
    %3780 = vmatpush1.bf16.msra.mxu0 %v3365
    %3781 = vmatprep.subr.bf16.mxu0 %v3359
    %3782 = vmatpush1.bf16.msra.mxu0 %v3358
    %3783 = vmatprep.subr.bf16.mxu0 %v3464
    %3784 = vmatpush2.bf16.msra.mxu0 %v3463
    %3785 = vmatprep.subr.bf16.mxu0 %v3457
    %3786 = vmatpush2.bf16.msra.mxu0 %v3456
    %3787 = vmatprep.subr.bf16.mxu0 %v3450
    %3788 = vmatpush2.bf16.msra.mxu0 %v3449
    %3789 = vmatprep.subr.bf16.mxu0 %v3443
    %3790 = vmatpush2.bf16.msra.mxu0 %v3442
    %3791 = vmatprep.subr.bf16.mxu0 %v3436
    %3792 = vmatpush2.bf16.msra.mxu0 %v3435
    %3793 = vmatprep.subr.bf16.mxu0 %v3429
    %3794 = vmatpush2.bf16.msra.mxu0 %v3428
    %3795 = vmatprep.subr.bf16.mxu0 %v3422
    %3796 = vmatpush2.bf16.msra.mxu0 %v3421
    %3797 = vmatprep.subr.bf16.mxu0 %v3415
    %3798 = vmatpush2.bf16.msra.mxu0 %v3414
    %3799 = vmatprep.mubr.bf16.mxu0 %v2236
    %3800 = vmatmul.mubr.bf16.gmra.mxu0 %v2235
    %v3801 = vpop.f32.mrf.mxu0
    %v3802 = vadd.f32 %v3729, %v3801
    %v3803 = vpop.f32.mrf.mxu0
    %v3804 = vadd.f32 %v3731, %v3803
    %v3805 = vpop.f32.mrf.mxu0
    %v3806 = vadd.f32 %v3733, %v3805
    %v3807 = vpop.f32.mrf.mxu0
    %v3808 = vadd.f32 %v3735, %v3807
    %3809 = vmatprep.mubr.bf16.mxu0 %v2240
    %3810 = vmatmul.mubr.bf16.gmra.mxu0 %v2239
    %v3811 = vpop.f32.mrf.mxu0
    %v3812 = vadd.f32 %v3739, %v3811
    %v3813 = vpop.f32.mrf.mxu0
    %v3814 = vadd.f32 %v3741, %v3813
    %v3815 = vpop.f32.mrf.mxu0
    %v3816 = vadd.f32 %v3743, %v3815
    %v3817 = vpop.f32.mrf.mxu0
    %v3818 = vadd.f32 %v3745, %v3817
    %3819 = vmatprep.mubr.bf16.mxu0 %v2244
    %3820 = vmatmul.mubr.bf16.gmra.mxu0 %v2243
    %v3821 = vpop.f32.mrf.mxu0
    %v3822 = vadd.f32 %v3749, %v3821
    %v3823 = vpop.f32.mrf.mxu0
    %v3824 = vadd.f32 %v3751, %v3823
    %v3825 = vpop.f32.mrf.mxu0
    %v3826 = vadd.f32 %v3753, %v3825
    %v3827 = vpop.f32.mrf.mxu0
    %v3828 = vadd.f32 %v3755, %v3827
    %3829 = vmatprep.mubr.bf16.mxu0 %v2248
    %3830 = vmatmul.mubr.bf16.gmra.mxu0 %v2247
    %v3831 = vpop.f32.mrf.mxu0
    %v3832 = vadd.f32 %v3759, %v3831
    %v3833 = vpop.f32.mrf.mxu0
    %v3834 = vadd.f32 %v3761, %v3833
    %v3835 = vpop.f32.mrf.mxu0
    %v3836 = vadd.f32 %v3763, %v3835
    %v3837 = vpop.f32.mrf.mxu0
    %v3838 = vadd.f32 %v3765, %v3837
    %3839 = vdwg.mxu0
    %3840 = vmatprep.subr.bf16.mxu0 %v3298
    %3841 = vmatpush1.bf16.msra.mxu0 %v3297
    %3842 = vmatprep.subr.bf16.mxu0 %v3291
    %3843 = vmatpush1.bf16.msra.mxu0 %v3290
    %3844 = vmatprep.subr.bf16.mxu0 %v3284
    %3845 = vmatpush1.bf16.msra.mxu0 %v3283
    %3846 = vmatprep.subr.bf16.mxu0 %v3277
    %3847 = vmatpush1.bf16.msra.mxu0 %v3276
    %3848 = vmatprep.subr.bf16.mxu0 %v3270
    %3849 = vmatpush1.bf16.msra.mxu0 %v3269
    %3850 = vmatprep.subr.bf16.mxu0 %v3263
    %3851 = vmatpush1.bf16.msra.mxu0 %v3262
    %3852 = vmatprep.subr.bf16.mxu0 %v3256
    %3853 = vmatpush1.bf16.msra.mxu0 %v3255
    %3854 = vmatprep.subr.bf16.mxu0 %v3249
    %3855 = vmatpush1.bf16.msra.mxu0 %v3248
    %3856 = vmatprep.subr.bf16.mxu0 %v3354
    %3857 = vmatpush2.bf16.msra.mxu0 %v3353
    %3858 = vmatprep.subr.bf16.mxu0 %v3347
    %3859 = vmatpush2.bf16.msra.mxu0 %v3346
    %3860 = vmatprep.subr.bf16.mxu0 %v3340
    %3861 = vmatpush2.bf16.msra.mxu0 %v3339
    %3862 = vmatprep.subr.bf16.mxu0 %v3333
    %3863 = vmatpush2.bf16.msra.mxu0 %v3332
    %3864 = vmatprep.subr.bf16.mxu0 %v3326
    %3865 = vmatpush2.bf16.msra.mxu0 %v3325
    %3866 = vmatprep.subr.bf16.mxu0 %v3319
    %3867 = vmatpush2.bf16.msra.mxu0 %v3318
    %3868 = vmatprep.subr.bf16.mxu0 %v3312
    %3869 = vmatpush2.bf16.msra.mxu0 %v3311
    %3870 = vmatprep.subr.bf16.mxu0 %v3305
    %3871 = vmatpush2.bf16.msra.mxu0 %v3304
    %3872 = vmatprep.mubr.bf16.mxu0 %v2234
    %3873 = vmatmul.mubr.bf16.gmra.mxu0 %v2233
    %v3874 = vpop.f32.mrf.mxu0
    %v3875 = vadd.f32 %v2518, %v3874
    %v3876 = vpop.f32.mrf.mxu0
    %v3877 = vadd.f32 %v2522, %v3876
    %v3878 = vpop.f32.mrf.mxu0
    %v3879 = vadd.f32 %v2518, %v3878
    %v3880 = vpop.f32.mrf.mxu0
    %v3881 = vadd.f32 %v2522, %v3880
    %3882 = vmatprep.mubr.bf16.mxu0 %v2238
    %3883 = vmatmul.mubr.bf16.gmra.mxu0 %v2237
    %v3884 = vpop.f32.mrf.mxu0
    %v3885 = vadd.f32 %v2518, %v3884
    %v3886 = vpop.f32.mrf.mxu0
    %v3887 = vadd.f32 %v2522, %v3886
    %v3888 = vpop.f32.mrf.mxu0
    %v3889 = vadd.f32 %v2518, %v3888
    %v3890 = vpop.f32.mrf.mxu0
    %v3891 = vadd.f32 %v2522, %v3890
    %3892 = vmatprep.mubr.bf16.mxu0 %v2242
    %3893 = vmatmul.mubr.bf16.gmra.mxu0 %v2241
    %v3894 = vpop.f32.mrf.mxu0
    %v3895 = vadd.f32 %v2518, %v3894
    %v3896 = vpop.f32.mrf.mxu0
    %v3897 = vadd.f32 %v2522, %v3896
    %v3898 = vpop.f32.mrf.mxu0
    %v3899 = vadd.f32 %v2518, %v3898
    %v3900 = vpop.f32.mrf.mxu0
    %v3901 = vadd.f32 %v2522, %v3900
    %3902 = vmatprep.mubr.bf16.mxu0 %v2246
    %3903 = vmatmul.mubr.bf16.gmra.mxu0 %v2245
    %v3904 = vpop.f32.mrf.mxu0
    %v3905 = vadd.f32 %v2518, %v3904
    %v3906 = vpop.f32.mrf.mxu0
    %v3907 = vadd.f32 %v2522, %v3906
    %v3908 = vpop.f32.mrf.mxu0
    %v3909 = vadd.f32 %v2518, %v3908
    %v3910 = vpop.f32.mrf.mxu0
    %v3911 = vadd.f32 %v2522, %v3910
    %3912 = vdwg.mxu0
    %3913 = vmatprep.subr.bf16.mxu0 %v3410
    %3914 = vmatpush1.bf16.msra.mxu0 %v3409
    %3915 = vmatprep.subr.bf16.mxu0 %v3403
    %3916 = vmatpush1.bf16.msra.mxu0 %v3402
    %3917 = vmatprep.subr.bf16.mxu0 %v3396
    %3918 = vmatpush1.bf16.msra.mxu0 %v3395
    %3919 = vmatprep.subr.bf16.mxu0 %v3389
    %3920 = vmatpush1.bf16.msra.mxu0 %v3388
    %3921 = vmatprep.subr.bf16.mxu0 %v3382
    %3922 = vmatpush1.bf16.msra.mxu0 %v3381
    %3923 = vmatprep.subr.bf16.mxu0 %v3375
    %3924 = vmatpush1.bf16.msra.mxu0 %v3374
    %3925 = vmatprep.subr.bf16.mxu0 %v3368
    %3926 = vmatpush1.bf16.msra.mxu0 %v3367
    %3927 = vmatprep.subr.bf16.mxu0 %v3361
    %3928 = vmatpush1.bf16.msra.mxu0 %v3360
    %3929 = vmatprep.subr.bf16.mxu0 %v3466
    %3930 = vmatpush2.bf16.msra.mxu0 %v3465
    %3931 = vmatprep.subr.bf16.mxu0 %v3459
    %3932 = vmatpush2.bf16.msra.mxu0 %v3458
    %3933 = vmatprep.subr.bf16.mxu0 %v3452
    %3934 = vmatpush2.bf16.msra.mxu0 %v3451
    %3935 = vmatprep.subr.bf16.mxu0 %v3445
    %3936 = vmatpush2.bf16.msra.mxu0 %v3444
    %3937 = vmatprep.subr.bf16.mxu0 %v3438
    %3938 = vmatpush2.bf16.msra.mxu0 %v3437
    %3939 = vmatprep.subr.bf16.mxu0 %v3431
    %3940 = vmatpush2.bf16.msra.mxu0 %v3430
    %3941 = vmatprep.subr.bf16.mxu0 %v3424
    %3942 = vmatpush2.bf16.msra.mxu0 %v3423
    %3943 = vmatprep.subr.bf16.mxu0 %v3417
    %3944 = vmatpush2.bf16.msra.mxu0 %v3416
    %3945 = vmatprep.mubr.bf16.mxu0 %v2236
    %3946 = vmatmul.mubr.bf16.gmra.mxu0 %v2235
    %v3947 = vpop.f32.mrf.mxu0
    %v3948 = vadd.f32 %v3875, %v3947
    %v3949 = vpop.f32.mrf.mxu0
    %v3950 = vadd.f32 %v3877, %v3949
    %v3951 = vpop.f32.mrf.mxu0
    %v3952 = vadd.f32 %v3879, %v3951
    %v3953 = vpop.f32.mrf.mxu0
    %v3954 = vadd.f32 %v3881, %v3953
    %3955 = vmatprep.mubr.bf16.mxu0 %v2240
    %3956 = vmatmul.mubr.bf16.gmra.mxu0 %v2239
    %v3957 = vpop.f32.mrf.mxu0
    %v3958 = vadd.f32 %v3885, %v3957
    %v3959 = vpop.f32.mrf.mxu0
    %v3960 = vadd.f32 %v3887, %v3959
    %v3961 = vpop.f32.mrf.mxu0
    %v3962 = vadd.f32 %v3889, %v3961
    %v3963 = vpop.f32.mrf.mxu0
    %v3964 = vadd.f32 %v3891, %v3963
    %3965 = vmatprep.mubr.bf16.mxu0 %v2244
    %3966 = vmatmul.mubr.bf16.gmra.mxu0 %v2243
    %v3967 = vpop.f32.mrf.mxu0
    %v3968 = vadd.f32 %v3895, %v3967
    %v3969 = vpop.f32.mrf.mxu0
    %v3970 = vadd.f32 %v3897, %v3969
    %v3971 = vpop.f32.mrf.mxu0
    %v3972 = vadd.f32 %v3899, %v3971
    %v3973 = vpop.f32.mrf.mxu0
    %v3974 = vadd.f32 %v3901, %v3973
    %3975 = vmatprep.mubr.bf16.mxu0 %v2248
    %3976 = vmatmul.mubr.bf16.gmra.mxu0 %v2247
    %v3977 = vpop.f32.mrf.mxu0
    %v3978 = vadd.f32 %v3905, %v3977
    %v3979 = vpop.f32.mrf.mxu0
    %v3980 = vadd.f32 %v3907, %v3979
    %v3981 = vpop.f32.mrf.mxu0
    %v3982 = vadd.f32 %v3909, %v3981
    %v3983 = vpop.f32.mrf.mxu0
    %v3984 = vadd.f32 %v3911, %v3983
    %3985 = vdwg.mxu0
    %3986 = vmatprep.subr.bf16.mxu0 %v3300
    %3987 = vmatpush1.bf16.msra.mxu0 %v3299
    %3988 = vmatprep.subr.bf16.mxu0 %v3293
    %3989 = vmatpush1.bf16.msra.mxu0 %v3292
    %3990 = vmatprep.subr.bf16.mxu0 %v3286
    %3991 = vmatpush1.bf16.msra.mxu0 %v3285
    %3992 = vmatprep.subr.bf16.mxu0 %v3279
    %3993 = vmatpush1.bf16.msra.mxu0 %v3278
    %3994 = vmatprep.subr.bf16.mxu0 %v3272
    %3995 = vmatpush1.bf16.msra.mxu0 %v3271
    %3996 = vmatprep.subr.bf16.mxu0 %v3265
    %3997 = vmatpush1.bf16.msra.mxu0 %v3264
    %3998 = vmatprep.subr.bf16.mxu0 %v3258
    %3999 = vmatpush1.bf16.msra.mxu0 %v3257
    %4000 = vmatprep.subr.bf16.mxu0 %v3251
    %4001 = vmatpush1.bf16.msra.mxu0 %v3250
    %4002 = vmatprep.subr.bf16.mxu0 %v3356
    %4003 = vmatpush2.bf16.msra.mxu0 %v3355
    %4004 = vmatprep.subr.bf16.mxu0 %v3349
    %4005 = vmatpush2.bf16.msra.mxu0 %v3348
    %4006 = vmatprep.subr.bf16.mxu0 %v3342
    %4007 = vmatpush2.bf16.msra.mxu0 %v3341
    %4008 = vmatprep.subr.bf16.mxu0 %v3335
    %4009 = vmatpush2.bf16.msra.mxu0 %v3334
    %4010 = vmatprep.subr.bf16.mxu0 %v3328
    %4011 = vmatpush2.bf16.msra.mxu0 %v3327
    %4012 = vmatprep.subr.bf16.mxu0 %v3321
    %4013 = vmatpush2.bf16.msra.mxu0 %v3320
    %4014 = vmatprep.subr.bf16.mxu0 %v3314
    %4015 = vmatpush2.bf16.msra.mxu0 %v3313
    %4016 = vmatprep.subr.bf16.mxu0 %v3307
    %4017 = vmatpush2.bf16.msra.mxu0 %v3306
    %4018 = vmatprep.mubr.bf16.mxu0 %v2234
    %4019 = vmatmul.mubr.bf16.gmra.mxu0 %v2233
    %v4020 = vpop.f32.mrf.mxu0
    %v4021 = vadd.f32 %v2526, %v4020
    %v4022 = vpop.f32.mrf.mxu0
    %v4023 = vadd.f32 %v2530, %v4022
    %v4024 = vpop.f32.mrf.mxu0
    %v4025 = vadd.f32 %v2526, %v4024
    %v4026 = vpop.f32.mrf.mxu0
    %v4027 = vadd.f32 %v2530, %v4026
    %4028 = vmatprep.mubr.bf16.mxu0 %v2238
    %4029 = vmatmul.mubr.bf16.gmra.mxu0 %v2237
    %v4030 = vpop.f32.mrf.mxu0
    %v4031 = vadd.f32 %v2526, %v4030
    %v4032 = vpop.f32.mrf.mxu0
    %v4033 = vadd.f32 %v2530, %v4032
    %v4034 = vpop.f32.mrf.mxu0
    %v4035 = vadd.f32 %v2526, %v4034
    %v4036 = vpop.f32.mrf.mxu0
    %v4037 = vadd.f32 %v2530, %v4036
    %4038 = vmatprep.mubr.bf16.mxu0 %v2242
    %4039 = vmatmul.mubr.bf16.gmra.mxu0 %v2241
    %v4040 = vpop.f32.mrf.mxu0
    %v4041 = vadd.f32 %v2526, %v4040
    %v4042 = vpop.f32.mrf.mxu0
    %v4043 = vadd.f32 %v2530, %v4042
    %v4044 = vpop.f32.mrf.mxu0
    %v4045 = vadd.f32 %v2526, %v4044
    %v4046 = vpop.f32.mrf.mxu0
    %v4047 = vadd.f32 %v2530, %v4046
    %4048 = vmatprep.mubr.bf16.mxu0 %v2246
    %4049 = vmatmul.mubr.bf16.gmra.mxu0 %v2245
    %v4050 = vpop.f32.mrf.mxu0
    %v4051 = vadd.f32 %v2526, %v4050
    %v4052 = vpop.f32.mrf.mxu0
    %v4053 = vadd.f32 %v2530, %v4052
    %v4054 = vpop.f32.mrf.mxu0
    %v4055 = vadd.f32 %v2526, %v4054
    %v4056 = vpop.f32.mrf.mxu0
    %v4057 = vadd.f32 %v2530, %v4056
    %4058 = vdwg.mxu0
    %4059 = vmatprep.subr.bf16.mxu0 %v3412
    %4060 = vmatpush1.bf16.msra.mxu0 %v3411
    %4061 = vmatprep.subr.bf16.mxu0 %v3405
    %4062 = vmatpush1.bf16.msra.mxu0 %v3404
    %4063 = vmatprep.subr.bf16.mxu0 %v3398
    %4064 = vmatpush1.bf16.msra.mxu0 %v3397
    %4065 = vmatprep.subr.bf16.mxu0 %v3391
    %4066 = vmatpush1.bf16.msra.mxu0 %v3390
    %4067 = vmatprep.subr.bf16.mxu0 %v3384
    %4068 = vmatpush1.bf16.msra.mxu0 %v3383
    %4069 = vmatprep.subr.bf16.mxu0 %v3377
    %4070 = vmatpush1.bf16.msra.mxu0 %v3376
    %4071 = vmatprep.subr.bf16.mxu0 %v3370
    %4072 = vmatpush1.bf16.msra.mxu0 %v3369
    %4073 = vmatprep.subr.bf16.mxu0 %v3363
    %4074 = vmatpush1.bf16.msra.mxu0 %v3362
    %4075 = vmatprep.subr.bf16.mxu0 %v3468
    %4076 = vmatpush2.bf16.msra.mxu0 %v3467
    %4077 = vmatprep.subr.bf16.mxu0 %v3461
    %4078 = vmatpush2.bf16.msra.mxu0 %v3460
    %4079 = vmatprep.subr.bf16.mxu0 %v3454
    %4080 = vmatpush2.bf16.msra.mxu0 %v3453
    %4081 = vmatprep.subr.bf16.mxu0 %v3447
    %4082 = vmatpush2.bf16.msra.mxu0 %v3446
    %4083 = vmatprep.subr.bf16.mxu0 %v3440
    %4084 = vmatpush2.bf16.msra.mxu0 %v3439
    %4085 = vmatprep.subr.bf16.mxu0 %v3433
    %4086 = vmatpush2.bf16.msra.mxu0 %v3432
    %4087 = vmatprep.subr.bf16.mxu0 %v3426
    %4088 = vmatpush2.bf16.msra.mxu0 %v3425
    %4089 = vmatprep.subr.bf16.mxu0 %v3419
    %4090 = vmatpush2.bf16.msra.mxu0 %v3418
    %4091 = vmatprep.mubr.bf16.mxu0 %v2236
    %4092 = vmatmul.mubr.bf16.gmra.mxu0 %v2235
    %v4093 = vpop.f32.mrf.mxu0
    %v4094 = vadd.f32 %v4021, %v4093
    %v4095 = vpop.f32.mrf.mxu0
    %v4096 = vadd.f32 %v4023, %v4095
    %v4097 = vpop.f32.mrf.mxu0
    %v4098 = vadd.f32 %v4025, %v4097
    %v4099 = vpop.f32.mrf.mxu0
    %v4100 = vadd.f32 %v4027, %v4099
    %4101 = vmatprep.mubr.bf16.mxu0 %v2240
    %4102 = vmatmul.mubr.bf16.gmra.mxu0 %v2239
    %v4103 = vpop.f32.mrf.mxu0
    %v4104 = vadd.f32 %v4031, %v4103
    %v4105 = vpop.f32.mrf.mxu0
    %v4106 = vadd.f32 %v4033, %v4105
    %v4107 = vpop.f32.mrf.mxu0
    %v4108 = vadd.f32 %v4035, %v4107
    %v4109 = vpop.f32.mrf.mxu0
    %v4110 = vadd.f32 %v4037, %v4109
    %4111 = vmatprep.mubr.bf16.mxu0 %v2244
    %4112 = vmatmul.mubr.bf16.gmra.mxu0 %v2243
    %v4113 = vpop.f32.mrf.mxu0
    %v4114 = vadd.f32 %v4041, %v4113
    %v4115 = vpop.f32.mrf.mxu0
    %v4116 = vadd.f32 %v4043, %v4115
    %v4117 = vpop.f32.mrf.mxu0
    %v4118 = vadd.f32 %v4045, %v4117
    %v4119 = vpop.f32.mrf.mxu0
    %v4120 = vadd.f32 %v4047, %v4119
    %4121 = vmatprep.mubr.bf16.mxu0 %v2248
    %4122 = vmatmul.mubr.bf16.gmra.mxu0 %v2247
    %v4123 = vpop.f32.mrf.mxu0
    %v4124 = vadd.f32 %v4051, %v4123
    %v4125 = vpop.f32.mrf.mxu0
    %v4126 = vadd.f32 %v4053, %v4125
    %v4127 = vpop.f32.mrf.mxu0
    %v4128 = vadd.f32 %v4055, %v4127
    %v4129 = vpop.f32.mrf.mxu0
    %v4130 = vadd.f32 %v4057, %v4129
    %4131 = vdwg.mxu0
    %4132 = vmatprep.subr.bf16.mxu0 0
    %4133 = vmatpush1.bf16.msra.mxu0 %v3301
    %4134 = vmatprep.subr.bf16.mxu0 0
    %4135 = vmatpush1.bf16.msra.mxu0 %v3294
    %4136 = vmatprep.subr.bf16.mxu0 0
    %4137 = vmatpush1.bf16.msra.mxu0 %v3287
    %4138 = vmatprep.subr.bf16.mxu0 0
    %4139 = vmatpush1.bf16.msra.mxu0 %v3280
    %4140 = vmatprep.subr.bf16.mxu0 0
    %4141 = vmatpush1.bf16.msra.mxu0 %v3273
    %4142 = vmatprep.subr.bf16.mxu0 0
    %4143 = vmatpush1.bf16.msra.mxu0 %v3266
    %4144 = vmatprep.subr.bf16.mxu0 0
    %4145 = vmatpush1.bf16.msra.mxu0 %v3259
    %4146 = vmatprep.subr.bf16.mxu0 0
    %4147 = vmatpush1.bf16.msra.mxu0 %v3252
    %4148 = vmatprep.subr.bf16.mxu0 0
    %4149 = vmatpush2.bf16.msra.mxu0 %v3357
    %4150 = vmatprep.subr.bf16.mxu0 0
    %4151 = vmatpush2.bf16.msra.mxu0 %v3350
    %4152 = vmatprep.subr.bf16.mxu0 0
    %4153 = vmatpush2.bf16.msra.mxu0 %v3343
    %4154 = vmatprep.subr.bf16.mxu0 0
    %4155 = vmatpush2.bf16.msra.mxu0 %v3336
    %4156 = vmatprep.subr.bf16.mxu0 0
    %4157 = vmatpush2.bf16.msra.mxu0 %v3329
    %4158 = vmatprep.subr.bf16.mxu0 0
    %4159 = vmatpush2.bf16.msra.mxu0 %v3322
    %4160 = vmatprep.subr.bf16.mxu0 0
    %4161 = vmatpush2.bf16.msra.mxu0 %v3315
    %4162 = vmatprep.subr.bf16.mxu0 0
    %4163 = vmatpush2.bf16.msra.mxu0 %v3308
    %4164 = vmatprep.mubr.bf16.mxu0 %v2234
    %4165 = vmatmul.mubr.bf16.gmra.mxu0 %v2233
    %v4166 = vpop.f32.mrf.mxu0
    %v4167 = vadd.f32 %v2534, %v4166
    %v4168 = vpop.f32.mrf.mxu0
    %v4169 = vpop.f32.mrf.mxu0
    %v4170 = vadd.f32 %v2534, %v4169
    %v4171 = vpop.f32.mrf.mxu0
    %4172 = vmatprep.mubr.bf16.mxu0 %v2238
    %4173 = vmatmul.mubr.bf16.gmra.mxu0 %v2237
    %v4174 = vpop.f32.mrf.mxu0
    %v4175 = vadd.f32 %v2534, %v4174
    %v4176 = vpop.f32.mrf.mxu0
    %v4177 = vpop.f32.mrf.mxu0
    %v4178 = vadd.f32 %v2534, %v4177
    %v4179 = vpop.f32.mrf.mxu0
    %4180 = vmatprep.mubr.bf16.mxu0 %v2242
    %4181 = vmatmul.mubr.bf16.gmra.mxu0 %v2241
    %v4182 = vpop.f32.mrf.mxu0
    %v4183 = vadd.f32 %v2534, %v4182
    %v4184 = vpop.f32.mrf.mxu0
    %v4185 = vpop.f32.mrf.mxu0
    %v4186 = vadd.f32 %v2534, %v4185
    %v4187 = vpop.f32.mrf.mxu0
    %4188 = vmatprep.mubr.bf16.mxu0 %v2246
    %4189 = vmatmul.mubr.bf16.gmra.mxu0 %v2245
    %v4190 = vpop.f32.mrf.mxu0
    %v4191 = vadd.f32 %v2534, %v4190
    %v4192 = vpop.f32.mrf.mxu0
    %v4193 = vpop.f32.mrf.mxu0
    %v4194 = vadd.f32 %v2534, %v4193
    %v4195 = vpop.f32.mrf.mxu0
    %4196 = vdwg.mxu0
    %4197 = vmatprep.subr.bf16.mxu0 0
    %4198 = vmatpush1.bf16.msra.mxu0 %v3413
    %4199 = vmatprep.subr.bf16.mxu0 0
    %4200 = vmatpush1.bf16.msra.mxu0 %v3406
    %4201 = vmatprep.subr.bf16.mxu0 0
    %4202 = vmatpush1.bf16.msra.mxu0 %v3399
    %4203 = vmatprep.subr.bf16.mxu0 0
    %4204 = vmatpush1.bf16.msra.mxu0 %v3392
    %4205 = vmatprep.subr.bf16.mxu0 0
    %4206 = vmatpush1.bf16.msra.mxu0 %v3385
    %4207 = vmatprep.subr.bf16.mxu0 0
    %4208 = vmatpush1.bf16.msra.mxu0 %v3378
    %4209 = vmatprep.subr.bf16.mxu0 0
    %4210 = vmatpush1.bf16.msra.mxu0 %v3371
    %4211 = vmatprep.subr.bf16.mxu0 0
    %4212 = vmatpush1.bf16.msra.mxu0 %v3364
    %4213 = vmatprep.subr.bf16.mxu0 0
    %4214 = vmatpush2.bf16.msra.mxu0 %v3469
    %4215 = vmatprep.subr.bf16.mxu0 0
    %4216 = vmatpush2.bf16.msra.mxu0 %v3462
    %4217 = vmatprep.subr.bf16.mxu0 0
    %4218 = vmatpush2.bf16.msra.mxu0 %v3455
    %4219 = vmatprep.subr.bf16.mxu0 0
    %4220 = vmatpush2.bf16.msra.mxu0 %v3448
    %4221 = vmatprep.subr.bf16.mxu0 0
    %4222 = vmatpush2.bf16.msra.mxu0 %v3441
    %4223 = vmatprep.subr.bf16.mxu0 0
    %4224 = vmatpush2.bf16.msra.mxu0 %v3434
    %4225 = vmatprep.subr.bf16.mxu0 0
    %4226 = vmatpush2.bf16.msra.mxu0 %v3427
    %4227 = vmatprep.subr.bf16.mxu0 0
    %4228 = vmatpush2.bf16.msra.mxu0 %v3420
    %4229 = vmatprep.mubr.bf16.mxu0 %v2236
    %4230 = vmatmul.mubr.bf16.gmra.mxu0 %v2235
    %v4231 = vpop.f32.mrf.mxu0
    %v4232 = vadd.f32 %v4167, %v4231
    %v4233 = vpop.f32.mrf.mxu0
    %v4234 = vpop.f32.mrf.mxu0
    %v4235 = vadd.f32 %v4170, %v4234
    %v4236 = vpop.f32.mrf.mxu0
    %4237 = vmatprep.mubr.bf16.mxu0 %v2240
    %4238 = vmatmul.mubr.bf16.gmra.mxu0 %v2239
    %v4239 = vpop.f32.mrf.mxu0
    %v4240 = vadd.f32 %v4175, %v4239
    %v4241 = vpop.f32.mrf.mxu0
    %v4242 = vpop.f32.mrf.mxu0
    %v4243 = vadd.f32 %v4178, %v4242
    %v4244 = vpop.f32.mrf.mxu0
    %4245 = vmatprep.mubr.bf16.mxu0 %v2244
    %4246 = vmatmul.mubr.bf16.gmra.mxu0 %v2243
    %v4247 = vpop.f32.mrf.mxu0
    %v4248 = vadd.f32 %v4183, %v4247
    %v4249 = vpop.f32.mrf.mxu0
    %v4250 = vpop.f32.mrf.mxu0
    %v4251 = vadd.f32 %v4186, %v4250
    %v4252 = vpop.f32.mrf.mxu0
    %4253 = vmatprep.mubr.bf16.mxu0 %v2248
    %4254 = vmatmul.mubr.bf16.gmra.mxu0 %v2247
    %v4255 = vpop.f32.mrf.mxu0
    %v4256 = vadd.f32 %v4191, %v4255
    %v4257 = vpop.f32.mrf.mxu0
    %v4258 = vpop.f32.mrf.mxu0
    %v4259 = vadd.f32 %v4194, %v4258
    %v4260 = vpop.f32.mrf.mxu0
    %4261 = vdwg.mxu0
    %v4262 = vxor.u32 %v3802, 2147483648
    %v4263 = vxor.u32 %v3804, 2147483648
    %v4264 = vxor.u32 %v3948, 2147483648
    %v4265 = vxor.u32 %v3950, 2147483648
    %v4266 = vxor.u32 %v4094, 2147483648
    %v4267 = vxor.u32 %v4096, 2147483648
    %v4268 = vxor.u32 %v4232, 2147483648
    %v4269 = vxor.u32 %v3806, 2147483648
    %v4270 = vxor.u32 %v3808, 2147483648
    %v4271 = vxor.u32 %v3952, 2147483648
    %v4272 = vxor.u32 %v3954, 2147483648
    %v4273 = vxor.u32 %v4098, 2147483648
    %v4274 = vxor.u32 %v4100, 2147483648
    %v4275 = vxor.u32 %v4235, 2147483648
    %v4276 = vxor.u32 %v3812, 2147483648
    %v4277 = vxor.u32 %v3814, 2147483648
    %v4278 = vxor.u32 %v3958, 2147483648
    %v4279 = vxor.u32 %v3960, 2147483648
    %v4280 = vxor.u32 %v4104, 2147483648
    %v4281 = vxor.u32 %v4106, 2147483648
    %v4282 = vxor.u32 %v4240, 2147483648
    %v4283 = vxor.u32 %v3816, 2147483648
    %v4284 = vxor.u32 %v3818, 2147483648
    %v4285 = vxor.u32 %v3962, 2147483648
    %v4286 = vxor.u32 %v3964, 2147483648
    %v4287 = vxor.u32 %v4108, 2147483648
    %v4288 = vxor.u32 %v4110, 2147483648
    %v4289 = vxor.u32 %v4243, 2147483648
    %v4290 = vxor.u32 %v3822, 2147483648
    %v4291 = vxor.u32 %v3824, 2147483648
    %v4292 = vxor.u32 %v3968, 2147483648
    %v4293 = vxor.u32 %v3970, 2147483648
    %v4294 = vxor.u32 %v4114, 2147483648
    %v4295 = vxor.u32 %v4116, 2147483648
    %v4296 = vxor.u32 %v4248, 2147483648
    %v4297 = vxor.u32 %v3826, 2147483648
    %v4298 = vxor.u32 %v3828, 2147483648
    %v4299 = vxor.u32 %v3972, 2147483648
    %v4300 = vxor.u32 %v3974, 2147483648
    %v4301 = vxor.u32 %v4118, 2147483648
    %v4302 = vxor.u32 %v4120, 2147483648
    %v4303 = vxor.u32 %v4251, 2147483648
    %v4304 = vxor.u32 %v3832, 2147483648
    %v4305 = vxor.u32 %v3834, 2147483648
    %v4306 = vxor.u32 %v3978, 2147483648
    %v4307 = vxor.u32 %v3980, 2147483648
    %v4308 = vxor.u32 %v4124, 2147483648
    %v4309 = vxor.u32 %v4126, 2147483648
    %v4310 = vxor.u32 %v4256, 2147483648
    %v4311 = vxor.u32 %v3836, 2147483648
    %v4312 = vxor.u32 %v3838, 2147483648
    %v4313 = vxor.u32 %v3982, 2147483648
    %v4314 = vxor.u32 %v3984, 2147483648
    %v4315 = vxor.u32 %v4128, 2147483648
    %v4316 = vxor.u32 %v4130, 2147483648
    %v4317 = vxor.u32 %v4259, 2147483648
    %v4318 = vmul.f32 %v4262, 1.442695
    %v4319 = vpow.pop %v4318
    %v4320 = vmul.f32 %v4263, 1.442695
    %v4321 = vpow.pop %v4320
    %v4322 = vmul.f32 %v4264, 1.442695
    %v4323 = vpow.pop %v4322
    %v4324 = vmul.f32 %v4265, 1.442695
    %v4325 = vpow.pop %v4324
    %v4326 = vmul.f32 %v4266, 1.442695
    %v4327 = vpow.pop %v4326
    %v4328 = vmul.f32 %v4267, 1.442695
    %v4329 = vpow.pop %v4328
    %v4330 = vmul.f32 %v4268, 1.442695
    %v4331 = vpow.pop %v4330
    %v4332 = vmul.f32 %v4269, 1.442695
    %v4333 = vpow.pop %v4332
    %v4334 = vmul.f32 %v4270, 1.442695
    %v4335 = vpow.pop %v4334
    %v4336 = vmul.f32 %v4271, 1.442695
    %v4337 = vpow.pop %v4336
    %v4338 = vmul.f32 %v4272, 1.442695
    %v4339 = vpow.pop %v4338
    %v4340 = vmul.f32 %v4273, 1.442695
    %v4341 = vpow.pop %v4340
    %v4342 = vmul.f32 %v4274, 1.442695
    %v4343 = vpow.pop %v4342
    %v4344 = vmul.f32 %v4275, 1.442695
    %v4345 = vpow.pop %v4344
    %v4346 = vmul.f32 %v4276, 1.442695
    %v4347 = vpow.pop %v4346
    %v4348 = vmul.f32 %v4277, 1.442695
    %v4349 = vpow.pop %v4348
    %v4350 = vmul.f32 %v4278, 1.442695
    %v4351 = vpow.pop %v4350
    %v4352 = vmul.f32 %v4279, 1.442695
    %v4353 = vpow.pop %v4352
    %v4354 = vmul.f32 %v4280, 1.442695
    %v4355 = vpow.pop %v4354
    %v4356 = vmul.f32 %v4281, 1.442695
    %v4357 = vpow.pop %v4356
    %v4358 = vmul.f32 %v4282, 1.442695
    %v4359 = vpow.pop %v4358
    %v4360 = vmul.f32 %v4283, 1.442695
    %v4361 = vpow.pop %v4360
    %v4362 = vmul.f32 %v4284, 1.442695
    %v4363 = vpow.pop %v4362
    %v4364 = vmul.f32 %v4285, 1.442695
    %v4365 = vpow.pop %v4364
    %v4366 = vmul.f32 %v4286, 1.442695
    %v4367 = vpow.pop %v4366
    %v4368 = vmul.f32 %v4287, 1.442695
    %v4369 = vpow.pop %v4368
    %v4370 = vmul.f32 %v4288, 1.442695
    %v4371 = vpow.pop %v4370
    %v4372 = vmul.f32 %v4289, 1.442695
    %v4373 = vpow.pop %v4372
    %v4374 = vmul.f32 %v4290, 1.442695
    %v4375 = vpow.pop %v4374
    %v4376 = vmul.f32 %v4291, 1.442695
    %v4377 = vpow.pop %v4376
    %v4378 = vmul.f32 %v4292, 1.442695
    %v4379 = vpow.pop %v4378
    %v4380 = vmul.f32 %v4293, 1.442695
    %v4381 = vpow.pop %v4380
    %v4382 = vmul.f32 %v4294, 1.442695
    %v4383 = vpow.pop %v4382
    %v4384 = vmul.f32 %v4295, 1.442695
    %v4385 = vpow.pop %v4384
    %v4386 = vmul.f32 %v4296, 1.442695
    %v4387 = vpow.pop %v4386
    %v4388 = vmul.f32 %v4297, 1.442695
    %v4389 = vpow.pop %v4388
    %v4390 = vmul.f32 %v4298, 1.442695
    %v4391 = vpow.pop %v4390
    %v4392 = vmul.f32 %v4299, 1.442695
    %v4393 = vpow.pop %v4392
    %v4394 = vmul.f32 %v4300, 1.442695
    %v4395 = vpow.pop %v4394
    %v4396 = vmul.f32 %v4301, 1.442695
    %v4397 = vpow.pop %v4396
    %v4398 = vmul.f32 %v4302, 1.442695
    %v4399 = vpow.pop %v4398
    %v4400 = vmul.f32 %v4303, 1.442695
    %v4401 = vpow.pop %v4400
    %v4402 = vmul.f32 %v4304, 1.442695
    %v4403 = vpow.pop %v4402
    %v4404 = vmul.f32 %v4305, 1.442695
    %v4405 = vpow.pop %v4404
    %v4406 = vmul.f32 %v4306, 1.442695
    %v4407 = vpow.pop %v4406
    %v4408 = vmul.f32 %v4307, 1.442695
    %v4409 = vpow.pop %v4408
    %v4410 = vmul.f32 %v4308, 1.442695
    %v4411 = vpow.pop %v4410
    %v4412 = vmul.f32 %v4309, 1.442695
    %v4413 = vpow.pop %v4412
    %v4414 = vmul.f32 %v4310, 1.442695
    %v4415 = vpow.pop %v4414
    %v4416 = vmul.f32 %v4311, 1.442695
    %v4417 = vpow.pop %v4416
    %v4418 = vmul.f32 %v4312, 1.442695
    %v4419 = vpow.pop %v4418
    %v4420 = vmul.f32 %v4313, 1.442695
    %v4421 = vpow.pop %v4420
    %v4422 = vmul.f32 %v4314, 1.442695
    %v4423 = vpow.pop %v4422
    %v4424 = vmul.f32 %v4315, 1.442695
    %v4425 = vpow.pop %v4424
    %v4426 = vmul.f32 %v4316, 1.442695
    %v4427 = vpow.pop %v4426
    %v4428 = vmul.f32 %v4317, 1.442695
    %v4429 = vpow.pop %v4428
    %v4430 = vadd.f32 %v4319, 1.0
    %v4431 = vadd.f32 %v4321, 1.0
    %v4432 = vadd.f32 %v4323, 1.0
    %v4433 = vadd.f32 %v4325, 1.0
    %v4434 = vadd.f32 %v4327, 1.0
    %v4435 = vadd.f32 %v4329, 1.0
    %v4436 = vadd.f32 %v4331, 1.0
    %v4437 = vadd.f32 %v4333, 1.0
    %v4438 = vadd.f32 %v4335, 1.0
    %v4439 = vadd.f32 %v4337, 1.0
    %v4440 = vadd.f32 %v4339, 1.0
    %v4441 = vadd.f32 %v4341, 1.0
    %v4442 = vadd.f32 %v4343, 1.0
    %v4443 = vadd.f32 %v4345, 1.0
    %v4444 = vadd.f32 %v4347, 1.0
    %v4445 = vadd.f32 %v4349, 1.0
    %v4446 = vadd.f32 %v4351, 1.0
    %v4447 = vadd.f32 %v4353, 1.0
    %v4448 = vadd.f32 %v4355, 1.0
    %v4449 = vadd.f32 %v4357, 1.0
    %v4450 = vadd.f32 %v4359, 1.0
    %v4451 = vadd.f32 %v4361, 1.0
    %v4452 = vadd.f32 %v4363, 1.0
    %v4453 = vadd.f32 %v4365, 1.0
    %v4454 = vadd.f32 %v4367, 1.0
    %v4455 = vadd.f32 %v4369, 1.0
    %v4456 = vadd.f32 %v4371, 1.0
    %v4457 = vadd.f32 %v4373, 1.0
    %v4458 = vadd.f32 %v4375, 1.0
    %v4459 = vadd.f32 %v4377, 1.0
    %v4460 = vadd.f32 %v4379, 1.0
    %v4461 = vadd.f32 %v4381, 1.0
    %v4462 = vadd.f32 %v4383, 1.0
    %v4463 = vadd.f32 %v4385, 1.0
    %v4464 = vadd.f32 %v4387, 1.0
    %v4465 = vadd.f32 %v4389, 1.0
    %v4466 = vadd.f32 %v4391, 1.0
    %v4467 = vadd.f32 %v4393, 1.0
    %v4468 = vadd.f32 %v4395, 1.0
    %v4469 = vadd.f32 %v4397, 1.0
    %v4470 = vadd.f32 %v4399, 1.0
    %v4471 = vadd.f32 %v4401, 1.0
    %v4472 = vadd.f32 %v4403, 1.0
    %v4473 = vadd.f32 %v4405, 1.0
    %v4474 = vadd.f32 %v4407, 1.0
    %v4475 = vadd.f32 %v4409, 1.0
    %v4476 = vadd.f32 %v4411, 1.0
    %v4477 = vadd.f32 %v4413, 1.0
    %v4478 = vadd.f32 %v4415, 1.0
    %v4479 = vadd.f32 %v4417, 1.0
    %v4480 = vadd.f32 %v4419, 1.0
    %v4481 = vadd.f32 %v4421, 1.0
    %v4482 = vadd.f32 %v4423, 1.0
    %v4483 = vadd.f32 %v4425, 1.0
    %v4484 = vadd.f32 %v4427, 1.0
    %v4485 = vadd.f32 %v4429, 1.0
    %v4486 = vrcp.pop %v4430
    %v4487 = vmul.f32 1.0, %v4486
    %v4488 = vrcp.pop %v4431
    %v4489 = vmul.f32 1.0, %v4488
    %v4490 = vrcp.pop %v4432
    %v4491 = vmul.f32 1.0, %v4490
    %v4492 = vrcp.pop %v4433
    %v4493 = vmul.f32 1.0, %v4492
    %v4494 = vrcp.pop %v4434
    %v4495 = vmul.f32 1.0, %v4494
    %v4496 = vrcp.pop %v4435
    %v4497 = vmul.f32 1.0, %v4496
    %v4498 = vrcp.pop %v4436
    %v4499 = vmul.f32 1.0, %v4498
    %v4500 = vrcp.pop %v4437
    %v4501 = vmul.f32 1.0, %v4500
    %v4502 = vrcp.pop %v4438
    %v4503 = vmul.f32 1.0, %v4502
    %v4504 = vrcp.pop %v4439
    %v4505 = vmul.f32 1.0, %v4504
    %v4506 = vrcp.pop %v4440
    %v4507 = vmul.f32 1.0, %v4506
    %v4508 = vrcp.pop %v4441
    %v4509 = vmul.f32 1.0, %v4508
    %v4510 = vrcp.pop %v4442
    %v4511 = vmul.f32 1.0, %v4510
    %v4512 = vrcp.pop %v4443
    %v4513 = vmul.f32 1.0, %v4512
    %v4514 = vrcp.pop %v4444
    %v4515 = vmul.f32 1.0, %v4514
    %v4516 = vrcp.pop %v4445
    %v4517 = vmul.f32 1.0, %v4516
    %v4518 = vrcp.pop %v4446
    %v4519 = vmul.f32 1.0, %v4518
    %v4520 = vrcp.pop %v4447
    %v4521 = vmul.f32 1.0, %v4520
    %v4522 = vrcp.pop %v4448
    %v4523 = vmul.f32 1.0, %v4522
    %v4524 = vrcp.pop %v4449
    %v4525 = vmul.f32 1.0, %v4524
    %v4526 = vrcp.pop %v4450
    %v4527 = vmul.f32 1.0, %v4526
    %v4528 = vrcp.pop %v4451
    %v4529 = vmul.f32 1.0, %v4528
    %v4530 = vrcp.pop %v4452
    %v4531 = vmul.f32 1.0, %v4530
    %v4532 = vrcp.pop %v4453
    %v4533 = vmul.f32 1.0, %v4532
    %v4534 = vrcp.pop %v4454
    %v4535 = vmul.f32 1.0, %v4534
    %v4536 = vrcp.pop %v4455
    %v4537 = vmul.f32 1.0, %v4536
    %v4538 = vrcp.pop %v4456
    %v4539 = vmul.f32 1.0, %v4538
    %v4540 = vrcp.pop %v4457
    %v4541 = vmul.f32 1.0, %v4540
    %v4542 = vrcp.pop %v4458
    %v4543 = vmul.f32 1.0, %v4542
    %v4544 = vrcp.pop %v4459
    %v4545 = vmul.f32 1.0, %v4544
    %v4546 = vrcp.pop %v4460
    %v4547 = vmul.f32 1.0, %v4546
    %v4548 = vrcp.pop %v4461
    %v4549 = vmul.f32 1.0, %v4548
    %v4550 = vrcp.pop %v4462
    %v4551 = vmul.f32 1.0, %v4550
    %v4552 = vrcp.pop %v4463
    %v4553 = vmul.f32 1.0, %v4552
    %v4554 = vrcp.pop %v4464
    %v4555 = vmul.f32 1.0, %v4554
    %v4556 = vrcp.pop %v4465
    %v4557 = vmul.f32 1.0, %v4556
    %v4558 = vrcp.pop %v4466
    %v4559 = vmul.f32 1.0, %v4558
    %v4560 = vrcp.pop %v4467
    %v4561 = vmul.f32 1.0, %v4560
    %v4562 = vrcp.pop %v4468
    %v4563 = vmul.f32 1.0, %v4562
    %v4564 = vrcp.pop %v4469
    %v4565 = vmul.f32 1.0, %v4564
    %v4566 = vrcp.pop %v4470
    %v4567 = vmul.f32 1.0, %v4566
    %v4568 = vrcp.pop %v4471
    %v4569 = vmul.f32 1.0, %v4568
    %v4570 = vrcp.pop %v4472
    %v4571 = vmul.f32 1.0, %v4570
    %v4572 = vrcp.pop %v4473
    %v4573 = vmul.f32 1.0, %v4572
    %v4574 = vrcp.pop %v4474
    %v4575 = vmul.f32 1.0, %v4574
    %v4576 = vrcp.pop %v4475
    %v4577 = vmul.f32 1.0, %v4576
    %v4578 = vrcp.pop %v4476
    %v4579 = vmul.f32 1.0, %v4578
    %v4580 = vrcp.pop %v4477
    %v4581 = vmul.f32 1.0, %v4580
    %v4582 = vrcp.pop %v4478
    %v4583 = vmul.f32 1.0, %v4582
    %v4584 = vrcp.pop %v4479
    %v4585 = vmul.f32 1.0, %v4584
    %v4586 = vrcp.pop %v4480
    %v4587 = vmul.f32 1.0, %v4586
    %v4588 = vrcp.pop %v4481
    %v4589 = vmul.f32 1.0, %v4588
    %v4590 = vrcp.pop %v4482
    %v4591 = vmul.f32 1.0, %v4590
    %v4592 = vrcp.pop %v4483
    %v4593 = vmul.f32 1.0, %v4592
    %v4594 = vrcp.pop %v4484
    %v4595 = vmul.f32 1.0, %v4594
    %v4596 = vrcp.pop %v4485
    %v4597 = vmul.f32 1.0, %v4596
    %4598 = vst [vmem:[#allocation10] sm:$0xff] %v4487
    %4599 = vst [vmem:[#allocation10 + $0x8] sm:$0xff] %v4489
    %4600 = vst [vmem:[#allocation10 + $0x10] sm:$0xff] %v4491
    %4601 = vst [vmem:[#allocation10 + $0x18] sm:$0xff] %v4493
    %4602 = vst [vmem:[#allocation10 + $0x20] sm:$0xff] %v4495
    %4603 = vst [vmem:[#allocation10 + $0x28] sm:$0xff] %v4497
    %4604 = vst [vmem:[#allocation10 + $0x30] sm:$0xff] %v4499
    %4605 = vst [vmem:[#allocation10 + $0x38] sm:$0xff] %v4501
    %4606 = vst [vmem:[#allocation10 + $0x40] sm:$0xff] %v4503
    %4607 = vst [vmem:[#allocation10 + $0x48] sm:$0xff] %v4505
    %4608 = vst [vmem:[#allocation10 + $0x50] sm:$0xff] %v4507
    %4609 = vst [vmem:[#allocation10 + $0x58] sm:$0xff] %v4509
    %4610 = vst [vmem:[#allocation10 + $0x60] sm:$0xff] %v4511
    %4611 = vst [vmem:[#allocation10 + $0x68] sm:$0xff] %v4513
    %4612 = vst [vmem:[#allocation10 + $0x70] sm:$0xff] %v4515
    %4613 = vst [vmem:[#allocation10 + $0x78] sm:$0xff] %v4517
    %4614 = vst [vmem:[#allocation10 + $0x80] sm:$0xff] %v4519
    %4615 = vst [vmem:[#allocation10 + $0x88] sm:$0xff] %v4521
    %4616 = vst [vmem:[#allocation10 + $0x90] sm:$0xff] %v4523
    %4617 = vst [vmem:[#allocation10 + $0x98] sm:$0xff] %v4525
    %4618 = vst [vmem:[#allocation10 + $0xa0] sm:$0xff] %v4527
    %4619 = vst [vmem:[#allocation10 + $0xa8] sm:$0xff] %v4529
    %4620 = vst [vmem:[#allocation10 + $0xb0] sm:$0xff] %v4531
    %4621 = vst [vmem:[#allocation10 + $0xb8] sm:$0xff] %v4533
    %4622 = vst [vmem:[#allocation10 + $0xc0] sm:$0xff] %v4535
    %4623 = vst [vmem:[#allocation10 + $0xc8] sm:$0xff] %v4537
    %4624 = vst [vmem:[#allocation10 + $0xd0] sm:$0xff] %v4539
    %4625 = vst [vmem:[#allocation10 + $0xd8] sm:$0xff] %v4541
    %4626 = vst [vmem:[#allocation10 + $0xe0] sm:$0xff] %v4543
    %4627 = vst [vmem:[#allocation10 + $0xe8] sm:$0xff] %v4545
    %4628 = vst [vmem:[#allocation10 + $0xf0] sm:$0xff] %v4547
    %4629 = vst [vmem:[#allocation10 + $0xf8] sm:$0xff] %v4549
    %4630 = vst [vmem:[#allocation10 + $0x100] sm:$0xff] %v4551
    %4631 = vst [vmem:[#allocation10 + $0x108] sm:$0xff] %v4553
    %4632 = vst [vmem:[#allocation10 + $0x110] sm:$0xff] %v4555
    %4633 = vst [vmem:[#allocation10 + $0x118] sm:$0xff] %v4557
    %4634 = vst [vmem:[#allocation10 + $0x120] sm:$0xff] %v4559
    %4635 = vst [vmem:[#allocation10 + $0x128] sm:$0xff] %v4561
    %4636 = vst [vmem:[#allocation10 + $0x130] sm:$0xff] %v4563
    %4637 = vst [vmem:[#allocation10 + $0x138] sm:$0xff] %v4565
    %4638 = vst [vmem:[#allocation10 + $0x140] sm:$0xff] %v4567
    %4639 = vst [vmem:[#allocation10 + $0x148] sm:$0xff] %v4569
    %4640 = vst [vmem:[#allocation10 + $0x150] sm:$0xff] %v4571
    %4641 = vst [vmem:[#allocation10 + $0x158] sm:$0xff] %v4573
    %4642 = vst [vmem:[#allocation10 + $0x160] sm:$0xff] %v4575
    %4643 = vst [vmem:[#allocation10 + $0x168] sm:$0xff] %v4577
    %4644 = vst [vmem:[#allocation10 + $0x170] sm:$0xff] %v4579
    %4645 = vst [vmem:[#allocation10 + $0x178] sm:$0xff] %v4581
    %4646 = vst [vmem:[#allocation10 + $0x180] sm:$0xff] %v4583
    %4647 = vst [vmem:[#allocation10 + $0x188] sm:$0xff] %v4585
    %4648 = vst [vmem:[#allocation10 + $0x190] sm:$0xff] %v4587
    %4649 = vst [vmem:[#allocation10 + $0x198] sm:$0xff] %v4589
    %4650 = vst [vmem:[#allocation10 + $0x1a0] sm:$0xff] %v4591
    %4651 = vst [vmem:[#allocation10 + $0x1a8] sm:$0xff] %v4593
    %4652 = vst [vmem:[#allocation10 + $0x1b0] sm:$0xff] %v4595
    %4653 = vst [vmem:[#allocation10 + $0x1b8] sm:$0xff] %v4597
    // Predicated region
    $region38: #{tpu_custom_call.1} parent=1 // pred_check
      _
    $region39: #{tpu_custom_call.1} parent=1 // pred_check_branch
      %4655 = sbr.rel (0) target = $region41
    $region40: #{tpu_custom_call.1} parent=1 // pred_region
      %s4657 = ssub.s32 7168, 7168
      %4658 = vsyncadd [#allocation4], %s4657
      %s4659 = sshll.u32 [#allocation10], 4
      %s4660 = int_to_ptr.vmem [resolvable:$true] %s4659
      %4665 = dma.vmem_to_hbm [thread:$0]  %s4660, 7168, %s5, [#allocation4], 896, 896, 56
    $region41: #{tpu_custom_call.1} parent=1 // pred_fallthru
      _
    // Predicated region
    $region42: #{tpu_custom_call.1} parent=1 // pred_check
      _
    $region43: #{tpu_custom_call.1} parent=1 // pred_check_branch
      %4667 = sbr.rel (0) target = $region45
    $region44: #{tpu_custom_call.1} parent=1 // pred_region
      %4668 = dma.done [#allocation4], 7168
    $region45: #{tpu_custom_call.1} parent=1 // pred_fallthru
      _
    %4669 = vsyncpa [#allocation3], 1
    %4670 = vsyncpa [#allocation6], 1
    %4671 = vsyncpa [#allocation9], 1
    %4672 = vsyncpa [#allocation4], 1

</llo_original>
